<compile_context>
chip_gen: v6e
topology: v6e:2x2x1
jax: 0.10.0
libtpu: 0.0.40
codegen_flags: <defaults>
</compile_context>

<pallas_src>
import functools

import jax
import jax.numpy as jnp
import numpy as np
from jax.experimental import pallas as pl
from jax.experimental.pallas import tpu as pltpu


# ---------------------------------------------------------------------------
# Pallas kernel: the whole residual block for one batch tile, fused (H, W*C)
# ---------------------------------------------------------------------------
def resnet_block_kernel(x_ref, w1_ref, b1_ref, w2_ref, b2_ref, o_ref, *,
                        padding_type):
  x = x_ref[...]                                     # (bt, H, W*C) f32
  bt, h, wc = x.shape

  def conv_bn(t, w_ref, b_ref):
    # t: (bt, H, W*C) f32.  3x3 conv + folded BN as 3 accumulating matmuls
    # (one per kernel row dh).  dw taps + left/right padding rule are already
    # folded into the block-banded (W*C, W*C) host-built weight matrices.
    if padding_type == "reflect":
      top, bot = t[:, 1:2], t[:, h - 2:h - 1]
    elif padding_type == "replicate":
      top, bot = t[:, 0:1], t[:, h - 1:h]
    else:  # "zero"
      top = jnp.zeros_like(t[:, 0:1])
      bot = top
    t_up = jnp.concatenate([top, t[:, :h - 1]], axis=1)   # row h reads h-1
    t_dn = jnp.concatenate([t[:, 1:], bot], axis=1)       # row h reads h+1

    # bf16 operands (MXU is a bf16 engine on v5e/v6e/v7x), f32 accumulation.
    up = t_up.reshape(bt * h, wc).astype(jnp.bfloat16)
    mid = t.reshape(bt * h, wc).astype(jnp.bfloat16)
    dn = t_dn.reshape(bt * h, wc).astype(jnp.bfloat16)
    y = (jnp.dot(up, w_ref[0], preferred_element_type=jnp.float32) +
         jnp.dot(mid, w_ref[1], preferred_element_type=jnp.float32) +
         jnp.dot(dn, w_ref[2], preferred_element_type=jnp.float32))
    return y + b_ref[...]                                  # (bt*H, W*C) f32

  y1 = jnp.maximum(conv_bn(x, w1_ref, b1_ref), 0.0)        # conv1 + BN + ReLU
  y2 = conv_bn(y1.reshape(bt, h, wc), w2_ref, b2_ref)      # conv2 + BN
  o_ref[...] = (x.reshape(bt * h, wc) + y2).reshape(bt, h, wc)  # residual add


# ---------------------------------------------------------------------------
# Wrappers
# ---------------------------------------------------------------------------
def resnet_block_gll_fused(x_fused, folded_params, *, padding_type="reflect",
                           batch_tile=None):
  """x_fused: (N, H, W*C) f32 slab (NHWC memory order with W and C fused).

  Lane-dense when (W*C) % 128 == 0 (true for the test shape: 16*32 = 512);
  other shapes still run (full-extent last dim) but stores become masked.
  """
  n, h, wc = x_fused.shape
  w1, b1, w2, b2 = folded_params
  if batch_tile is None:
    # grid >= 2 keeps both v7x TensorCores busy; on single-TC v5e/v6e the
    # extra grid step only costs ~0.35us.
    # TODO(synk): on v5e/v6e-only deployments set batch_tile = n.
    batch_tile = n // 2 if (n >= 2 and n % 2 == 0) else 1
  assert n % batch_tile == 0

  kernel = functools.partial(resnet_block_kernel, padding_type=padding_type)

  flops = 2 * 3 * 2 * (n * h) * wc * wc            # 2 convs x 3 dh matmuls
  bytes_accessed = (2 * n * h * wc * 4             # x in + out (f32)
                    + 2 * 3 * wc * wc * 2          # banded bf16 weights
                    + 2 * wc * 4)                  # fused biases
  cost = pl.CostEstimate(flops=flops, transcendentals=0,
                         bytes_accessed=bytes_accessed)

  return pl.pallas_call(
      kernel,
      out_shape=jax.ShapeDtypeStruct((n, h, wc), jnp.float32),
      grid=(n // batch_tile,),
      in_specs=[
          pl.BlockSpec((batch_tile, h, wc), lambda i: (i, 0, 0)),
          pl.BlockSpec(w1.shape, lambda i: (0, 0, 0)),
          pl.BlockSpec(b1.shape, lambda i: (0, 0)),
          pl.BlockSpec(w2.shape, lambda i: (0, 0, 0)),
          pl.BlockSpec(b2.shape, lambda i: (0, 0)),
      ],
      out_specs=pl.BlockSpec((batch_tile, h, wc), lambda i: (i, 0, 0)),
      compiler_params=pltpu.CompilerParams(
          dimension_semantics=("parallel",),
          vmem_limit_bytes=32 * 1024 * 1024),
      cost_estimate=cost,
  )(x_fused, w1, b1, w2, b2)


def resnet_block_gll_forward(x_nchw, folded_params, *, padding_type="reflect",
                             batch_tile=None):
  """NCHW public API matching the PyTorch module (transposes stay outside the
  kernel; keep the surrounding model NHWC to avoid them entirely)."""
  n, c, h, w = x_nchw.shape
  x_fused = jnp.transpose(x_nchw, (0, 2, 3, 1)).astype(jnp.float32)
  x_fused = x_fused.reshape(n, h, w * c)              # pure view of NHWC
  out = resnet_block_gll_fused(x_fused, folded_params,
                               padding_type=padding_type,
                               batch_tile=batch_tile)
  return jnp.transpose(out.reshape(n, h, w, c), (0, 3, 1, 2))


# ---------------------------------------------------------------------------
# Parameters: raw (PyTorch-style) + host-side folding into banded matrices
# ---------------------------------------------------------------------------
def init_raw_params(key, dim):
  """Two (Conv3x3 + BatchNorm2d) layers worth of deterministic parameters."""
  raw = []
  for _ in range(2):
    key, kw, kcb, kg, kb, km, kv = jax.random.split(key, 7)
    wt = 0.05 * jax.random.normal(kw, (3, 3, dim, dim), jnp.float32)  # HWIO
    cb = 0.1 * jax.random.normal(kcb, (dim,), jnp.float32)            # conv bias
    gamma = 0.5 + jax.random.uniform(kg, (dim,), jnp.float32)
    beta = 0.1 * jax.random.normal(kb, (dim,), jnp.float32)
    rmean = 0.1 * jax.random.normal(km, (dim,), jnp.float32)
    rvar = 0.5 + jax.random.uniform(kv, (dim,), jnp.float32)
    raw += [wt, cb, gamma, beta, rmean, rvar]
  return tuple(raw)


def fold_params(raw, img_w, padding_type, eps=1e-5):
  """Fold BN (inference) + conv bias + dw taps + left/right padding rule into,
  per conv: a (3, W*C, W*C) block-banded bf16 weight (one band per kernel row
  dh) and a (1, W*C) f32 fused bias."""
  if padding_type not in ("reflect", "replicate", "zero"):
    raise NotImplementedError(f"padding [{padding_type}] is not implemented")
  folded = []
  for li in range(2):
    wt, cb, gamma, beta, rmean, rvar = raw[6 * li:6 * li + 6]
    c = wt.shape[-1]
    scale = gamma / jnp.sqrt(rvar + eps)                  # (C,)
    bias_c = beta + scale * (cb - rmean)                  # (C,)
    wt_s = np.asarray(wt * scale.reshape(1, 1, 1, c), np.float32)

    big = np.zeros((3, img_w * c, img_w * c), np.float32)
    for dh in range(3):
      for wout in range(img_w):
        for dw in range(3):
          win = wout + dw - 1
          if win < 0:
            if padding_type == "reflect":
              win = 1
            elif padding_type == "replicate":
              win = 0
            else:
              continue                                    # zero pad: drop tap
          elif win >= img_w:
            if padding_type == "reflect":
              win = img_w - 2
            elif padding_type == "replicate":
              win = img_w - 1
            else:
              continue
          big[dh, win * c:(win + 1) * c, wout * c:(wout + 1) * c] += wt_s[dh, dw]

    folded += [jnp.asarray(big, jnp.bfloat16),
               jnp.tile(jnp.asarray(bias_c, jnp.float32), img_w)
                  .reshape(1, img_w * c)]
  return tuple(folded)


# ---------------------------------------------------------------------------
# Pure-JAX reference (unfolded parameters, eval-mode BN, f32)
# ---------------------------------------------------------------------------
def reference_forward(x_nchw, raw, *, padding_type="reflect", eps=1e-5):
  x = jnp.transpose(x_nchw, (0, 2, 3, 1)).astype(jnp.float32)
  mode = {"reflect": "reflect", "replicate": "edge", "zero": "constant"}

  def pad(t):
    return jnp.pad(t, ((0, 0), (1, 1), (1, 1), (0, 0)), mode=mode[padding_type])

  def conv(t, wt, cb):
    y = jax.lax.conv_general_dilated(
        t, wt, window_strides=(1, 1), padding="VALID",
        dimension_numbers=("NHWC", "HWIO", "NHWC"))
    return y + cb.reshape(1, 1, 1, -1)

  def bn(y, gamma, beta, rmean, rvar):
    return (y - rmean) / jnp.sqrt(rvar + eps) * gamma + beta

  (w1, cb1, g1, be1, m1, v1, w2, cb2, g2, be2, m2, v2) = raw
  h1 = jnp.maximum(bn(conv(pad(x), w1, cb1), g1, be1, m1, v1), 0.0)
  h2 = bn(conv(pad(h1), w2, cb2), g2, be2, m2, v2)
  return jnp.transpose(x + h2, (0, 3, 1, 2))


# ---------------------------------------------------------------------------
if __name__ == "__main__":
  N, DIM, H, W = 2, 32, 16, 16
  PADDING = "reflect"

  key = jax.random.PRNGKey(0)
  kx, kp = jax.random.split(key)
  x = jax.random.normal(kx, (N, DIM, H, W), jnp.float32)   # NCHW like PyTorch

  raw_params = init_raw_params(kp, DIM)
  folded_params = fold_params(raw_params, W, PADDING)

  y = jax.block_until_ready(
      resnet_block_gll_forward(x, folded_params, padding_type=PADDING))
  y_ref = jax.block_until_ready(
      reference_forward(x, raw_params, padding_type=PADDING))

  assert y.shape == (N, DIM, H, W), y.shape
  # bf16 MXU operands (f32 accumulation) -> tolerance relaxed vs pure-f32;
  # layout / tap-ordering bugs would show up as O(1) errors, far above this.
  err = float(np.max(np.abs(np.asarray(y) - np.asarray(y_ref))))
  assert np.allclose(np.asarray(y), np.asarray(y_ref), rtol=2e-2, atol=7.5e-2), (
      f"mismatch vs reference: max abs err {err}")

  print("KERNEL_OK")
</pallas_src>

<mosaic_0001>
module attributes {stable_mosaic.version = 11 : i64} {
  func.func @resnet_block_kernel(%arg0: i32, %arg1: memref<1x16x512xf32, #tpu.memory_space<vmem>>, %arg2: memref<3x512x512xbf16, #tpu.memory_space<vmem>>, %arg3: memref<1x512xf32, #tpu.memory_space<vmem>>, %arg4: memref<3x512x512xbf16, #tpu.memory_space<vmem>>, %arg5: memref<1x512xf32, #tpu.memory_space<vmem>>, %arg6: memref<1x16x512xf32, #tpu.memory_space<vmem>>) attributes {dimension_semantics = [#tpu.dimension_semantics<parallel>], iteration_bounds = array<i64: 2>, scalar_prefetch = 0 : i64, scratch_operands = 0 : i64, tpu.core_type = #tpu.core_type<tc>, window_params = [{transform_indices = @transform_0, window_bounds = array<i64: 1, 16, 512>}, {pipeline_mode = #tpu.pipeline_mode<synchronous>, transform_indices = @transform_1, window_bounds = array<i64: 3, 512, 512>}, {pipeline_mode = #tpu.pipeline_mode<synchronous>, transform_indices = @transform_2, window_bounds = array<i64: 1, 512>}, {pipeline_mode = #tpu.pipeline_mode<synchronous>, transform_indices = @transform_3, window_bounds = array<i64: 3, 512, 512>}, {pipeline_mode = #tpu.pipeline_mode<synchronous>, transform_indices = @transform_4, window_bounds = array<i64: 1, 512>}, {transform_indices = @transform_5, window_bounds = array<i64: 1, 16, 512>}]} {
    %c0 = arith.constant 0 : index
    %c0_0 = arith.constant 0 : index
    %c0_1 = arith.constant 0 : index
    %0 = vector.load %arg1[%c0, %c0_0, %c0_1] : memref<1x16x512xf32, #tpu.memory_space<vmem>>, vector<1x16x512xf32>
    %1 = vector.extract_strided_slice %0 {offsets = [0, 1, 0], sizes = [1, 1, 512], strides = [1, 1, 1]} : vector<1x16x512xf32> to vector<1x1x512xf32>
    %2 = vector.extract_strided_slice %0 {offsets = [0, 14, 0], sizes = [1, 1, 512], strides = [1, 1, 1]} : vector<1x16x512xf32> to vector<1x1x512xf32>
    %3 = vector.extract_strided_slice %0 {offsets = [0, 0, 0], sizes = [1, 15, 512], strides = [1, 1, 1]} : vector<1x16x512xf32> to vector<1x15x512xf32>
    %4 = tpu.concatenate %1, %3 in 1 : vector<1x1x512xf32>, vector<1x15x512xf32> -> vector<1x16x512xf32>
    %5 = vector.extract_strided_slice %0 {offsets = [0, 1, 0], sizes = [1, 15, 512], strides = [1, 1, 1]} : vector<1x16x512xf32> to vector<1x15x512xf32>
    %6 = tpu.concatenate %5, %2 in 1 : vector<1x15x512xf32>, vector<1x1x512xf32> -> vector<1x16x512xf32>
    %7 = vector.shape_cast %4 : vector<1x16x512xf32> to vector<16x512xf32>
    %8 = arith.truncf %7 : vector<16x512xf32> to vector<16x512xbf16>
    %9 = vector.shape_cast %0 : vector<1x16x512xf32> to vector<16x512xf32>
    %10 = arith.truncf %9 : vector<16x512xf32> to vector<16x512xbf16>
    %11 = vector.shape_cast %6 : vector<1x16x512xf32> to vector<16x512xf32>
    %12 = arith.truncf %11 : vector<16x512xf32> to vector<16x512xbf16>
    %c0_2 = arith.constant 0 : index
    %c0_3 = arith.constant 0 : index
    %c0_4 = arith.constant 0 : index
    %13 = vector.load %arg2[%c0_2, %c0_3, %c0_4] : memref<3x512x512xbf16, #tpu.memory_space<vmem>>, vector<1x512x512xbf16>
    %14 = vector.shape_cast %13 : vector<1x512x512xbf16> to vector<512x512xbf16>
    %cst = arith.constant dense<0.000000e+00> : vector<16x512xf32>
    %15 = tpu.matmul %8, %14, %cst {dimension_numbers = #tpu.dot_dimension_numbers<[1], [0], [0], [1], [0, 0, 1, 1], [], []>} : vector<16x512xbf16>, vector<512x512xbf16>, vector<16x512xf32> -> vector<16x512xf32>
    %c1 = arith.constant 1 : index
    %c0_5 = arith.constant 0 : index
    %c0_6 = arith.constant 0 : index
    %16 = vector.load %arg2[%c1, %c0_5, %c0_6] : memref<3x512x512xbf16, #tpu.memory_space<vmem>>, vector<1x512x512xbf16>
    %17 = vector.shape_cast %16 : vector<1x512x512xbf16> to vector<512x512xbf16>
    %cst_7 = arith.constant dense<0.000000e+00> : vector<16x512xf32>
    %18 = tpu.matmul %10, %17, %cst_7 {dimension_numbers = #tpu.dot_dimension_numbers<[1], [0], [0], [1], [0, 0, 1, 1], [], []>} : vector<16x512xbf16>, vector<512x512xbf16>, vector<16x512xf32> -> vector<16x512xf32>
    %19 = arith.addf %15, %18 : vector<16x512xf32>
    %c2 = arith.constant 2 : index
    %c0_8 = arith.constant 0 : index
    %c0_9 = arith.constant 0 : index
    %20 = vector.load %arg2[%c2, %c0_8, %c0_9] : memref<3x512x512xbf16, #tpu.memory_space<vmem>>, vector<1x512x512xbf16>
    %21 = vector.shape_cast %20 : vector<1x512x512xbf16> to vector<512x512xbf16>
    %cst_10 = arith.constant dense<0.000000e+00> : vector<16x512xf32>
    %22 = tpu.matmul %12, %21, %cst_10 {dimension_numbers = #tpu.dot_dimension_numbers<[1], [0], [0], [1], [0, 0, 1, 1], [], []>} : vector<16x512xbf16>, vector<512x512xbf16>, vector<16x512xf32> -> vector<16x512xf32>
    %23 = arith.addf %19, %22 : vector<16x512xf32>
    %c0_11 = arith.constant 0 : index
    %c0_12 = arith.constant 0 : index
    %24 = vector.load %arg3[%c0_11, %c0_12] : memref<1x512xf32, #tpu.memory_space<vmem>>, vector<1x512xf32>
    %25 = vector.broadcast %24 : vector<1x512xf32> to vector<16x512xf32>
    %26 = arith.addf %23, %25 : vector<16x512xf32>
    %cst_13 = arith.constant 0.000000e+00 : f32
    %27 = vector.broadcast %cst_13 : f32 to vector<16x512xf32>
    %28 = arith.maximumf %26, %27 : vector<16x512xf32>
    %29 = vector.shape_cast %28 : vector<16x512xf32> to vector<1x16x512xf32>
    %30 = vector.extract_strided_slice %29 {offsets = [0, 1, 0], sizes = [1, 1, 512], strides = [1, 1, 1]} : vector<1x16x512xf32> to vector<1x1x512xf32>
    %31 = vector.extract_strided_slice %29 {offsets = [0, 14, 0], sizes = [1, 1, 512], strides = [1, 1, 1]} : vector<1x16x512xf32> to vector<1x1x512xf32>
    %32 = vector.extract_strided_slice %29 {offsets = [0, 0, 0], sizes = [1, 15, 512], strides = [1, 1, 1]} : vector<1x16x512xf32> to vector<1x15x512xf32>
    %33 = tpu.concatenate %30, %32 in 1 : vector<1x1x512xf32>, vector<1x15x512xf32> -> vector<1x16x512xf32>
    %34 = vector.extract_strided_slice %29 {offsets = [0, 1, 0], sizes = [1, 15, 512], strides = [1, 1, 1]} : vector<1x16x512xf32> to vector<1x15x512xf32>
    %35 = tpu.concatenate %34, %31 in 1 : vector<1x15x512xf32>, vector<1x1x512xf32> -> vector<1x16x512xf32>
    %36 = vector.shape_cast %33 : vector<1x16x512xf32> to vector<16x512xf32>
    %37 = arith.truncf %36 : vector<16x512xf32> to vector<16x512xbf16>
    %38 = vector.shape_cast %29 : vector<1x16x512xf32> to vector<16x512xf32>
    %39 = arith.truncf %38 : vector<16x512xf32> to vector<16x512xbf16>
    %40 = vector.shape_cast %35 : vector<1x16x512xf32> to vector<16x512xf32>
    %41 = arith.truncf %40 : vector<16x512xf32> to vector<16x512xbf16>
    %c0_14 = arith.constant 0 : index
    %c0_15 = arith.constant 0 : index
    %c0_16 = arith.constant 0 : index
    %42 = vector.load %arg4[%c0_14, %c0_15, %c0_16] : memref<3x512x512xbf16, #tpu.memory_space<vmem>>, vector<1x512x512xbf16>
    %43 = vector.shape_cast %42 : vector<1x512x512xbf16> to vector<512x512xbf16>
    %cst_17 = arith.constant dense<0.000000e+00> : vector<16x512xf32>
    %44 = tpu.matmul %37, %43, %cst_17 {dimension_numbers = #tpu.dot_dimension_numbers<[1], [0], [0], [1], [0, 0, 1, 1], [], []>} : vector<16x512xbf16>, vector<512x512xbf16>, vector<16x512xf32> -> vector<16x512xf32>
    %c1_18 = arith.constant 1 : index
    %c0_19 = arith.constant 0 : index
    %c0_20 = arith.constant 0 : index
    %45 = vector.load %arg4[%c1_18, %c0_19, %c0_20] : memref<3x512x512xbf16, #tpu.memory_space<vmem>>, vector<1x512x512xbf16>
    %46 = vector.shape_cast %45 : vector<1x512x512xbf16> to vector<512x512xbf16>
    %cst_21 = arith.constant dense<0.000000e+00> : vector<16x512xf32>
    %47 = tpu.matmul %39, %46, %cst_21 {dimension_numbers = #tpu.dot_dimension_numbers<[1], [0], [0], [1], [0, 0, 1, 1], [], []>} : vector<16x512xbf16>, vector<512x512xbf16>, vector<16x512xf32> -> vector<16x512xf32>
    %48 = arith.addf %44, %47 : vector<16x512xf32>
    %c2_22 = arith.constant 2 : index
    %c0_23 = arith.constant 0 : index
    %c0_24 = arith.constant 0 : index
    %49 = vector.load %arg4[%c2_22, %c0_23, %c0_24] : memref<3x512x512xbf16, #tpu.memory_space<vmem>>, vector<1x512x512xbf16>
    %50 = vector.shape_cast %49 : vector<1x512x512xbf16> to vector<512x512xbf16>
    %cst_25 = arith.constant dense<0.000000e+00> : vector<16x512xf32>
    %51 = tpu.matmul %41, %50, %cst_25 {dimension_numbers = #tpu.dot_dimension_numbers<[1], [0], [0], [1], [0, 0, 1, 1], [], []>} : vector<16x512xbf16>, vector<512x512xbf16>, vector<16x512xf32> -> vector<16x512xf32>
    %52 = arith.addf %48, %51 : vector<16x512xf32>
    %c0_26 = arith.constant 0 : index
    %c0_27 = arith.constant 0 : index
    %53 = vector.load %arg5[%c0_26, %c0_27] : memref<1x512xf32, #tpu.memory_space<vmem>>, vector<1x512xf32>
    %54 = vector.broadcast %53 : vector<1x512xf32> to vector<16x512xf32>
    %55 = arith.addf %52, %54 : vector<16x512xf32>
    %56 = vector.shape_cast %0 : vector<1x16x512xf32> to vector<16x512xf32>
    %57 = arith.addf %56, %55 : vector<16x512xf32>
    %58 = vector.shape_cast %57 : vector<16x512xf32> to vector<1x16x512xf32>
    %c0_28 = arith.constant 0 : index
    %c0_29 = arith.constant 0 : index
    %c0_30 = arith.constant 0 : index
    %59 = vector.load %arg6[%c0_28, %c0_29, %c0_30] : memref<1x16x512xf32, #tpu.memory_space<vmem>>, vector<1x16x512xf32>
    tpu.vector_store %arg6[%c0_28, %c0_29, %c0_30], %58 {strides = array<i32>} : memref<1x16x512xf32, #tpu.memory_space<vmem>>, vector<1x16x512xf32>,
    return
  }
  func.func @transform_0(%arg0: i32) -> (i32, i32, i32) {
    %c0_i32 = arith.constant 0 : i32
    %c0_i32_0 = arith.constant 0 : i32
    %c0_i32_1 = arith.constant 0 : i32
    return %arg0, %c0_i32, %c0_i32_0 : i32, i32, i32
  }
  func.func @transform_1(%arg0: i32) -> (i32, i32, i32) {
    %c0_i32 = arith.constant 0 : i32
    %c0_i32_0 = arith.constant 0 : i32
    %c0_i32_1 = arith.constant 0 : i32
    %c0_i32_2 = arith.constant 0 : i32
    return %c0_i32, %c0_i32_0, %c0_i32_1 : i32, i32, i32
  }
  func.func @transform_2(%arg0: i32) -> (i32, i32) {
    %c0_i32 = arith.constant 0 : i32
    %c0_i32_0 = arith.constant 0 : i32
    %c0_i32_1 = arith.constant 0 : i32
    return %c0_i32, %c0_i32_0 : i32, i32
  }
  func.func @transform_3(%arg0: i32) -> (i32, i32, i32) {
    %c0_i32 = arith.constant 0 : i32
    %c0_i32_0 = arith.constant 0 : i32
    %c0_i32_1 = arith.constant 0 : i32
    %c0_i32_2 = arith.constant 0 : i32
    return %c0_i32, %c0_i32_0, %c0_i32_1 : i32, i32, i32
  }
  func.func @transform_4(%arg0: i32) -> (i32, i32) {
    %c0_i32 = arith.constant 0 : i32
    %c0_i32_0 = arith.constant 0 : i32
    %c0_i32_1 = arith.constant 0 : i32
    return %c0_i32, %c0_i32_0 : i32, i32
  }
  func.func @transform_5(%arg0: i32) -> (i32, i32, i32) {
    %c0_i32 = arith.constant 0 : i32
    %c0_i32_0 = arith.constant 0 : i32
    %c0_i32_1 = arith.constant 0 : i32
    return %arg0, %c0_i32, %c0_i32_0 : i32, i32, i32
  }
}

</mosaic_0001>

<llo_original>
// kernel: tpu_custom_call.1
$region0: #{tpu_custom_call.1}
  #allocation0 [shape = 'u32[]', space=smem, size = 0x4, offset = 0x4, fixed_abs, tag = 'smem constant byte address 0x4 - core index']
  #allocation1 [shape = 'u32[144,128]{1,0:T(1,128)}', space=vmem, size = 0x12000, scoped, tag = 'internal scratch']
  %s0 = inlined_call_operand.hbm [shape: f32[2,16,512], index: 0, kind: input, shape index: {}]
  %s1 = inlined_call_operand.hbm [shape: bf16[3,512,512], index: 1, kind: input, shape index: {}]
  %s2 = inlined_call_operand.hbm [shape: f32[1,512], index: 2, kind: input, shape index: {}]
  %s3 = inlined_call_operand.hbm [shape: bf16[3,512,512], index: 3, kind: input, shape index: {}]
  %s4 = inlined_call_operand.hbm [shape: f32[1,512], index: 4, kind: input, shape index: {}]
  %s5 = inlined_call_operand.hbm [shape: f32[2,16,512], index: 5, kind: output, shape index: {}]
  %s6 = sld [smem:[#allocation0]]
  $region73: #{tpu_custom_call.1} parent=0
    _
  %s8 = ssub.s32 1, %s6
  %s9 = scalar_select 0, %s8, %s6
  $region1: #{tpu_custom_call.1} parent=0
    #allocation2 [shape = 'u8[65536]{0}', space=vmem, size = 0x10000, scoped, tag = 'input window, operand 0']
    #allocation3 [shape = 's32[2]{0}', space=sflag, size = 0x8, scoped, tag = 'scoped memory for tpu_custom_call.1']
    #allocation4 [shape = 's32[2]{0}', space=sflag, size = 0x8, scoped, tag = 'scoped memory for tpu_custom_call.1']
    #allocation5 [shape = 'u8[1572864]{0}', space=vmem, size = 0x180000, scoped, tag = 'input window, operand 1, single buffered']
    #allocation6 [shape = 's32[1]{0}', space=sflag, size = 0x4, scoped, tag = 'scoped memory for tpu_custom_call.1']
    #allocation7 [shape = 'u8[2048]{0}', space=vmem, size = 0x800, scoped, tag = 'input window, operand 2, single buffered']
    #allocation8 [shape = 'u8[1572864]{0}', space=vmem, size = 0x180000, scoped, tag = 'input window, operand 3, single buffered']
    #allocation9 [shape = 's32[1]{0}', space=sflag, size = 0x4, scoped, tag = 'scoped memory for tpu_custom_call.1']
    #allocation10 [shape = 'u8[2048]{0}', space=vmem, size = 0x800, scoped, tag = 'input window, operand 4, single buffered']
    #allocation11 [shape = 'u8[65536]{0}', space=vmem, size = 0x10000, scoped, tag = 'output window, operand 0']
    %10 = vsyncpa [#allocation3], 0
    %s11 = scalar_lea.sflag [#allocation3], 1
    %12 = vsyncpa %s11, 0
    %13 = vsyncpa [#allocation6], 0
    %14 = vsyncpa [#allocation9], 0
    %15 = vsyncpa [#allocation4], 0
    %s16 = scalar_lea.sflag [#allocation4], 1
    %17 = vsyncpa %s16, 0
    loop: start=0, step=1, limit=4
    $region2: #{tpu_custom_call.1} parent=1 // loop_pre_header
      _
    $region3: #{tpu_custom_call.1} parent=1 // loop_header
      %s19 = sphi 0, %s23
      %p20 = scmp.ge.s32.totalorder %s19, 4
      %s29 = sphi 0, %s31
      %s32 = sphi 0, %s29
      %s33 = sphi 0, %s32
      %s49 = sphi 0, %s33
      %s53 = sphi 0, %s53
      %s55 = sphi 0, %s53
      %s56 = sphi 0, %s55
      %s70 = sphi 0, %s56
      %s74 = sphi 0, %s74
      %s76 = sphi 0, %s74
      %s77 = sphi 0, %s76
      %s91 = sphi 0, %s77
      %s95 = sphi 0, %s95
      %s97 = sphi 0, %s95
      %s98 = sphi 0, %s97
      %s112 = sphi 0, %s98
      %s116 = sphi 0, %s116
      %s118 = sphi 0, %s116
      %s119 = sphi 0, %s118
      %s133 = sphi 0, %s119
      %s139 = sphi 0, %s141
      %s142 = sphi 0, %s139
      %s143 = sphi 0, %s142
      %s159 = sphi 0, %s143
    $region4: #{tpu_custom_call.1} parent=1 // loop_header_branch
      %22 = sbr.rel (%p20) target = $region8
    $region5: #{tpu_custom_call.1} parent=1 // loop_body
      %s24 = ssub.s32 %s19, 1
      %s25 = ssub.s32 %s19, 2
      %s26 = sadd.s32 %s19, 1
      %s27 = ssub.s32 %s19, %s26
      %p28 = scmp.eq.s32.totalorder %s27, 0
      %s30 = sadd.s32 %s29, 1
      %s31 = scalar_select %p28, %s29, %s30
      %p34 = pneg %p28
      %p35 = scmp.eq.s32.totalorder %s19, 1
      %p36 = por %p34, %p35
      %p37 = scmp.ne.s32.totalorder %s29, %s32
      %p38 = scmp.eq.s32.totalorder %s19, 0
      %p39 = por %p37, %p38
      %p40 = scmp.ne.s32.totalorder %s29, %s32
      %p41 = scmp.eq.s32.totalorder %s24, 1
      %p42 = por %p40, %p41
      %p43 = scmp.ne.s32.totalorder %s32, %s33
      %p44 = scmp.eq.s32.totalorder %s24, 0
      %p45 = por %p43, %p44
      %p46 = scmp.ne.s32.totalorder %s32, %s33
      %p47 = scmp.eq.s32.totalorder %s25, 1
      %p48 = por %p46, %p47
      %p50 = scmp.ne.s32.totalorder %s33, %s49
      %p51 = scmp.eq.s32.totalorder %s25, 0
      %p52 = por %p50, %p51
      %s54 = sadd.s32 %s53, 1
      %p57 = scmp.eq.s32.totalorder %s19, 1
      %p58 = scmp.ne.s32.totalorder %s53, %s55
      %p59 = scmp.eq.s32.totalorder %s19, 0
      %p60 = por %p58, %p59
      %p61 = scmp.ne.s32.totalorder %s53, %s55
      %p62 = scmp.eq.s32.totalorder %s24, 1
      %p63 = por %p61, %p62
      %p64 = scmp.ne.s32.totalorder %s55, %s56
      %p65 = scmp.eq.s32.totalorder %s24, 0
      %p66 = por %p64, %p65
      %p67 = scmp.ne.s32.totalorder %s55, %s56
      %p68 = scmp.eq.s32.totalorder %s25, 1
      %p69 = por %p67, %p68
      %p71 = scmp.ne.s32.totalorder %s56, %s70
      %p72 = scmp.eq.s32.totalorder %s25, 0
      %p73 = por %p71, %p72
      %s75 = sadd.s32 %s74, 1
      %p78 = scmp.eq.s32.totalorder %s19, 1
      %p79 = scmp.ne.s32.totalorder %s74, %s76
      %p80 = scmp.eq.s32.totalorder %s19, 0
      %p81 = por %p79, %p80
      %p82 = scmp.ne.s32.totalorder %s74, %s76
      %p83 = scmp.eq.s32.totalorder %s24, 1
      %p84 = por %p82, %p83
      %p85 = scmp.ne.s32.totalorder %s76, %s77
      %p86 = scmp.eq.s32.totalorder %s24, 0
      %p87 = por %p85, %p86
      %p88 = scmp.ne.s32.totalorder %s76, %s77
      %p89 = scmp.eq.s32.totalorder %s25, 1
      %p90 = por %p88, %p89
      %p92 = scmp.ne.s32.totalorder %s77, %s91
      %p93 = scmp.eq.s32.totalorder %s25, 0
      %p94 = por %p92, %p93
      %s96 = sadd.s32 %s95, 1
      %p99 = scmp.eq.s32.totalorder %s19, 1
      %p100 = scmp.ne.s32.totalorder %s95, %s97
      %p101 = scmp.eq.s32.totalorder %s19, 0
      %p102 = por %p100, %p101
      %p103 = scmp.ne.s32.totalorder %s95, %s97
      %p104 = scmp.eq.s32.totalorder %s24, 1
      %p105 = por %p103, %p104
      %p106 = scmp.ne.s32.totalorder %s97, %s98
      %p107 = scmp.eq.s32.totalorder %s24, 0
      %p108 = por %p106, %p107
      %p109 = scmp.ne.s32.totalorder %s97, %s98
      %p110 = scmp.eq.s32.totalorder %s25, 1
      %p111 = por %p109, %p110
      %p113 = scmp.ne.s32.totalorder %s98, %s112
      %p114 = scmp.eq.s32.totalorder %s25, 0
      %p115 = por %p113, %p114
      %s117 = sadd.s32 %s116, 1
      %p120 = scmp.eq.s32.totalorder %s19, 1
      %p121 = scmp.ne.s32.totalorder %s116, %s118
      %p122 = scmp.eq.s32.totalorder %s19, 0
      %p123 = por %p121, %p122
      %p124 = scmp.ne.s32.totalorder %s116, %s118
      %p125 = scmp.eq.s32.totalorder %s24, 1
      %p126 = por %p124, %p125
      %p127 = scmp.ne.s32.totalorder %s118, %s119
      %p128 = scmp.eq.s32.totalorder %s24, 0
      %p129 = por %p127, %p128
      %p130 = scmp.ne.s32.totalorder %s118, %s119
      %p131 = scmp.eq.s32.totalorder %s25, 1
      %p132 = por %p130, %p131
      %p134 = scmp.ne.s32.totalorder %s119, %s133
      %p135 = scmp.eq.s32.totalorder %s25, 0
      %p136 = por %p134, %p135
      %s137 = ssub.s32 %s19, %s26
      %p138 = scmp.eq.s32.totalorder %s137, 0
      %s140 = sadd.s32 %s139, 1
      %s141 = scalar_select %p138, %s139, %s140
      %p144 = pneg %p138
      %p145 = scmp.eq.s32.totalorder %s19, 1
      %p146 = por %p144, %p145
      %p147 = scmp.ne.s32.totalorder %s139, %s142
      %p148 = scmp.eq.s32.totalorder %s19, 0
      %p149 = por %p147, %p148
      %p150 = scmp.ne.s32.totalorder %s139, %s142
      %p151 = scmp.eq.s32.totalorder %s24, 1
      %p152 = por %p150, %p151
      %p153 = scmp.ne.s32.totalorder %s142, %s143
      %p154 = scmp.eq.s32.totalorder %s24, 0
      %p155 = por %p153, %p154
      %p156 = scmp.ne.s32.totalorder %s142, %s143
      %p157 = scmp.eq.s32.totalorder %s25, 1
      %p158 = por %p156, %p157
      %p160 = scmp.ne.s32.totalorder %s143, %s159
      %p161 = scmp.eq.s32.totalorder %s25, 0
      %p162 = por %p160, %p161
      %p163 = scmp.le.s32.totalorder 1, %s19
      %p164 = scmp.lt.s32.totalorder %s19, 3
      %p165 = pnand %p163, %p164
      %p166 = pneg %p165
      // Predicated region
      $region9: #{tpu_custom_call.1} parent=5 // pred_check
        _
      $region10: #{tpu_custom_call.1} parent=5 // pred_check_branch
        %168 = sbr.rel (%p165) target = $region12
      $region11: #{tpu_custom_call.1} parent=5 // pred_region
        %s169 = ssub.s32 %s19, 1
        // Predicated region
        $region13: #{tpu_custom_call.1} parent=11 // pred_check
          %p170 = pneg %p66
        $region14: #{tpu_custom_call.1} parent=11 // pred_check_branch
          %172 = sbr.rel (%p170) target = $region16
        $region15: #{tpu_custom_call.1} parent=11 // pred_region
          %s174 = ssub.s32 49152, 49152
          %175 = vsyncadd [#allocation6], %s174
          %s176 = sshll.u32 [#allocation5], 4
          %s177 = int_to_ptr.vmem [resolvable:$true] %s176
          %182 = dma.hbm_to_vmem [thread:$0]  %s1, 49152, %s177, [#allocation6], 256, 256, 16
        $region16: #{tpu_custom_call.1} parent=11 // pred_fallthru
          _
        // Predicated region
        $region17: #{tpu_custom_call.1} parent=11 // pred_check
          %p183 = pneg %p87
        $region18: #{tpu_custom_call.1} parent=11 // pred_check_branch
          %185 = sbr.rel (%p183) target = $region20
        $region19: #{tpu_custom_call.1} parent=11 // pred_region
          %s187 = ssub.s32 64, 64
          %188 = vsyncadd [#allocation6], %s187
          %s190 = sshll.u32 [#allocation7], 4
          %s191 = int_to_ptr.vmem [resolvable:$true] %s190
          %193 = dma.hbm_to_vmem [thread:$0]  %s2, 64, %s191, [#allocation6]
        $region20: #{tpu_custom_call.1} parent=11 // pred_fallthru
          _
        // Predicated region
        $region21: #{tpu_custom_call.1} parent=11 // pred_check
          %p194 = pneg %p108
        $region22: #{tpu_custom_call.1} parent=11 // pred_check_branch
          %196 = sbr.rel (%p194) target = $region24
        $region23: #{tpu_custom_call.1} parent=11 // pred_region
          %s198 = ssub.s32 49152, 49152
          %199 = vsyncadd [#allocation9], %s198
          %s200 = sshll.u32 [#allocation8], 4
          %s201 = int_to_ptr.vmem [resolvable:$true] %s200
          %206 = dma.hbm_to_vmem [thread:$0]  %s3, 49152, %s201, [#allocation9], 256, 256, 16
        $region24: #{tpu_custom_call.1} parent=11 // pred_fallthru
          _
        // Predicated region
        $region25: #{tpu_custom_call.1} parent=11 // pred_check
          %p207 = pneg %p129
        $region26: #{tpu_custom_call.1} parent=11 // pred_check_branch
          %209 = sbr.rel (%p207) target = $region28
        $region27: #{tpu_custom_call.1} parent=11 // pred_region
          %s211 = ssub.s32 64, 64
          %212 = vsyncadd [#allocation9], %s211
          %s214 = sshll.u32 [#allocation10], 4
          %s215 = int_to_ptr.vmem [resolvable:$true] %s214
          %217 = dma.hbm_to_vmem [thread:$0]  %s4, 64, %s215, [#allocation9]
        $region28: #{tpu_custom_call.1} parent=11 // pred_fallthru
          _
      $region12: #{tpu_custom_call.1} parent=5 // pred_fallthru
        _
      %p218 = scmp.lt.s32.totalorder %s19, 2
      // Predicated region
      $region29: #{tpu_custom_call.1} parent=5 // pred_check
        %p219 = pneg %p218
      $region30: #{tpu_custom_call.1} parent=5 // pred_check_branch
        %221 = sbr.rel (%p219) target = $region32
      $region31: #{tpu_custom_call.1} parent=5 // pred_region
        // Predicated region
        $region33: #{tpu_custom_call.1} parent=31 // pred_check
          %p222 = pneg %p39
        $region34: #{tpu_custom_call.1} parent=31 // pred_check_branch
          %224 = sbr.rel (%p222) target = $region36
        $region35: #{tpu_custom_call.1} parent=31 // pred_region
          %s225 = sand.u32 %s29, 1
          %s226 = scalar_lea.sflag [#allocation3], %s225
          %s227 = sand.u32 %s29, 1
          %s228 = smul.addr %s227, 64
          %s229 = scalar_lea.vmem [#allocation2], %s228
          %s231 = ssub.s32 1024, 1024
          %232 = vsyncadd %s226, %s231
          %s233 = smul.addr %s19, 8
          %s234 = smul.addr %s233, 128
          %s235 = scalar_lea.hbm %s0, %s234
          %s236 = sshll.u32 %s229, 4
          %s237 = int_to_ptr.vmem [resolvable:$true] %s236
          %242 = dma.hbm_to_vmem [thread:$0]  %s235, 1024, %s237, %s226, 512, 512, 32
        $region36: #{tpu_custom_call.1} parent=31 // pred_fallthru
          _
      $region32: #{tpu_custom_call.1} parent=5 // pred_fallthru
        _
      %p243 = scmp.le.s32.totalorder 1, %s19
      %p244 = scmp.lt.s32.totalorder %s19, 3
      %p245 = pnand %p243, %p244
      %p246 = pneg %p245
      // Predicated region
      $region37: #{tpu_custom_call.1} parent=5 // pred_check
        _
      $region38: #{tpu_custom_call.1} parent=5 // pred_check_branch
        %248 = sbr.rel (%p245) target = $region40
      $region39: #{tpu_custom_call.1} parent=5 // pred_region
        %s249 = ssub.s32 %s19, 1
        %s250 = sand.u32 %s32, 1
        %s251 = scalar_lea.sflag [#allocation3], %s250
        %s252 = sand.u32 %s32, 1
        %s253 = smul.addr %s252, 64
        %s254 = scalar_lea.vmem [#allocation2], %s253
        // Predicated region
        $region41: #{tpu_custom_call.1} parent=39 // pred_check
          %p255 = pneg %p45
        $region42: #{tpu_custom_call.1} parent=39 // pred_check_branch
          %257 = sbr.rel (%p255) target = $region44
        $region43: #{tpu_custom_call.1} parent=39 // pred_region
          %258 = dma.done %s251, 1024
        $region44: #{tpu_custom_call.1} parent=39 // pred_fallthru
          _
        // Predicated region
        $region45: #{tpu_custom_call.1} parent=39 // pred_check
          %p259 = pneg %p66
        $region46: #{tpu_custom_call.1} parent=39 // pred_check_branch
          %261 = sbr.rel (%p259) target = $region48
        $region47: #{tpu_custom_call.1} parent=39 // pred_region
          %262 = dma.done [#allocation6], 49152
        $region48: #{tpu_custom_call.1} parent=39 // pred_fallthru
          _
        // Predicated region
        $region49: #{tpu_custom_call.1} parent=39 // pred_check
          %p263 = pneg %p87
        $region50: #{tpu_custom_call.1} parent=39 // pred_check_branch
          %265 = sbr.rel (%p263) target = $region52
        $region51: #{tpu_custom_call.1} parent=39 // pred_region
          %266 = dma.done [#allocation6], 64
        $region52: #{tpu_custom_call.1} parent=39 // pred_fallthru
          _
        // Predicated region
        $region53: #{tpu_custom_call.1} parent=39 // pred_check
          %p267 = pneg %p108
        $region54: #{tpu_custom_call.1} parent=39 // pred_check_branch
          %269 = sbr.rel (%p267) target = $region56
        $region55: #{tpu_custom_call.1} parent=39 // pred_region
          %270 = dma.done [#allocation9], 49152
        $region56: #{tpu_custom_call.1} parent=39 // pred_fallthru
          _
        // Predicated region
        $region57: #{tpu_custom_call.1} parent=39 // pred_check
          %p271 = pneg %p129
        $region58: #{tpu_custom_call.1} parent=39 // pred_check_branch
          %273 = sbr.rel (%p271) target = $region60
        $region59: #{tpu_custom_call.1} parent=39 // pred_region
          %274 = dma.done [#allocation9], 64
        $region60: #{tpu_custom_call.1} parent=39 // pred_fallthru
          _
        %s275 = sand.u32 %s32, 1
        %s276 = scalar_lea.sflag [#allocation3], %s275
        %s277 = sand.u32 %s32, 1
        %s278 = smul.addr %s277, 64
        %s279 = scalar_lea.vmem [#allocation2], %s278
        %p280 = pneg %p45
        %p281 = pneg %p42
        %p282 = pneg %p66
        %p283 = pneg %p63
        %p284 = pneg %p87
        %p285 = pneg %p84
        %p286 = pneg %p108
        %p287 = pneg %p105
        %p288 = pneg %p129
        %p289 = pneg %p126
        %p290 = pneg %p155
        %p291 = pneg %p152
        %s292 = sand.u32 %s142, 1
        %s293 = scalar_lea.sflag [#allocation4], %s292
        %s294 = sand.u32 %s142, 1
        %s295 = smul.addr %s294, 64
        %s296 = scalar_lea.vmem [#allocation11], %s295
        %v297 = vld [vmem:[%s254] sm:$0xff]
        %v298 = vld [vmem:[%s254 + $0x8] sm:$0xff]
        %v299 = vld [vmem:[%s254 + $0x10] sm:$0xff]
        %v300 = vld [vmem:[%s254 + $0x18] sm:$0xff]
        %v301 = vld [vmem:[%s254 + $0x20] sm:$0xff]
        %v302 = vld [vmem:[%s254 + $0x28] sm:$0xff]
        %v303 = vld [vmem:[%s254 + $0x30] sm:$0xff]
        %v304 = vld [vmem:[%s254 + $0x38] sm:$0xff]
        %v309 = vrot.slane %v297, 1
        %v310 = vrot.slane %v298, 1
        %v311 = vrot.slane %v299, 1
        %v312 = vrot.slane %v300, 1
        %vm321 = vcmask 1040384
        %v322 = vrot.slane %v297, 7
        %v323 = vrot.slane %v298, 7
        %v324 = vrot.slane %v299, 7
        %v325 = vrot.slane %v300, 7
        %v326 = vrot.slane %v301, 7
        %v327 = vsel %vm321, %v322, %v326
        %v328 = vrot.slane %v302, 7
        %v329 = vsel %vm321, %v323, %v328
        %v330 = vrot.slane %v303, 7
        %v331 = vsel %vm321, %v324, %v330
        %v332 = vrot.slane %v304, 7
        %v333 = vsel %vm321, %v325, %v332
        %v342 = vsel %vm321, %v309, %v322
        %v343 = vsel %vm321, %v310, %v323
        %v344 = vsel %vm321, %v311, %v324
        %v345 = vsel %vm321, %v312, %v325
        %vm346 = vcmask 1046528
        %v347 = vrot.slane %v301, 1
        %v348 = vsel %vm346, %v309, %v347
        %v349 = vrot.slane %v302, 1
        %v350 = vsel %vm346, %v310, %v349
        %v351 = vrot.slane %v303, 1
        %v352 = vsel %vm346, %v311, %v351
        %v353 = vrot.slane %v304, 1
        %v354 = vsel %vm346, %v312, %v353
        %v367 = vsel %vm346, %v347, %v326
        %v368 = vsel %vm346, %v349, %v328
        %v369 = vsel %vm346, %v351, %v330
        %v370 = vsel %vm346, %v353, %v332
        %v371 = vpack.c.bf16 %v327, %v342
        %v372 = vpack.c.bf16 %v329, %v343
        %v373 = vpack.c.bf16 %v331, %v344
        %v374 = vpack.c.bf16 %v333, %v345
        %v375 = vpack.c.bf16 %v301, %v297
        %v376 = vpack.c.bf16 %v302, %v298
        %v377 = vpack.c.bf16 %v303, %v299
        %v378 = vpack.c.bf16 %v304, %v300
        %v379 = vpack.c.bf16 %v367, %v348
        %v380 = vpack.c.bf16 %v368, %v350
        %v381 = vpack.c.bf16 %v369, %v352
        %v382 = vpack.c.bf16 %v370, %v354
        %v383 = vld [vmem:[#allocation5] sm:$0xff]
        %v384 = vld [vmem:[#allocation5 + $0x8] sm:$0xff]
        %v385 = vld [vmem:[#allocation5 + $0x10] sm:$0xff]
        %v386 = vld [vmem:[#allocation5 + $0x18] sm:$0xff]
        %v387 = vld [vmem:[#allocation5 + $0x20] sm:$0xff]
        %v388 = vld [vmem:[#allocation5 + $0x28] sm:$0xff]
        %v389 = vld [vmem:[#allocation5 + $0x30] sm:$0xff]
        %v390 = vld [vmem:[#allocation5 + $0x38] sm:$0xff]
        %v391 = vld [vmem:[#allocation5 + $0x40] sm:$0xff]
        %v392 = vld [vmem:[#allocation5 + $0x48] sm:$0xff]
        %v393 = vld [vmem:[#allocation5 + $0x50] sm:$0xff]
        %v394 = vld [vmem:[#allocation5 + $0x58] sm:$0xff]
        %v395 = vld [vmem:[#allocation5 + $0x60] sm:$0xff]
        %v396 = vld [vmem:[#allocation5 + $0x68] sm:$0xff]
        %v397 = vld [vmem:[#allocation5 + $0x70] sm:$0xff]
        %v398 = vld [vmem:[#allocation5 + $0x78] sm:$0xff]
        %v399 = vld [vmem:[#allocation5 + $0x80] sm:$0xff]
        %v400 = vld [vmem:[#allocation5 + $0x88] sm:$0xff]
        %v401 = vld [vmem:[#allocation5 + $0x90] sm:$0xff]
        %v402 = vld [vmem:[#allocation5 + $0x98] sm:$0xff]
        %v403 = vld [vmem:[#allocation5 + $0xa0] sm:$0xff]
        %v404 = vld [vmem:[#allocation5 + $0xa8] sm:$0xff]
        %v405 = vld [vmem:[#allocation5 + $0xb0] sm:$0xff]
        %v406 = vld [vmem:[#allocation5 + $0xb8] sm:$0xff]
        %v407 = vld [vmem:[#allocation5 + $0xc0] sm:$0xff]
        %v408 = vld [vmem:[#allocation5 + $0xc8] sm:$0xff]
        %v409 = vld [vmem:[#allocation5 + $0xd0] sm:$0xff]
        %v410 = vld [vmem:[#allocation5 + $0xd8] sm:$0xff]
        %v411 = vld [vmem:[#allocation5 + $0xe0] sm:$0xff]
        %v412 = vld [vmem:[#allocation5 + $0xe8] sm:$0xff]
        %v413 = vld [vmem:[#allocation5 + $0xf0] sm:$0xff]
        %v414 = vld [vmem:[#allocation5 + $0xf8] sm:$0xff]
        %v415 = vld [vmem:[#allocation5 + $0x100] sm:$0xff]
        %v416 = vld [vmem:[#allocation5 + $0x108] sm:$0xff]
        %v417 = vld [vmem:[#allocation5 + $0x110] sm:$0xff]
        %v418 = vld [vmem:[#allocation5 + $0x118] sm:$0xff]
        %v419 = vld [vmem:[#allocation5 + $0x120] sm:$0xff]
        %v420 = vld [vmem:[#allocation5 + $0x128] sm:$0xff]
        %v421 = vld [vmem:[#allocation5 + $0x130] sm:$0xff]
        %v422 = vld [vmem:[#allocation5 + $0x138] sm:$0xff]
        %v423 = vld [vmem:[#allocation5 + $0x140] sm:$0xff]
        %v424 = vld [vmem:[#allocation5 + $0x148] sm:$0xff]
        %v425 = vld [vmem:[#allocation5 + $0x150] sm:$0xff]
        %v426 = vld [vmem:[#allocation5 + $0x158] sm:$0xff]
        %v427 = vld [vmem:[#allocation5 + $0x160] sm:$0xff]
        %v428 = vld [vmem:[#allocation5 + $0x168] sm:$0xff]
        %v429 = vld [vmem:[#allocation5 + $0x170] sm:$0xff]
        %v430 = vld [vmem:[#allocation5 + $0x178] sm:$0xff]
        %v431 = vld [vmem:[#allocation5 + $0x180] sm:$0xff]
        %v432 = vld [vmem:[#allocation5 + $0x188] sm:$0xff]
        %v433 = vld [vmem:[#allocation5 + $0x190] sm:$0xff]
        %v434 = vld [vmem:[#allocation5 + $0x198] sm:$0xff]
        %v435 = vld [vmem:[#allocation5 + $0x1a0] sm:$0xff]
        %v436 = vld [vmem:[#allocation5 + $0x1a8] sm:$0xff]
        %v437 = vld [vmem:[#allocation5 + $0x1b0] sm:$0xff]
        %v438 = vld [vmem:[#allocation5 + $0x1b8] sm:$0xff]
        %v439 = vld [vmem:[#allocation5 + $0x1c0] sm:$0xff]
        %v440 = vld [vmem:[#allocation5 + $0x1c8] sm:$0xff]
        %v441 = vld [vmem:[#allocation5 + $0x1d0] sm:$0xff]
        %v442 = vld [vmem:[#allocation5 + $0x1d8] sm:$0xff]
        %v443 = vld [vmem:[#allocation5 + $0x1e0] sm:$0xff]
        %v444 = vld [vmem:[#allocation5 + $0x1e8] sm:$0xff]
        %v445 = vld [vmem:[#allocation5 + $0x1f0] sm:$0xff]
        %v446 = vld [vmem:[#allocation5 + $0x1f8] sm:$0xff]
        %v447 = vld [vmem:[#allocation5 + $0x200] sm:$0xff]
        %v448 = vld [vmem:[#allocation5 + $0x208] sm:$0xff]
        %v449 = vld [vmem:[#allocation5 + $0x210] sm:$0xff]
        %v450 = vld [vmem:[#allocation5 + $0x218] sm:$0xff]
        %v451 = vld [vmem:[#allocation5 + $0x220] sm:$0xff]
        %v452 = vld [vmem:[#allocation5 + $0x228] sm:$0xff]
        %v453 = vld [vmem:[#allocation5 + $0x230] sm:$0xff]
        %v454 = vld [vmem:[#allocation5 + $0x238] sm:$0xff]
        %v455 = vld [vmem:[#allocation5 + $0x240] sm:$0xff]
        %v456 = vld [vmem:[#allocation5 + $0x248] sm:$0xff]
        %v457 = vld [vmem:[#allocation5 + $0x250] sm:$0xff]
        %v458 = vld [vmem:[#allocation5 + $0x258] sm:$0xff]
        %v459 = vld [vmem:[#allocation5 + $0x260] sm:$0xff]
        %v460 = vld [vmem:[#allocation5 + $0x268] sm:$0xff]
        %v461 = vld [vmem:[#allocation5 + $0x270] sm:$0xff]
        %v462 = vld [vmem:[#allocation5 + $0x278] sm:$0xff]
        %v463 = vld [vmem:[#allocation5 + $0x280] sm:$0xff]
        %v464 = vld [vmem:[#allocation5 + $0x288] sm:$0xff]
        %v465 = vld [vmem:[#allocation5 + $0x290] sm:$0xff]
        %v466 = vld [vmem:[#allocation5 + $0x298] sm:$0xff]
        %v467 = vld [vmem:[#allocation5 + $0x2a0] sm:$0xff]
        %v468 = vld [vmem:[#allocation5 + $0x2a8] sm:$0xff]
        %v469 = vld [vmem:[#allocation5 + $0x2b0] sm:$0xff]
        %v470 = vld [vmem:[#allocation5 + $0x2b8] sm:$0xff]
        %v471 = vld [vmem:[#allocation5 + $0x2c0] sm:$0xff]
        %v472 = vld [vmem:[#allocation5 + $0x2c8] sm:$0xff]
        %v473 = vld [vmem:[#allocation5 + $0x2d0] sm:$0xff]
        %v474 = vld [vmem:[#allocation5 + $0x2d8] sm:$0xff]
        %v475 = vld [vmem:[#allocation5 + $0x2e0] sm:$0xff]
        %v476 = vld [vmem:[#allocation5 + $0x2e8] sm:$0xff]
        %v477 = vld [vmem:[#allocation5 + $0x2f0] sm:$0xff]
        %v478 = vld [vmem:[#allocation5 + $0x2f8] sm:$0xff]
        %v479 = vld [vmem:[#allocation5 + $0x300] sm:$0xff]
        %v480 = vld [vmem:[#allocation5 + $0x308] sm:$0xff]
        %v481 = vld [vmem:[#allocation5 + $0x310] sm:$0xff]
        %v482 = vld [vmem:[#allocation5 + $0x318] sm:$0xff]
        %v483 = vld [vmem:[#allocation5 + $0x320] sm:$0xff]
        %v484 = vld [vmem:[#allocation5 + $0x328] sm:$0xff]
        %v485 = vld [vmem:[#allocation5 + $0x330] sm:$0xff]
        %v486 = vld [vmem:[#allocation5 + $0x338] sm:$0xff]
        %v487 = vld [vmem:[#allocation5 + $0x340] sm:$0xff]
        %v488 = vld [vmem:[#allocation5 + $0x348] sm:$0xff]
        %v489 = vld [vmem:[#allocation5 + $0x350] sm:$0xff]
        %v490 = vld [vmem:[#allocation5 + $0x358] sm:$0xff]
        %v491 = vld [vmem:[#allocation5 + $0x360] sm:$0xff]
        %v492 = vld [vmem:[#allocation5 + $0x368] sm:$0xff]
        %v493 = vld [vmem:[#allocation5 + $0x370] sm:$0xff]
        %v494 = vld [vmem:[#allocation5 + $0x378] sm:$0xff]
        %v495 = vld [vmem:[#allocation5 + $0x380] sm:$0xff]
        %v496 = vld [vmem:[#allocation5 + $0x388] sm:$0xff]
        %v497 = vld [vmem:[#allocation5 + $0x390] sm:$0xff]
        %v498 = vld [vmem:[#allocation5 + $0x398] sm:$0xff]
        %v499 = vld [vmem:[#allocation5 + $0x3a0] sm:$0xff]
        %v500 = vld [vmem:[#allocation5 + $0x3a8] sm:$0xff]
        %v501 = vld [vmem:[#allocation5 + $0x3b0] sm:$0xff]
        %v502 = vld [vmem:[#allocation5 + $0x3b8] sm:$0xff]
        %v503 = vld [vmem:[#allocation5 + $0x3c0] sm:$0xff]
        %v504 = vld [vmem:[#allocation5 + $0x3c8] sm:$0xff]
        %v505 = vld [vmem:[#allocation5 + $0x3d0] sm:$0xff]
        %v506 = vld [vmem:[#allocation5 + $0x3d8] sm:$0xff]
        %v507 = vld [vmem:[#allocation5 + $0x3e0] sm:$0xff]
        %v508 = vld [vmem:[#allocation5 + $0x3e8] sm:$0xff]
        %v509 = vld [vmem:[#allocation5 + $0x3f0] sm:$0xff]
        %v510 = vld [vmem:[#allocation5 + $0x3f8] sm:$0xff]
        %s511 = scalar_lea.vmem [#allocation5], 1024
        %v512 = vld [vmem:[%s511] sm:$0xff]
        %v513 = vld [vmem:[%s511 + $0x8] sm:$0xff]
        %v514 = vld [vmem:[%s511 + $0x10] sm:$0xff]
        %v515 = vld [vmem:[%s511 + $0x18] sm:$0xff]
        %v516 = vld [vmem:[%s511 + $0x20] sm:$0xff]
        %v517 = vld [vmem:[%s511 + $0x28] sm:$0xff]
        %v518 = vld [vmem:[%s511 + $0x30] sm:$0xff]
        %v519 = vld [vmem:[%s511 + $0x38] sm:$0xff]
        %v520 = vld [vmem:[%s511 + $0x40] sm:$0xff]
        %v521 = vld [vmem:[%s511 + $0x48] sm:$0xff]
        %v522 = vld [vmem:[%s511 + $0x50] sm:$0xff]
        %v523 = vld [vmem:[%s511 + $0x58] sm:$0xff]
        %v524 = vld [vmem:[%s511 + $0x60] sm:$0xff]
        %v525 = vld [vmem:[%s511 + $0x68] sm:$0xff]
        %v526 = vld [vmem:[%s511 + $0x70] sm:$0xff]
        %v527 = vld [vmem:[%s511 + $0x78] sm:$0xff]
        %v528 = vld [vmem:[%s511 + $0x80] sm:$0xff]
        %v529 = vld [vmem:[%s511 + $0x88] sm:$0xff]
        %v530 = vld [vmem:[%s511 + $0x90] sm:$0xff]
        %v531 = vld [vmem:[%s511 + $0x98] sm:$0xff]
        %v532 = vld [vmem:[%s511 + $0xa0] sm:$0xff]
        %v533 = vld [vmem:[%s511 + $0xa8] sm:$0xff]
        %v534 = vld [vmem:[%s511 + $0xb0] sm:$0xff]
        %v535 = vld [vmem:[%s511 + $0xb8] sm:$0xff]
        %v536 = vld [vmem:[%s511 + $0xc0] sm:$0xff]
        %v537 = vld [vmem:[%s511 + $0xc8] sm:$0xff]
        %v538 = vld [vmem:[%s511 + $0xd0] sm:$0xff]
        %v539 = vld [vmem:[%s511 + $0xd8] sm:$0xff]
        %v540 = vld [vmem:[%s511 + $0xe0] sm:$0xff]
        %v541 = vld [vmem:[%s511 + $0xe8] sm:$0xff]
        %v542 = vld [vmem:[%s511 + $0xf0] sm:$0xff]
        %v543 = vld [vmem:[%s511 + $0xf8] sm:$0xff]
        %v544 = vld [vmem:[%s511 + $0x100] sm:$0xff]
        %v545 = vld [vmem:[%s511 + $0x108] sm:$0xff]
        %v546 = vld [vmem:[%s511 + $0x110] sm:$0xff]
        %v547 = vld [vmem:[%s511 + $0x118] sm:$0xff]
        %v548 = vld [vmem:[%s511 + $0x120] sm:$0xff]
        %v549 = vld [vmem:[%s511 + $0x128] sm:$0xff]
        %v550 = vld [vmem:[%s511 + $0x130] sm:$0xff]
        %v551 = vld [vmem:[%s511 + $0x138] sm:$0xff]
        %v552 = vld [vmem:[%s511 + $0x140] sm:$0xff]
        %v553 = vld [vmem:[%s511 + $0x148] sm:$0xff]
        %v554 = vld [vmem:[%s511 + $0x150] sm:$0xff]
        %v555 = vld [vmem:[%s511 + $0x158] sm:$0xff]
        %v556 = vld [vmem:[%s511 + $0x160] sm:$0xff]
        %v557 = vld [vmem:[%s511 + $0x168] sm:$0xff]
        %v558 = vld [vmem:[%s511 + $0x170] sm:$0xff]
        %v559 = vld [vmem:[%s511 + $0x178] sm:$0xff]
        %v560 = vld [vmem:[%s511 + $0x180] sm:$0xff]
        %v561 = vld [vmem:[%s511 + $0x188] sm:$0xff]
        %v562 = vld [vmem:[%s511 + $0x190] sm:$0xff]
        %v563 = vld [vmem:[%s511 + $0x198] sm:$0xff]
        %v564 = vld [vmem:[%s511 + $0x1a0] sm:$0xff]
        %v565 = vld [vmem:[%s511 + $0x1a8] sm:$0xff]
        %v566 = vld [vmem:[%s511 + $0x1b0] sm:$0xff]
        %v567 = vld [vmem:[%s511 + $0x1b8] sm:$0xff]
        %v568 = vld [vmem:[%s511 + $0x1c0] sm:$0xff]
        %v569 = vld [vmem:[%s511 + $0x1c8] sm:$0xff]
        %v570 = vld [vmem:[%s511 + $0x1d0] sm:$0xff]
        %v571 = vld [vmem:[%s511 + $0x1d8] sm:$0xff]
        %v572 = vld [vmem:[%s511 + $0x1e0] sm:$0xff]
        %v573 = vld [vmem:[%s511 + $0x1e8] sm:$0xff]
        %v574 = vld [vmem:[%s511 + $0x1f0] sm:$0xff]
        %v575 = vld [vmem:[%s511 + $0x1f8] sm:$0xff]
        %v576 = vld [vmem:[%s511 + $0x200] sm:$0xff]
        %v577 = vld [vmem:[%s511 + $0x208] sm:$0xff]
        %v578 = vld [vmem:[%s511 + $0x210] sm:$0xff]
        %v579 = vld [vmem:[%s511 + $0x218] sm:$0xff]
        %v580 = vld [vmem:[%s511 + $0x220] sm:$0xff]
        %v581 = vld [vmem:[%s511 + $0x228] sm:$0xff]
        %v582 = vld [vmem:[%s511 + $0x230] sm:$0xff]
        %v583 = vld [vmem:[%s511 + $0x238] sm:$0xff]
        %v584 = vld [vmem:[%s511 + $0x240] sm:$0xff]
        %v585 = vld [vmem:[%s511 + $0x248] sm:$0xff]
        %v586 = vld [vmem:[%s511 + $0x250] sm:$0xff]
        %v587 = vld [vmem:[%s511 + $0x258] sm:$0xff]
        %v588 = vld [vmem:[%s511 + $0x260] sm:$0xff]
        %v589 = vld [vmem:[%s511 + $0x268] sm:$0xff]
        %v590 = vld [vmem:[%s511 + $0x270] sm:$0xff]
        %v591 = vld [vmem:[%s511 + $0x278] sm:$0xff]
        %v592 = vld [vmem:[%s511 + $0x280] sm:$0xff]
        %v593 = vld [vmem:[%s511 + $0x288] sm:$0xff]
        %v594 = vld [vmem:[%s511 + $0x290] sm:$0xff]
        %v595 = vld [vmem:[%s511 + $0x298] sm:$0xff]
        %v596 = vld [vmem:[%s511 + $0x2a0] sm:$0xff]
        %v597 = vld [vmem:[%s511 + $0x2a8] sm:$0xff]
        %v598 = vld [vmem:[%s511 + $0x2b0] sm:$0xff]
        %v599 = vld [vmem:[%s511 + $0x2b8] sm:$0xff]
        %v600 = vld [vmem:[%s511 + $0x2c0] sm:$0xff]
        %v601 = vld [vmem:[%s511 + $0x2c8] sm:$0xff]
        %v602 = vld [vmem:[%s511 + $0x2d0] sm:$0xff]
        %v603 = vld [vmem:[%s511 + $0x2d8] sm:$0xff]
        %v604 = vld [vmem:[%s511 + $0x2e0] sm:$0xff]
        %v605 = vld [vmem:[%s511 + $0x2e8] sm:$0xff]
        %v606 = vld [vmem:[%s511 + $0x2f0] sm:$0xff]
        %v607 = vld [vmem:[%s511 + $0x2f8] sm:$0xff]
        %v608 = vld [vmem:[%s511 + $0x300] sm:$0xff]
        %v609 = vld [vmem:[%s511 + $0x308] sm:$0xff]
        %v610 = vld [vmem:[%s511 + $0x310] sm:$0xff]
        %v611 = vld [vmem:[%s511 + $0x318] sm:$0xff]
        %v612 = vld [vmem:[%s511 + $0x320] sm:$0xff]
        %v613 = vld [vmem:[%s511 + $0x328] sm:$0xff]
        %v614 = vld [vmem:[%s511 + $0x330] sm:$0xff]
        %v615 = vld [vmem:[%s511 + $0x338] sm:$0xff]
        %v616 = vld [vmem:[%s511 + $0x340] sm:$0xff]
        %v617 = vld [vmem:[%s511 + $0x348] sm:$0xff]
        %v618 = vld [vmem:[%s511 + $0x350] sm:$0xff]
        %v619 = vld [vmem:[%s511 + $0x358] sm:$0xff]
        %v620 = vld [vmem:[%s511 + $0x360] sm:$0xff]
        %v621 = vld [vmem:[%s511 + $0x368] sm:$0xff]
        %v622 = vld [vmem:[%s511 + $0x370] sm:$0xff]
        %v623 = vld [vmem:[%s511 + $0x378] sm:$0xff]
        %v624 = vld [vmem:[%s511 + $0x380] sm:$0xff]
        %v625 = vld [vmem:[%s511 + $0x388] sm:$0xff]
        %v626 = vld [vmem:[%s511 + $0x390] sm:$0xff]
        %v627 = vld [vmem:[%s511 + $0x398] sm:$0xff]
        %v628 = vld [vmem:[%s511 + $0x3a0] sm:$0xff]
        %v629 = vld [vmem:[%s511 + $0x3a8] sm:$0xff]
        %v630 = vld [vmem:[%s511 + $0x3b0] sm:$0xff]
        %v631 = vld [vmem:[%s511 + $0x3b8] sm:$0xff]
        %v632 = vld [vmem:[%s511 + $0x3c0] sm:$0xff]
        %v633 = vld [vmem:[%s511 + $0x3c8] sm:$0xff]
        %v634 = vld [vmem:[%s511 + $0x3d0] sm:$0xff]
        %v635 = vld [vmem:[%s511 + $0x3d8] sm:$0xff]
        %v636 = vld [vmem:[%s511 + $0x3e0] sm:$0xff]
        %v637 = vld [vmem:[%s511 + $0x3e8] sm:$0xff]
        %v638 = vld [vmem:[%s511 + $0x3f0] sm:$0xff]
        %v639 = vld [vmem:[%s511 + $0x3f8] sm:$0xff]
        %v768 = vunpack.c.l.b16 %v512
        %v769 = vunpack.c.h.b16 %v512
        %v770 = vunpack.c.l.b16 %v513
        %v771 = vunpack.c.h.b16 %v513
        %v772 = vunpack.c.l.b16 %v514
        %v773 = vunpack.c.h.b16 %v514
        %v774 = vunpack.c.l.b16 %v515
        %v775 = vunpack.c.h.b16 %v515
        %v776 = vunpack.c.l.b16 %v516
        %v777 = vunpack.c.h.b16 %v516
        %v778 = vunpack.c.l.b16 %v517
        %v779 = vunpack.c.h.b16 %v517
        %v780 = vunpack.c.l.b16 %v518
        %v781 = vunpack.c.h.b16 %v518
        %v782 = vunpack.c.l.b16 %v519
        %v783 = vunpack.c.h.b16 %v519
        %v784 = vunpack.c.l.b16 %v520
        %v785 = vunpack.c.h.b16 %v520
        %v786 = vunpack.c.l.b16 %v521
        %v787 = vunpack.c.h.b16 %v521
        %v788 = vunpack.c.l.b16 %v522
        %v789 = vunpack.c.h.b16 %v522
        %v790 = vunpack.c.l.b16 %v523
        %v791 = vunpack.c.h.b16 %v523
        %v792 = vunpack.c.l.b16 %v524
        %v793 = vunpack.c.h.b16 %v524
        %v794 = vunpack.c.l.b16 %v525
        %v795 = vunpack.c.h.b16 %v525
        %v796 = vunpack.c.l.b16 %v526
        %v797 = vunpack.c.h.b16 %v526
        %v798 = vunpack.c.l.b16 %v527
        %v799 = vunpack.c.h.b16 %v527
        %v800 = vunpack.c.l.b16 %v528
        %v801 = vunpack.c.h.b16 %v528
        %v802 = vunpack.c.l.b16 %v529
        %v803 = vunpack.c.h.b16 %v529
        %v804 = vunpack.c.l.b16 %v530
        %v805 = vunpack.c.h.b16 %v530
        %v806 = vunpack.c.l.b16 %v531
        %v807 = vunpack.c.h.b16 %v531
        %v808 = vunpack.c.l.b16 %v532
        %v809 = vunpack.c.h.b16 %v532
        %v810 = vunpack.c.l.b16 %v533
        %v811 = vunpack.c.h.b16 %v533
        %v812 = vunpack.c.l.b16 %v534
        %v813 = vunpack.c.h.b16 %v534
        %v814 = vunpack.c.l.b16 %v535
        %v815 = vunpack.c.h.b16 %v535
        %v816 = vunpack.c.l.b16 %v536
        %v817 = vunpack.c.h.b16 %v536
        %v818 = vunpack.c.l.b16 %v537
        %v819 = vunpack.c.h.b16 %v537
        %v820 = vunpack.c.l.b16 %v538
        %v821 = vunpack.c.h.b16 %v538
        %v822 = vunpack.c.l.b16 %v539
        %v823 = vunpack.c.h.b16 %v539
        %v824 = vunpack.c.l.b16 %v540
        %v825 = vunpack.c.h.b16 %v540
        %v826 = vunpack.c.l.b16 %v541
        %v827 = vunpack.c.h.b16 %v541
        %v828 = vunpack.c.l.b16 %v542
        %v829 = vunpack.c.h.b16 %v542
        %v830 = vunpack.c.l.b16 %v543
        %v831 = vunpack.c.h.b16 %v543
        %v832 = vunpack.c.l.b16 %v544
        %v833 = vunpack.c.h.b16 %v544
        %v834 = vunpack.c.l.b16 %v545
        %v835 = vunpack.c.h.b16 %v545
        %v836 = vunpack.c.l.b16 %v546
        %v837 = vunpack.c.h.b16 %v546
        %v838 = vunpack.c.l.b16 %v547
        %v839 = vunpack.c.h.b16 %v547
        %v840 = vunpack.c.l.b16 %v548
        %v841 = vunpack.c.h.b16 %v548
        %v842 = vunpack.c.l.b16 %v549
        %v843 = vunpack.c.h.b16 %v549
        %v844 = vunpack.c.l.b16 %v550
        %v845 = vunpack.c.h.b16 %v550
        %v846 = vunpack.c.l.b16 %v551
        %v847 = vunpack.c.h.b16 %v551
        %v848 = vunpack.c.l.b16 %v552
        %v849 = vunpack.c.h.b16 %v552
        %v850 = vunpack.c.l.b16 %v553
        %v851 = vunpack.c.h.b16 %v553
        %v852 = vunpack.c.l.b16 %v554
        %v853 = vunpack.c.h.b16 %v554
        %v854 = vunpack.c.l.b16 %v555
        %v855 = vunpack.c.h.b16 %v555
        %v856 = vunpack.c.l.b16 %v556
        %v857 = vunpack.c.h.b16 %v556
        %v858 = vunpack.c.l.b16 %v557
        %v859 = vunpack.c.h.b16 %v557
        %v860 = vunpack.c.l.b16 %v558
        %v861 = vunpack.c.h.b16 %v558
        %v862 = vunpack.c.l.b16 %v559
        %v863 = vunpack.c.h.b16 %v559
        %v864 = vunpack.c.l.b16 %v560
        %v865 = vunpack.c.h.b16 %v560
        %v866 = vunpack.c.l.b16 %v561
        %v867 = vunpack.c.h.b16 %v561
        %v868 = vunpack.c.l.b16 %v562
        %v869 = vunpack.c.h.b16 %v562
        %v870 = vunpack.c.l.b16 %v563
        %v871 = vunpack.c.h.b16 %v563
        %v872 = vunpack.c.l.b16 %v564
        %v873 = vunpack.c.h.b16 %v564
        %v874 = vunpack.c.l.b16 %v565
        %v875 = vunpack.c.h.b16 %v565
        %v876 = vunpack.c.l.b16 %v566
        %v877 = vunpack.c.h.b16 %v566
        %v878 = vunpack.c.l.b16 %v567
        %v879 = vunpack.c.h.b16 %v567
        %v880 = vunpack.c.l.b16 %v568
        %v881 = vunpack.c.h.b16 %v568
        %v882 = vunpack.c.l.b16 %v569
        %v883 = vunpack.c.h.b16 %v569
        %v884 = vunpack.c.l.b16 %v570
        %v885 = vunpack.c.h.b16 %v570
        %v886 = vunpack.c.l.b16 %v571
        %v887 = vunpack.c.h.b16 %v571
        %v888 = vunpack.c.l.b16 %v572
        %v889 = vunpack.c.h.b16 %v572
        %v890 = vunpack.c.l.b16 %v573
        %v891 = vunpack.c.h.b16 %v573
        %v892 = vunpack.c.l.b16 %v574
        %v893 = vunpack.c.h.b16 %v574
        %v894 = vunpack.c.l.b16 %v575
        %v895 = vunpack.c.h.b16 %v575
        %v896 = vunpack.c.l.b16 %v576
        %v897 = vunpack.c.h.b16 %v576
        %v898 = vunpack.c.l.b16 %v577
        %v899 = vunpack.c.h.b16 %v577
        %v900 = vunpack.c.l.b16 %v578
        %v901 = vunpack.c.h.b16 %v578
        %v902 = vunpack.c.l.b16 %v579
        %v903 = vunpack.c.h.b16 %v579
        %v904 = vunpack.c.l.b16 %v580
        %v905 = vunpack.c.h.b16 %v580
        %v906 = vunpack.c.l.b16 %v581
        %v907 = vunpack.c.h.b16 %v581
        %v908 = vunpack.c.l.b16 %v582
        %v909 = vunpack.c.h.b16 %v582
        %v910 = vunpack.c.l.b16 %v583
        %v911 = vunpack.c.h.b16 %v583
        %v912 = vunpack.c.l.b16 %v584
        %v913 = vunpack.c.h.b16 %v584
        %v914 = vunpack.c.l.b16 %v585
        %v915 = vunpack.c.h.b16 %v585
        %v916 = vunpack.c.l.b16 %v586
        %v917 = vunpack.c.h.b16 %v586
        %v918 = vunpack.c.l.b16 %v587
        %v919 = vunpack.c.h.b16 %v587
        %v920 = vunpack.c.l.b16 %v588
        %v921 = vunpack.c.h.b16 %v588
        %v922 = vunpack.c.l.b16 %v589
        %v923 = vunpack.c.h.b16 %v589
        %v924 = vunpack.c.l.b16 %v590
        %v925 = vunpack.c.h.b16 %v590
        %v926 = vunpack.c.l.b16 %v591
        %v927 = vunpack.c.h.b16 %v591
        %v928 = vunpack.c.l.b16 %v592
        %v929 = vunpack.c.h.b16 %v592
        %v930 = vunpack.c.l.b16 %v593
        %v931 = vunpack.c.h.b16 %v593
        %v932 = vunpack.c.l.b16 %v594
        %v933 = vunpack.c.h.b16 %v594
        %v934 = vunpack.c.l.b16 %v595
        %v935 = vunpack.c.h.b16 %v595
        %v936 = vunpack.c.l.b16 %v596
        %v937 = vunpack.c.h.b16 %v596
        %v938 = vunpack.c.l.b16 %v597
        %v939 = vunpack.c.h.b16 %v597
        %v940 = vunpack.c.l.b16 %v598
        %v941 = vunpack.c.h.b16 %v598
        %v942 = vunpack.c.l.b16 %v599
        %v943 = vunpack.c.h.b16 %v599
        %v944 = vunpack.c.l.b16 %v600
        %v945 = vunpack.c.h.b16 %v600
        %v946 = vunpack.c.l.b16 %v601
        %v947 = vunpack.c.h.b16 %v601
        %v948 = vunpack.c.l.b16 %v602
        %v949 = vunpack.c.h.b16 %v602
        %v950 = vunpack.c.l.b16 %v603
        %v951 = vunpack.c.h.b16 %v603
        %v952 = vunpack.c.l.b16 %v604
        %v953 = vunpack.c.h.b16 %v604
        %v954 = vunpack.c.l.b16 %v605
        %v955 = vunpack.c.h.b16 %v605
        %v956 = vunpack.c.l.b16 %v606
        %v957 = vunpack.c.h.b16 %v606
        %v958 = vunpack.c.l.b16 %v607
        %v959 = vunpack.c.h.b16 %v607
        %v960 = vunpack.c.l.b16 %v608
        %v961 = vunpack.c.h.b16 %v608
        %v962 = vunpack.c.l.b16 %v609
        %v963 = vunpack.c.h.b16 %v609
        %v964 = vunpack.c.l.b16 %v610
        %v965 = vunpack.c.h.b16 %v610
        %v966 = vunpack.c.l.b16 %v611
        %v967 = vunpack.c.h.b16 %v611
        %v968 = vunpack.c.l.b16 %v612
        %v969 = vunpack.c.h.b16 %v612
        %v970 = vunpack.c.l.b16 %v613
        %v971 = vunpack.c.h.b16 %v613
        %v972 = vunpack.c.l.b16 %v614
        %v973 = vunpack.c.h.b16 %v614
        %v974 = vunpack.c.l.b16 %v615
        %v975 = vunpack.c.h.b16 %v615
        %v976 = vunpack.c.l.b16 %v616
        %v977 = vunpack.c.h.b16 %v616
        %v978 = vunpack.c.l.b16 %v617
        %v979 = vunpack.c.h.b16 %v617
        %v980 = vunpack.c.l.b16 %v618
        %v981 = vunpack.c.h.b16 %v618
        %v982 = vunpack.c.l.b16 %v619
        %v983 = vunpack.c.h.b16 %v619
        %v984 = vunpack.c.l.b16 %v620
        %v985 = vunpack.c.h.b16 %v620
        %v986 = vunpack.c.l.b16 %v621
        %v987 = vunpack.c.h.b16 %v621
        %v988 = vunpack.c.l.b16 %v622
        %v989 = vunpack.c.h.b16 %v622
        %v990 = vunpack.c.l.b16 %v623
        %v991 = vunpack.c.h.b16 %v623
        %v992 = vunpack.c.l.b16 %v624
        %v993 = vunpack.c.h.b16 %v624
        %v994 = vunpack.c.l.b16 %v625
        %v995 = vunpack.c.h.b16 %v625
        %v996 = vunpack.c.l.b16 %v626
        %v997 = vunpack.c.h.b16 %v626
        %v998 = vunpack.c.l.b16 %v627
        %v999 = vunpack.c.h.b16 %v627
        %v1000 = vunpack.c.l.b16 %v628
        %v1001 = vunpack.c.h.b16 %v628
        %v1002 = vunpack.c.l.b16 %v629
        %v1003 = vunpack.c.h.b16 %v629
        %v1004 = vunpack.c.l.b16 %v630
        %v1005 = vunpack.c.h.b16 %v630
        %v1006 = vunpack.c.l.b16 %v631
        %v1007 = vunpack.c.h.b16 %v631
        %v1008 = vunpack.c.l.b16 %v632
        %v1009 = vunpack.c.h.b16 %v632
        %v1010 = vunpack.c.l.b16 %v633
        %v1011 = vunpack.c.h.b16 %v633
        %v1012 = vunpack.c.l.b16 %v634
        %v1013 = vunpack.c.h.b16 %v634
        %v1014 = vunpack.c.l.b16 %v635
        %v1015 = vunpack.c.h.b16 %v635
        %v1016 = vunpack.c.l.b16 %v636
        %v1017 = vunpack.c.h.b16 %v636
        %v1018 = vunpack.c.l.b16 %v637
        %v1019 = vunpack.c.h.b16 %v637
        %v1020 = vunpack.c.l.b16 %v638
        %v1021 = vunpack.c.h.b16 %v638
        %v1022 = vunpack.c.l.b16 %v639
        %v1023 = vunpack.c.h.b16 %v639
        %v1024 = vpack.c.b16 %v772, %v768
        %v1025 = vpack.c.b16 %v773, %v769
        %v1026 = vpack.c.b16 %v774, %v770
        %v1027 = vpack.c.b16 %v775, %v771
        %v1028 = vpack.c.b16 %v780, %v776
        %v1029 = vpack.c.b16 %v781, %v777
        %v1030 = vpack.c.b16 %v782, %v778
        %v1031 = vpack.c.b16 %v783, %v779
        %v1032 = vpack.c.b16 %v788, %v784
        %v1033 = vpack.c.b16 %v789, %v785
        %v1034 = vpack.c.b16 %v790, %v786
        %v1035 = vpack.c.b16 %v791, %v787
        %v1036 = vpack.c.b16 %v796, %v792
        %v1037 = vpack.c.b16 %v797, %v793
        %v1038 = vpack.c.b16 %v798, %v794
        %v1039 = vpack.c.b16 %v799, %v795
        %v1040 = vpack.c.b16 %v804, %v800
        %v1041 = vpack.c.b16 %v805, %v801
        %v1042 = vpack.c.b16 %v806, %v802
        %v1043 = vpack.c.b16 %v807, %v803
        %v1044 = vpack.c.b16 %v812, %v808
        %v1045 = vpack.c.b16 %v813, %v809
        %v1046 = vpack.c.b16 %v814, %v810
        %v1047 = vpack.c.b16 %v815, %v811
        %v1048 = vpack.c.b16 %v820, %v816
        %v1049 = vpack.c.b16 %v821, %v817
        %v1050 = vpack.c.b16 %v822, %v818
        %v1051 = vpack.c.b16 %v823, %v819
        %v1052 = vpack.c.b16 %v828, %v824
        %v1053 = vpack.c.b16 %v829, %v825
        %v1054 = vpack.c.b16 %v830, %v826
        %v1055 = vpack.c.b16 %v831, %v827
        %v1056 = vpack.c.b16 %v836, %v832
        %v1057 = vpack.c.b16 %v837, %v833
        %v1058 = vpack.c.b16 %v838, %v834
        %v1059 = vpack.c.b16 %v839, %v835
        %v1060 = vpack.c.b16 %v844, %v840
        %v1061 = vpack.c.b16 %v845, %v841
        %v1062 = vpack.c.b16 %v846, %v842
        %v1063 = vpack.c.b16 %v847, %v843
        %v1064 = vpack.c.b16 %v852, %v848
        %v1065 = vpack.c.b16 %v853, %v849
        %v1066 = vpack.c.b16 %v854, %v850
        %v1067 = vpack.c.b16 %v855, %v851
        %v1068 = vpack.c.b16 %v860, %v856
        %v1069 = vpack.c.b16 %v861, %v857
        %v1070 = vpack.c.b16 %v862, %v858
        %v1071 = vpack.c.b16 %v863, %v859
        %v1072 = vpack.c.b16 %v868, %v864
        %v1073 = vpack.c.b16 %v869, %v865
        %v1074 = vpack.c.b16 %v870, %v866
        %v1075 = vpack.c.b16 %v871, %v867
        %v1076 = vpack.c.b16 %v876, %v872
        %v1077 = vpack.c.b16 %v877, %v873
        %v1078 = vpack.c.b16 %v878, %v874
        %v1079 = vpack.c.b16 %v879, %v875
        %v1080 = vpack.c.b16 %v884, %v880
        %v1081 = vpack.c.b16 %v885, %v881
        %v1082 = vpack.c.b16 %v886, %v882
        %v1083 = vpack.c.b16 %v887, %v883
        %v1084 = vpack.c.b16 %v892, %v888
        %v1085 = vpack.c.b16 %v893, %v889
        %v1086 = vpack.c.b16 %v894, %v890
        %v1087 = vpack.c.b16 %v895, %v891
        %v1088 = vpack.c.b16 %v900, %v896
        %v1089 = vpack.c.b16 %v901, %v897
        %v1090 = vpack.c.b16 %v902, %v898
        %v1091 = vpack.c.b16 %v903, %v899
        %v1092 = vpack.c.b16 %v908, %v904
        %v1093 = vpack.c.b16 %v909, %v905
        %v1094 = vpack.c.b16 %v910, %v906
        %v1095 = vpack.c.b16 %v911, %v907
        %v1096 = vpack.c.b16 %v916, %v912
        %v1097 = vpack.c.b16 %v917, %v913
        %v1098 = vpack.c.b16 %v918, %v914
        %v1099 = vpack.c.b16 %v919, %v915
        %v1100 = vpack.c.b16 %v924, %v920
        %v1101 = vpack.c.b16 %v925, %v921
        %v1102 = vpack.c.b16 %v926, %v922
        %v1103 = vpack.c.b16 %v927, %v923
        %v1104 = vpack.c.b16 %v932, %v928
        %v1105 = vpack.c.b16 %v933, %v929
        %v1106 = vpack.c.b16 %v934, %v930
        %v1107 = vpack.c.b16 %v935, %v931
        %v1108 = vpack.c.b16 %v940, %v936
        %v1109 = vpack.c.b16 %v941, %v937
        %v1110 = vpack.c.b16 %v942, %v938
        %v1111 = vpack.c.b16 %v943, %v939
        %v1112 = vpack.c.b16 %v948, %v944
        %v1113 = vpack.c.b16 %v949, %v945
        %v1114 = vpack.c.b16 %v950, %v946
        %v1115 = vpack.c.b16 %v951, %v947
        %v1116 = vpack.c.b16 %v956, %v952
        %v1117 = vpack.c.b16 %v957, %v953
        %v1118 = vpack.c.b16 %v958, %v954
        %v1119 = vpack.c.b16 %v959, %v955
        %v1120 = vpack.c.b16 %v964, %v960
        %v1121 = vpack.c.b16 %v965, %v961
        %v1122 = vpack.c.b16 %v966, %v962
        %v1123 = vpack.c.b16 %v967, %v963
        %v1124 = vpack.c.b16 %v972, %v968
        %v1125 = vpack.c.b16 %v973, %v969
        %v1126 = vpack.c.b16 %v974, %v970
        %v1127 = vpack.c.b16 %v975, %v971
        %v1128 = vpack.c.b16 %v980, %v976
        %v1129 = vpack.c.b16 %v981, %v977
        %v1130 = vpack.c.b16 %v982, %v978
        %v1131 = vpack.c.b16 %v983, %v979
        %v1132 = vpack.c.b16 %v988, %v984
        %v1133 = vpack.c.b16 %v989, %v985
        %v1134 = vpack.c.b16 %v990, %v986
        %v1135 = vpack.c.b16 %v991, %v987
        %v1136 = vpack.c.b16 %v996, %v992
        %v1137 = vpack.c.b16 %v997, %v993
        %v1138 = vpack.c.b16 %v998, %v994
        %v1139 = vpack.c.b16 %v999, %v995
        %v1140 = vpack.c.b16 %v1004, %v1000
        %v1141 = vpack.c.b16 %v1005, %v1001
        %v1142 = vpack.c.b16 %v1006, %v1002
        %v1143 = vpack.c.b16 %v1007, %v1003
        %v1144 = vpack.c.b16 %v1012, %v1008
        %v1145 = vpack.c.b16 %v1013, %v1009
        %v1146 = vpack.c.b16 %v1014, %v1010
        %v1147 = vpack.c.b16 %v1015, %v1011
        %v1148 = vpack.c.b16 %v1020, %v1016
        %v1149 = vpack.c.b16 %v1021, %v1017
        %v1150 = vpack.c.b16 %v1022, %v1018
        %v1151 = vpack.c.b16 %v1023, %v1019
        %1280 = vmatprep.subr.bf16.mxu0 %v1053
        %1281 = vmatpush1.bf16.msra.mxu0 %v1052
        %1282 = vmatprep.subr.bf16.mxu0 %v1049
        %1283 = vmatpush1.bf16.msra.mxu0 %v1048
        %1284 = vmatprep.subr.bf16.mxu0 %v1045
        %1285 = vmatpush1.bf16.msra.mxu0 %v1044
        %1286 = vmatprep.subr.bf16.mxu0 %v1041
        %1287 = vmatpush1.bf16.msra.mxu0 %v1040
        %1288 = vmatprep.subr.bf16.mxu0 %v1037
        %1289 = vmatpush1.bf16.msra.mxu0 %v1036
        %1290 = vmatprep.subr.bf16.mxu0 %v1033
        %1291 = vmatpush1.bf16.msra.mxu0 %v1032
        %1292 = vmatprep.subr.bf16.mxu0 %v1029
        %1293 = vmatpush1.bf16.msra.mxu0 %v1028
        %1294 = vmatprep.subr.bf16.mxu0 %v1025
        %1295 = vmatpush1.bf16.msra.mxu0 %v1024
        %1296 = vmatprep.subr.bf16.mxu0 %v1085
        %1297 = vmatpush2.bf16.msra.mxu0 %v1084
        %1298 = vmatprep.subr.bf16.mxu0 %v1081
        %1299 = vmatpush2.bf16.msra.mxu0 %v1080
        %1300 = vmatprep.subr.bf16.mxu0 %v1077
        %1301 = vmatpush2.bf16.msra.mxu0 %v1076
        %1302 = vmatprep.subr.bf16.mxu0 %v1073
        %1303 = vmatpush2.bf16.msra.mxu0 %v1072
        %1304 = vmatprep.subr.bf16.mxu0 %v1069
        %1305 = vmatpush2.bf16.msra.mxu0 %v1068
        %1306 = vmatprep.subr.bf16.mxu0 %v1065
        %1307 = vmatpush2.bf16.msra.mxu0 %v1064
        %1308 = vmatprep.subr.bf16.mxu0 %v1061
        %1309 = vmatpush2.bf16.msra.mxu0 %v1060
        %1310 = vmatprep.subr.bf16.mxu0 %v1057
        %1311 = vmatpush2.bf16.msra.mxu0 %v1056
        %1312 = vmatprep.mubr.bf16.mxu0 %v376
        %1313 = vmatmul.mubr.bf16.gmra.mxu0 %v375
        %v1314 = vpop.f32.mrf.mxu0
        %v1315 = vadd.f32 0.0, %v1314
        %v1316 = vpop.f32.mrf.mxu0
        %v1317 = vadd.f32 0.0, %v1316
        %v1318 = vpop.f32.mrf.mxu0
        %v1319 = vadd.f32 0.0, %v1318
        %v1320 = vpop.f32.mrf.mxu0
        %v1321 = vadd.f32 0.0, %v1320
        %1322 = vdwg.mxu0
        %1323 = vmatprep.subr.bf16.mxu0 %v1117
        %1324 = vmatpush1.bf16.msra.mxu0 %v1116
        %1325 = vmatprep.subr.bf16.mxu0 %v1113
        %1326 = vmatpush1.bf16.msra.mxu0 %v1112
        %1327 = vmatprep.subr.bf16.mxu0 %v1109
        %1328 = vmatpush1.bf16.msra.mxu0 %v1108
        %1329 = vmatprep.subr.bf16.mxu0 %v1105
        %1330 = vmatpush1.bf16.msra.mxu0 %v1104
        %1331 = vmatprep.subr.bf16.mxu0 %v1101
        %1332 = vmatpush1.bf16.msra.mxu0 %v1100
        %1333 = vmatprep.subr.bf16.mxu0 %v1097
        %1334 = vmatpush1.bf16.msra.mxu0 %v1096
        %1335 = vmatprep.subr.bf16.mxu0 %v1093
        %1336 = vmatpush1.bf16.msra.mxu0 %v1092
        %1337 = vmatprep.subr.bf16.mxu0 %v1089
        %1338 = vmatpush1.bf16.msra.mxu0 %v1088
        %1339 = vmatprep.subr.bf16.mxu0 %v1149
        %1340 = vmatpush2.bf16.msra.mxu0 %v1148
        %1341 = vmatprep.subr.bf16.mxu0 %v1145
        %1342 = vmatpush2.bf16.msra.mxu0 %v1144
        %1343 = vmatprep.subr.bf16.mxu0 %v1141
        %1344 = vmatpush2.bf16.msra.mxu0 %v1140
        %1345 = vmatprep.subr.bf16.mxu0 %v1137
        %1346 = vmatpush2.bf16.msra.mxu0 %v1136
        %1347 = vmatprep.subr.bf16.mxu0 %v1133
        %1348 = vmatpush2.bf16.msra.mxu0 %v1132
        %1349 = vmatprep.subr.bf16.mxu0 %v1129
        %1350 = vmatpush2.bf16.msra.mxu0 %v1128
        %1351 = vmatprep.subr.bf16.mxu0 %v1125
        %1352 = vmatpush2.bf16.msra.mxu0 %v1124
        %1353 = vmatprep.subr.bf16.mxu0 %v1121
        %1354 = vmatpush2.bf16.msra.mxu0 %v1120
        %1355 = vmatprep.mubr.bf16.mxu0 %v378
        %1356 = vmatmul.mubr.bf16.gmra.mxu0 %v377
        %v1357 = vpop.f32.mrf.mxu0
        %v1358 = vadd.f32 %v1315, %v1357
        %v1359 = vpop.f32.mrf.mxu0
        %v1360 = vadd.f32 %v1317, %v1359
        %v1361 = vpop.f32.mrf.mxu0
        %v1362 = vadd.f32 %v1319, %v1361
        %v1363 = vpop.f32.mrf.mxu0
        %v1364 = vadd.f32 %v1321, %v1363
        %1365 = vdwg.mxu0
        %1366 = vmatprep.subr.bf16.mxu0 %v1055
        %1367 = vmatpush1.bf16.msra.mxu0 %v1054
        %1368 = vmatprep.subr.bf16.mxu0 %v1051
        %1369 = vmatpush1.bf16.msra.mxu0 %v1050
        %1370 = vmatprep.subr.bf16.mxu0 %v1047
        %1371 = vmatpush1.bf16.msra.mxu0 %v1046
        %1372 = vmatprep.subr.bf16.mxu0 %v1043
        %1373 = vmatpush1.bf16.msra.mxu0 %v1042
        %1374 = vmatprep.subr.bf16.mxu0 %v1039
        %1375 = vmatpush1.bf16.msra.mxu0 %v1038
        %1376 = vmatprep.subr.bf16.mxu0 %v1035
        %1377 = vmatpush1.bf16.msra.mxu0 %v1034
        %1378 = vmatprep.subr.bf16.mxu0 %v1031
        %1379 = vmatpush1.bf16.msra.mxu0 %v1030
        %1380 = vmatprep.subr.bf16.mxu0 %v1027
        %1381 = vmatpush1.bf16.msra.mxu0 %v1026
        %1382 = vmatprep.subr.bf16.mxu0 %v1087
        %1383 = vmatpush2.bf16.msra.mxu0 %v1086
        %1384 = vmatprep.subr.bf16.mxu0 %v1083
        %1385 = vmatpush2.bf16.msra.mxu0 %v1082
        %1386 = vmatprep.subr.bf16.mxu0 %v1079
        %1387 = vmatpush2.bf16.msra.mxu0 %v1078
        %1388 = vmatprep.subr.bf16.mxu0 %v1075
        %1389 = vmatpush2.bf16.msra.mxu0 %v1074
        %1390 = vmatprep.subr.bf16.mxu0 %v1071
        %1391 = vmatpush2.bf16.msra.mxu0 %v1070
        %1392 = vmatprep.subr.bf16.mxu0 %v1067
        %1393 = vmatpush2.bf16.msra.mxu0 %v1066
        %1394 = vmatprep.subr.bf16.mxu0 %v1063
        %1395 = vmatpush2.bf16.msra.mxu0 %v1062
        %1396 = vmatprep.subr.bf16.mxu0 %v1059
        %1397 = vmatpush2.bf16.msra.mxu0 %v1058
        %1398 = vmatprep.mubr.bf16.mxu0 %v376
        %1399 = vmatmul.mubr.bf16.gmra.mxu0 %v375
        %v1400 = vpop.f32.mrf.mxu0
        %v1401 = vadd.f32 0.0, %v1400
        %v1402 = vpop.f32.mrf.mxu0
        %v1403 = vadd.f32 0.0, %v1402
        %v1404 = vpop.f32.mrf.mxu0
        %v1405 = vadd.f32 0.0, %v1404
        %v1406 = vpop.f32.mrf.mxu0
        %v1407 = vadd.f32 0.0, %v1406
        %1408 = vdwg.mxu0
        %1409 = vmatprep.subr.bf16.mxu0 %v1119
        %1410 = vmatpush1.bf16.msra.mxu0 %v1118
        %1411 = vmatprep.subr.bf16.mxu0 %v1115
        %1412 = vmatpush1.bf16.msra.mxu0 %v1114
        %1413 = vmatprep.subr.bf16.mxu0 %v1111
        %1414 = vmatpush1.bf16.msra.mxu0 %v1110
        %1415 = vmatprep.subr.bf16.mxu0 %v1107
        %1416 = vmatpush1.bf16.msra.mxu0 %v1106
        %1417 = vmatprep.subr.bf16.mxu0 %v1103
        %1418 = vmatpush1.bf16.msra.mxu0 %v1102
        %1419 = vmatprep.subr.bf16.mxu0 %v1099
        %1420 = vmatpush1.bf16.msra.mxu0 %v1098
        %1421 = vmatprep.subr.bf16.mxu0 %v1095
        %1422 = vmatpush1.bf16.msra.mxu0 %v1094
        %1423 = vmatprep.subr.bf16.mxu0 %v1091
        %1424 = vmatpush1.bf16.msra.mxu0 %v1090
        %1425 = vmatprep.subr.bf16.mxu0 %v1151
        %1426 = vmatpush2.bf16.msra.mxu0 %v1150
        %1427 = vmatprep.subr.bf16.mxu0 %v1147
        %1428 = vmatpush2.bf16.msra.mxu0 %v1146
        %1429 = vmatprep.subr.bf16.mxu0 %v1143
        %1430 = vmatpush2.bf16.msra.mxu0 %v1142
        %1431 = vmatprep.subr.bf16.mxu0 %v1139
        %1432 = vmatpush2.bf16.msra.mxu0 %v1138
        %1433 = vmatprep.subr.bf16.mxu0 %v1135
        %1434 = vmatpush2.bf16.msra.mxu0 %v1134
        %1435 = vmatprep.subr.bf16.mxu0 %v1131
        %1436 = vmatpush2.bf16.msra.mxu0 %v1130
        %1437 = vmatprep.subr.bf16.mxu0 %v1127
        %1438 = vmatpush2.bf16.msra.mxu0 %v1126
        %1439 = vmatprep.subr.bf16.mxu0 %v1123
        %1440 = vmatpush2.bf16.msra.mxu0 %v1122
        %1441 = vmatprep.mubr.bf16.mxu0 %v378
        %1442 = vmatmul.mubr.bf16.gmra.mxu0 %v377
        %v1443 = vpop.f32.mrf.mxu0
        %v1444 = vadd.f32 %v1401, %v1443
        %v1445 = vpop.f32.mrf.mxu0
        %v1446 = vadd.f32 %v1403, %v1445
        %v1447 = vpop.f32.mrf.mxu0
        %v1448 = vadd.f32 %v1405, %v1447
        %v1449 = vpop.f32.mrf.mxu0
        %v1450 = vadd.f32 %v1407, %v1449
        %1451 = vdwg.mxu0
        %v1580 = vunpack.c.l.b16 %v383
        %v1581 = vunpack.c.h.b16 %v383
        %v1582 = vunpack.c.l.b16 %v384
        %v1583 = vunpack.c.h.b16 %v384
        %v1584 = vunpack.c.l.b16 %v385
        %v1585 = vunpack.c.h.b16 %v385
        %v1586 = vunpack.c.l.b16 %v386
        %v1587 = vunpack.c.h.b16 %v386
        %v1588 = vunpack.c.l.b16 %v387
        %v1589 = vunpack.c.h.b16 %v387
        %v1590 = vunpack.c.l.b16 %v388
        %v1591 = vunpack.c.h.b16 %v388
        %v1592 = vunpack.c.l.b16 %v389
        %v1593 = vunpack.c.h.b16 %v389
        %v1594 = vunpack.c.l.b16 %v390
        %v1595 = vunpack.c.h.b16 %v390
        %v1596 = vunpack.c.l.b16 %v391
        %v1597 = vunpack.c.h.b16 %v391
        %v1598 = vunpack.c.l.b16 %v392
        %v1599 = vunpack.c.h.b16 %v392
        %v1600 = vunpack.c.l.b16 %v393
        %v1601 = vunpack.c.h.b16 %v393
        %v1602 = vunpack.c.l.b16 %v394
        %v1603 = vunpack.c.h.b16 %v394
        %v1604 = vunpack.c.l.b16 %v395
        %v1605 = vunpack.c.h.b16 %v395
        %v1606 = vunpack.c.l.b16 %v396
        %v1607 = vunpack.c.h.b16 %v396
        %v1608 = vunpack.c.l.b16 %v397
        %v1609 = vunpack.c.h.b16 %v397
        %v1610 = vunpack.c.l.b16 %v398
        %v1611 = vunpack.c.h.b16 %v398
        %v1612 = vunpack.c.l.b16 %v399
        %v1613 = vunpack.c.h.b16 %v399
        %v1614 = vunpack.c.l.b16 %v400
        %v1615 = vunpack.c.h.b16 %v400
        %v1616 = vunpack.c.l.b16 %v401
        %v1617 = vunpack.c.h.b16 %v401
        %v1618 = vunpack.c.l.b16 %v402
        %v1619 = vunpack.c.h.b16 %v402
        %v1620 = vunpack.c.l.b16 %v403
        %v1621 = vunpack.c.h.b16 %v403
        %v1622 = vunpack.c.l.b16 %v404
        %v1623 = vunpack.c.h.b16 %v404
        %v1624 = vunpack.c.l.b16 %v405
        %v1625 = vunpack.c.h.b16 %v405
        %v1626 = vunpack.c.l.b16 %v406
        %v1627 = vunpack.c.h.b16 %v406
        %v1628 = vunpack.c.l.b16 %v407
        %v1629 = vunpack.c.h.b16 %v407
        %v1630 = vunpack.c.l.b16 %v408
        %v1631 = vunpack.c.h.b16 %v408
        %v1632 = vunpack.c.l.b16 %v409
        %v1633 = vunpack.c.h.b16 %v409
        %v1634 = vunpack.c.l.b16 %v410
        %v1635 = vunpack.c.h.b16 %v410
        %v1636 = vunpack.c.l.b16 %v411
        %v1637 = vunpack.c.h.b16 %v411
        %v1638 = vunpack.c.l.b16 %v412
        %v1639 = vunpack.c.h.b16 %v412
        %v1640 = vunpack.c.l.b16 %v413
        %v1641 = vunpack.c.h.b16 %v413
        %v1642 = vunpack.c.l.b16 %v414
        %v1643 = vunpack.c.h.b16 %v414
        %v1644 = vunpack.c.l.b16 %v415
        %v1645 = vunpack.c.h.b16 %v415
        %v1646 = vunpack.c.l.b16 %v416
        %v1647 = vunpack.c.h.b16 %v416
        %v1648 = vunpack.c.l.b16 %v417
        %v1649 = vunpack.c.h.b16 %v417
        %v1650 = vunpack.c.l.b16 %v418
        %v1651 = vunpack.c.h.b16 %v418
        %v1652 = vunpack.c.l.b16 %v419
        %v1653 = vunpack.c.h.b16 %v419
        %v1654 = vunpack.c.l.b16 %v420
        %v1655 = vunpack.c.h.b16 %v420
        %v1656 = vunpack.c.l.b16 %v421
        %v1657 = vunpack.c.h.b16 %v421
        %v1658 = vunpack.c.l.b16 %v422
        %v1659 = vunpack.c.h.b16 %v422
        %v1660 = vunpack.c.l.b16 %v423
        %v1661 = vunpack.c.h.b16 %v423
        %v1662 = vunpack.c.l.b16 %v424
        %v1663 = vunpack.c.h.b16 %v424
        %v1664 = vunpack.c.l.b16 %v425
        %v1665 = vunpack.c.h.b16 %v425
        %v1666 = vunpack.c.l.b16 %v426
        %v1667 = vunpack.c.h.b16 %v426
        %v1668 = vunpack.c.l.b16 %v427
        %v1669 = vunpack.c.h.b16 %v427
        %v1670 = vunpack.c.l.b16 %v428
        %v1671 = vunpack.c.h.b16 %v428
        %v1672 = vunpack.c.l.b16 %v429
        %v1673 = vunpack.c.h.b16 %v429
        %v1674 = vunpack.c.l.b16 %v430
        %v1675 = vunpack.c.h.b16 %v430
        %v1676 = vunpack.c.l.b16 %v431
        %v1677 = vunpack.c.h.b16 %v431
        %v1678 = vunpack.c.l.b16 %v432
        %v1679 = vunpack.c.h.b16 %v432
        %v1680 = vunpack.c.l.b16 %v433
        %v1681 = vunpack.c.h.b16 %v433
        %v1682 = vunpack.c.l.b16 %v434
        %v1683 = vunpack.c.h.b16 %v434
        %v1684 = vunpack.c.l.b16 %v435
        %v1685 = vunpack.c.h.b16 %v435
        %v1686 = vunpack.c.l.b16 %v436
        %v1687 = vunpack.c.h.b16 %v436
        %v1688 = vunpack.c.l.b16 %v437
        %v1689 = vunpack.c.h.b16 %v437
        %v1690 = vunpack.c.l.b16 %v438
        %v1691 = vunpack.c.h.b16 %v438
        %v1692 = vunpack.c.l.b16 %v439
        %v1693 = vunpack.c.h.b16 %v439
        %v1694 = vunpack.c.l.b16 %v440
        %v1695 = vunpack.c.h.b16 %v440
        %v1696 = vunpack.c.l.b16 %v441
        %v1697 = vunpack.c.h.b16 %v441
        %v1698 = vunpack.c.l.b16 %v442
        %v1699 = vunpack.c.h.b16 %v442
        %v1700 = vunpack.c.l.b16 %v443
        %v1701 = vunpack.c.h.b16 %v443
        %v1702 = vunpack.c.l.b16 %v444
        %v1703 = vunpack.c.h.b16 %v444
        %v1704 = vunpack.c.l.b16 %v445
        %v1705 = vunpack.c.h.b16 %v445
        %v1706 = vunpack.c.l.b16 %v446
        %v1707 = vunpack.c.h.b16 %v446
        %v1708 = vunpack.c.l.b16 %v447
        %v1709 = vunpack.c.h.b16 %v447
        %v1710 = vunpack.c.l.b16 %v448
        %v1711 = vunpack.c.h.b16 %v448
        %v1712 = vunpack.c.l.b16 %v449
        %v1713 = vunpack.c.h.b16 %v449
        %v1714 = vunpack.c.l.b16 %v450
        %v1715 = vunpack.c.h.b16 %v450
        %v1716 = vunpack.c.l.b16 %v451
        %v1717 = vunpack.c.h.b16 %v451
        %v1718 = vunpack.c.l.b16 %v452
        %v1719 = vunpack.c.h.b16 %v452
        %v1720 = vunpack.c.l.b16 %v453
        %v1721 = vunpack.c.h.b16 %v453
        %v1722 = vunpack.c.l.b16 %v454
        %v1723 = vunpack.c.h.b16 %v454
        %v1724 = vunpack.c.l.b16 %v455
        %v1725 = vunpack.c.h.b16 %v455
        %v1726 = vunpack.c.l.b16 %v456
        %v1727 = vunpack.c.h.b16 %v456
        %v1728 = vunpack.c.l.b16 %v457
        %v1729 = vunpack.c.h.b16 %v457
        %v1730 = vunpack.c.l.b16 %v458
        %v1731 = vunpack.c.h.b16 %v458
        %v1732 = vunpack.c.l.b16 %v459
        %v1733 = vunpack.c.h.b16 %v459
        %v1734 = vunpack.c.l.b16 %v460
        %v1735 = vunpack.c.h.b16 %v460
        %v1736 = vunpack.c.l.b16 %v461
        %v1737 = vunpack.c.h.b16 %v461
        %v1738 = vunpack.c.l.b16 %v462
        %v1739 = vunpack.c.h.b16 %v462
        %v1740 = vunpack.c.l.b16 %v463
        %v1741 = vunpack.c.h.b16 %v463
        %v1742 = vunpack.c.l.b16 %v464
        %v1743 = vunpack.c.h.b16 %v464
        %v1744 = vunpack.c.l.b16 %v465
        %v1745 = vunpack.c.h.b16 %v465
        %v1746 = vunpack.c.l.b16 %v466
        %v1747 = vunpack.c.h.b16 %v466
        %v1748 = vunpack.c.l.b16 %v467
        %v1749 = vunpack.c.h.b16 %v467
        %v1750 = vunpack.c.l.b16 %v468
        %v1751 = vunpack.c.h.b16 %v468
        %v1752 = vunpack.c.l.b16 %v469
        %v1753 = vunpack.c.h.b16 %v469
        %v1754 = vunpack.c.l.b16 %v470
        %v1755 = vunpack.c.h.b16 %v470
        %v1756 = vunpack.c.l.b16 %v471
        %v1757 = vunpack.c.h.b16 %v471
        %v1758 = vunpack.c.l.b16 %v472
        %v1759 = vunpack.c.h.b16 %v472
        %v1760 = vunpack.c.l.b16 %v473
        %v1761 = vunpack.c.h.b16 %v473
        %v1762 = vunpack.c.l.b16 %v474
        %v1763 = vunpack.c.h.b16 %v474
        %v1764 = vunpack.c.l.b16 %v475
        %v1765 = vunpack.c.h.b16 %v475
        %v1766 = vunpack.c.l.b16 %v476
        %v1767 = vunpack.c.h.b16 %v476
        %v1768 = vunpack.c.l.b16 %v477
        %v1769 = vunpack.c.h.b16 %v477
        %v1770 = vunpack.c.l.b16 %v478
        %v1771 = vunpack.c.h.b16 %v478
        %v1772 = vunpack.c.l.b16 %v479
        %v1773 = vunpack.c.h.b16 %v479
        %v1774 = vunpack.c.l.b16 %v480
        %v1775 = vunpack.c.h.b16 %v480
        %v1776 = vunpack.c.l.b16 %v481
        %v1777 = vunpack.c.h.b16 %v481
        %v1778 = vunpack.c.l.b16 %v482
        %v1779 = vunpack.c.h.b16 %v482
        %v1780 = vunpack.c.l.b16 %v483
        %v1781 = vunpack.c.h.b16 %v483
        %v1782 = vunpack.c.l.b16 %v484
        %v1783 = vunpack.c.h.b16 %v484
        %v1784 = vunpack.c.l.b16 %v485
        %v1785 = vunpack.c.h.b16 %v485
        %v1786 = vunpack.c.l.b16 %v486
        %v1787 = vunpack.c.h.b16 %v486
        %v1788 = vunpack.c.l.b16 %v487
        %v1789 = vunpack.c.h.b16 %v487
        %v1790 = vunpack.c.l.b16 %v488
        %v1791 = vunpack.c.h.b16 %v488
        %v1792 = vunpack.c.l.b16 %v489
        %v1793 = vunpack.c.h.b16 %v489
        %v1794 = vunpack.c.l.b16 %v490
        %v1795 = vunpack.c.h.b16 %v490
        %v1796 = vunpack.c.l.b16 %v491
        %v1797 = vunpack.c.h.b16 %v491
        %v1798 = vunpack.c.l.b16 %v492
        %v1799 = vunpack.c.h.b16 %v492
        %v1800 = vunpack.c.l.b16 %v493
        %v1801 = vunpack.c.h.b16 %v493
        %v1802 = vunpack.c.l.b16 %v494
        %v1803 = vunpack.c.h.b16 %v494
        %v1804 = vunpack.c.l.b16 %v495
        %v1805 = vunpack.c.h.b16 %v495
        %v1806 = vunpack.c.l.b16 %v496
        %v1807 = vunpack.c.h.b16 %v496
        %v1808 = vunpack.c.l.b16 %v497
        %v1809 = vunpack.c.h.b16 %v497
        %v1810 = vunpack.c.l.b16 %v498
        %v1811 = vunpack.c.h.b16 %v498
        %v1812 = vunpack.c.l.b16 %v499
        %v1813 = vunpack.c.h.b16 %v499
        %v1814 = vunpack.c.l.b16 %v500
        %v1815 = vunpack.c.h.b16 %v500
        %v1816 = vunpack.c.l.b16 %v501
        %v1817 = vunpack.c.h.b16 %v501
        %v1818 = vunpack.c.l.b16 %v502
        %v1819 = vunpack.c.h.b16 %v502
        %v1820 = vunpack.c.l.b16 %v503
        %v1821 = vunpack.c.h.b16 %v503
        %v1822 = vunpack.c.l.b16 %v504
        %v1823 = vunpack.c.h.b16 %v504
        %v1824 = vunpack.c.l.b16 %v505
        %v1825 = vunpack.c.h.b16 %v505
        %v1826 = vunpack.c.l.b16 %v506
        %v1827 = vunpack.c.h.b16 %v506
        %v1828 = vunpack.c.l.b16 %v507
        %v1829 = vunpack.c.h.b16 %v507
        %v1830 = vunpack.c.l.b16 %v508
        %v1831 = vunpack.c.h.b16 %v508
        %v1832 = vunpack.c.l.b16 %v509
        %v1833 = vunpack.c.h.b16 %v509
        %v1834 = vunpack.c.l.b16 %v510
        %v1835 = vunpack.c.h.b16 %v510
        %v1836 = vpack.c.b16 %v1584, %v1580
        %v1837 = vpack.c.b16 %v1585, %v1581
        %v1838 = vpack.c.b16 %v1586, %v1582
        %v1839 = vpack.c.b16 %v1587, %v1583
        %v1840 = vpack.c.b16 %v1592, %v1588
        %v1841 = vpack.c.b16 %v1593, %v1589
        %v1842 = vpack.c.b16 %v1594, %v1590
        %v1843 = vpack.c.b16 %v1595, %v1591
        %v1844 = vpack.c.b16 %v1600, %v1596
        %v1845 = vpack.c.b16 %v1601, %v1597
        %v1846 = vpack.c.b16 %v1602, %v1598
        %v1847 = vpack.c.b16 %v1603, %v1599
        %v1848 = vpack.c.b16 %v1608, %v1604
        %v1849 = vpack.c.b16 %v1609, %v1605
        %v1850 = vpack.c.b16 %v1610, %v1606
        %v1851 = vpack.c.b16 %v1611, %v1607
        %v1852 = vpack.c.b16 %v1616, %v1612
        %v1853 = vpack.c.b16 %v1617, %v1613
        %v1854 = vpack.c.b16 %v1618, %v1614
        %v1855 = vpack.c.b16 %v1619, %v1615
        %v1856 = vpack.c.b16 %v1624, %v1620
        %v1857 = vpack.c.b16 %v1625, %v1621
        %v1858 = vpack.c.b16 %v1626, %v1622
        %v1859 = vpack.c.b16 %v1627, %v1623
        %v1860 = vpack.c.b16 %v1632, %v1628
        %v1861 = vpack.c.b16 %v1633, %v1629
        %v1862 = vpack.c.b16 %v1634, %v1630
        %v1863 = vpack.c.b16 %v1635, %v1631
        %v1864 = vpack.c.b16 %v1640, %v1636
        %v1865 = vpack.c.b16 %v1641, %v1637
        %v1866 = vpack.c.b16 %v1642, %v1638
        %v1867 = vpack.c.b16 %v1643, %v1639
        %v1868 = vpack.c.b16 %v1648, %v1644
        %v1869 = vpack.c.b16 %v1649, %v1645
        %v1870 = vpack.c.b16 %v1650, %v1646
        %v1871 = vpack.c.b16 %v1651, %v1647
        %v1872 = vpack.c.b16 %v1656, %v1652
        %v1873 = vpack.c.b16 %v1657, %v1653
        %v1874 = vpack.c.b16 %v1658, %v1654
        %v1875 = vpack.c.b16 %v1659, %v1655
        %v1876 = vpack.c.b16 %v1664, %v1660
        %v1877 = vpack.c.b16 %v1665, %v1661
        %v1878 = vpack.c.b16 %v1666, %v1662
        %v1879 = vpack.c.b16 %v1667, %v1663
        %v1880 = vpack.c.b16 %v1672, %v1668
        %v1881 = vpack.c.b16 %v1673, %v1669
        %v1882 = vpack.c.b16 %v1674, %v1670
        %v1883 = vpack.c.b16 %v1675, %v1671
        %v1884 = vpack.c.b16 %v1680, %v1676
        %v1885 = vpack.c.b16 %v1681, %v1677
        %v1886 = vpack.c.b16 %v1682, %v1678
        %v1887 = vpack.c.b16 %v1683, %v1679
        %v1888 = vpack.c.b16 %v1688, %v1684
        %v1889 = vpack.c.b16 %v1689, %v1685
        %v1890 = vpack.c.b16 %v1690, %v1686
        %v1891 = vpack.c.b16 %v1691, %v1687
        %v1892 = vpack.c.b16 %v1696, %v1692
        %v1893 = vpack.c.b16 %v1697, %v1693
        %v1894 = vpack.c.b16 %v1698, %v1694
        %v1895 = vpack.c.b16 %v1699, %v1695
        %v1896 = vpack.c.b16 %v1704, %v1700
        %v1897 = vpack.c.b16 %v1705, %v1701
        %v1898 = vpack.c.b16 %v1706, %v1702
        %v1899 = vpack.c.b16 %v1707, %v1703
        %v1900 = vpack.c.b16 %v1712, %v1708
        %v1901 = vpack.c.b16 %v1713, %v1709
        %v1902 = vpack.c.b16 %v1714, %v1710
        %v1903 = vpack.c.b16 %v1715, %v1711
        %v1904 = vpack.c.b16 %v1720, %v1716
        %v1905 = vpack.c.b16 %v1721, %v1717
        %v1906 = vpack.c.b16 %v1722, %v1718
        %v1907 = vpack.c.b16 %v1723, %v1719
        %v1908 = vpack.c.b16 %v1728, %v1724
        %v1909 = vpack.c.b16 %v1729, %v1725
        %v1910 = vpack.c.b16 %v1730, %v1726
        %v1911 = vpack.c.b16 %v1731, %v1727
        %v1912 = vpack.c.b16 %v1736, %v1732
        %v1913 = vpack.c.b16 %v1737, %v1733
        %v1914 = vpack.c.b16 %v1738, %v1734
        %v1915 = vpack.c.b16 %v1739, %v1735
        %v1916 = vpack.c.b16 %v1744, %v1740
        %v1917 = vpack.c.b16 %v1745, %v1741
        %v1918 = vpack.c.b16 %v1746, %v1742
        %v1919 = vpack.c.b16 %v1747, %v1743
        %v1920 = vpack.c.b16 %v1752, %v1748
        %v1921 = vpack.c.b16 %v1753, %v1749
        %v1922 = vpack.c.b16 %v1754, %v1750
        %v1923 = vpack.c.b16 %v1755, %v1751
        %v1924 = vpack.c.b16 %v1760, %v1756
        %v1925 = vpack.c.b16 %v1761, %v1757
        %v1926 = vpack.c.b16 %v1762, %v1758
        %v1927 = vpack.c.b16 %v1763, %v1759
        %v1928 = vpack.c.b16 %v1768, %v1764
        %v1929 = vpack.c.b16 %v1769, %v1765
        %v1930 = vpack.c.b16 %v1770, %v1766
        %v1931 = vpack.c.b16 %v1771, %v1767
        %v1932 = vpack.c.b16 %v1776, %v1772
        %v1933 = vpack.c.b16 %v1777, %v1773
        %v1934 = vpack.c.b16 %v1778, %v1774
        %v1935 = vpack.c.b16 %v1779, %v1775
        %v1936 = vpack.c.b16 %v1784, %v1780
        %v1937 = vpack.c.b16 %v1785, %v1781
        %v1938 = vpack.c.b16 %v1786, %v1782
        %v1939 = vpack.c.b16 %v1787, %v1783
        %v1940 = vpack.c.b16 %v1792, %v1788
        %v1941 = vpack.c.b16 %v1793, %v1789
        %v1942 = vpack.c.b16 %v1794, %v1790
        %v1943 = vpack.c.b16 %v1795, %v1791
        %v1944 = vpack.c.b16 %v1800, %v1796
        %v1945 = vpack.c.b16 %v1801, %v1797
        %v1946 = vpack.c.b16 %v1802, %v1798
        %v1947 = vpack.c.b16 %v1803, %v1799
        %v1948 = vpack.c.b16 %v1808, %v1804
        %v1949 = vpack.c.b16 %v1809, %v1805
        %v1950 = vpack.c.b16 %v1810, %v1806
        %v1951 = vpack.c.b16 %v1811, %v1807
        %v1952 = vpack.c.b16 %v1816, %v1812
        %v1953 = vpack.c.b16 %v1817, %v1813
        %v1954 = vpack.c.b16 %v1818, %v1814
        %v1955 = vpack.c.b16 %v1819, %v1815
        %v1956 = vpack.c.b16 %v1824, %v1820
        %v1957 = vpack.c.b16 %v1825, %v1821
        %v1958 = vpack.c.b16 %v1826, %v1822
        %v1959 = vpack.c.b16 %v1827, %v1823
        %v1960 = vpack.c.b16 %v1832, %v1828
        %v1961 = vpack.c.b16 %v1833, %v1829
        %v1962 = vpack.c.b16 %v1834, %v1830
        %v1963 = vpack.c.b16 %v1835, %v1831
        %2092 = vmatprep.subr.bf16.mxu0 %v1865
        %2093 = vmatpush1.bf16.msra.mxu0 %v1864
        %2094 = vmatprep.subr.bf16.mxu0 %v1861
        %2095 = vmatpush1.bf16.msra.mxu0 %v1860
        %2096 = vmatprep.subr.bf16.mxu0 %v1857
        %2097 = vmatpush1.bf16.msra.mxu0 %v1856
        %2098 = vmatprep.subr.bf16.mxu0 %v1853
        %2099 = vmatpush1.bf16.msra.mxu0 %v1852
        %2100 = vmatprep.subr.bf16.mxu0 %v1849
        %2101 = vmatpush1.bf16.msra.mxu0 %v1848
        %2102 = vmatprep.subr.bf16.mxu0 %v1845
        %2103 = vmatpush1.bf16.msra.mxu0 %v1844
        %2104 = vmatprep.subr.bf16.mxu0 %v1841
        %2105 = vmatpush1.bf16.msra.mxu0 %v1840
        %2106 = vmatprep.subr.bf16.mxu0 %v1837
        %2107 = vmatpush1.bf16.msra.mxu0 %v1836
        %2108 = vmatprep.subr.bf16.mxu0 %v1897
        %2109 = vmatpush2.bf16.msra.mxu0 %v1896
        %2110 = vmatprep.subr.bf16.mxu0 %v1893
        %2111 = vmatpush2.bf16.msra.mxu0 %v1892
        %2112 = vmatprep.subr.bf16.mxu0 %v1889
        %2113 = vmatpush2.bf16.msra.mxu0 %v1888
        %2114 = vmatprep.subr.bf16.mxu0 %v1885
        %2115 = vmatpush2.bf16.msra.mxu0 %v1884
        %2116 = vmatprep.subr.bf16.mxu0 %v1881
        %2117 = vmatpush2.bf16.msra.mxu0 %v1880
        %2118 = vmatprep.subr.bf16.mxu0 %v1877
        %2119 = vmatpush2.bf16.msra.mxu0 %v1876
        %2120 = vmatprep.subr.bf16.mxu0 %v1873
        %2121 = vmatpush2.bf16.msra.mxu0 %v1872
        %2122 = vmatprep.subr.bf16.mxu0 %v1869
        %2123 = vmatpush2.bf16.msra.mxu0 %v1868
        %2124 = vmatprep.mubr.bf16.mxu0 %v372
        %2125 = vmatmul.mubr.bf16.gmra.mxu0 %v371
        %v2126 = vpop.f32.mrf.mxu0
        %v2127 = vadd.f32 %v1358, %v2126
        %v2128 = vpop.f32.mrf.mxu0
        %v2129 = vadd.f32 %v1360, %v2128
        %v2130 = vpop.f32.mrf.mxu0
        %v2131 = vadd.f32 %v1362, %v2130
        %v2132 = vpop.f32.mrf.mxu0
        %v2133 = vadd.f32 %v1364, %v2132
        %2134 = vdwg.mxu0
        %2135 = vmatprep.subr.bf16.mxu0 %v1929
        %2136 = vmatpush1.bf16.msra.mxu0 %v1928
        %2137 = vmatprep.subr.bf16.mxu0 %v1925
        %2138 = vmatpush1.bf16.msra.mxu0 %v1924
        %2139 = vmatprep.subr.bf16.mxu0 %v1921
        %2140 = vmatpush1.bf16.msra.mxu0 %v1920
        %2141 = vmatprep.subr.bf16.mxu0 %v1917
        %2142 = vmatpush1.bf16.msra.mxu0 %v1916
        %2143 = vmatprep.subr.bf16.mxu0 %v1913
        %2144 = vmatpush1.bf16.msra.mxu0 %v1912
        %2145 = vmatprep.subr.bf16.mxu0 %v1909
        %2146 = vmatpush1.bf16.msra.mxu0 %v1908
        %2147 = vmatprep.subr.bf16.mxu0 %v1905
        %2148 = vmatpush1.bf16.msra.mxu0 %v1904
        %2149 = vmatprep.subr.bf16.mxu0 %v1901
        %2150 = vmatpush1.bf16.msra.mxu0 %v1900
        %2151 = vmatprep.subr.bf16.mxu0 %v1961
        %2152 = vmatpush2.bf16.msra.mxu0 %v1960
        %2153 = vmatprep.subr.bf16.mxu0 %v1957
        %2154 = vmatpush2.bf16.msra.mxu0 %v1956
        %2155 = vmatprep.subr.bf16.mxu0 %v1953
        %2156 = vmatpush2.bf16.msra.mxu0 %v1952
        %2157 = vmatprep.subr.bf16.mxu0 %v1949
        %2158 = vmatpush2.bf16.msra.mxu0 %v1948
        %2159 = vmatprep.subr.bf16.mxu0 %v1945
        %2160 = vmatpush2.bf16.msra.mxu0 %v1944
        %2161 = vmatprep.subr.bf16.mxu0 %v1941
        %2162 = vmatpush2.bf16.msra.mxu0 %v1940
        %2163 = vmatprep.subr.bf16.mxu0 %v1937
        %2164 = vmatpush2.bf16.msra.mxu0 %v1936
        %2165 = vmatprep.subr.bf16.mxu0 %v1933
        %2166 = vmatpush2.bf16.msra.mxu0 %v1932
        %2167 = vmatprep.mubr.bf16.mxu0 %v374
        %2168 = vmatmul.mubr.bf16.gmra.mxu0 %v373
        %v2169 = vpop.f32.mrf.mxu0
        %v2170 = vadd.f32 %v2127, %v2169
        %v2171 = vpop.f32.mrf.mxu0
        %v2172 = vadd.f32 %v2129, %v2171
        %v2173 = vpop.f32.mrf.mxu0
        %v2174 = vadd.f32 %v2131, %v2173
        %v2175 = vpop.f32.mrf.mxu0
        %v2176 = vadd.f32 %v2133, %v2175
        %2177 = vdwg.mxu0
        %2178 = vmatprep.subr.bf16.mxu0 %v1867
        %2179 = vmatpush1.bf16.msra.mxu0 %v1866
        %2180 = vmatprep.subr.bf16.mxu0 %v1863
        %2181 = vmatpush1.bf16.msra.mxu0 %v1862
        %2182 = vmatprep.subr.bf16.mxu0 %v1859
        %2183 = vmatpush1.bf16.msra.mxu0 %v1858
        %2184 = vmatprep.subr.bf16.mxu0 %v1855
        %2185 = vmatpush1.bf16.msra.mxu0 %v1854
        %2186 = vmatprep.subr.bf16.mxu0 %v1851
        %2187 = vmatpush1.bf16.msra.mxu0 %v1850
        %2188 = vmatprep.subr.bf16.mxu0 %v1847
        %2189 = vmatpush1.bf16.msra.mxu0 %v1846
        %2190 = vmatprep.subr.bf16.mxu0 %v1843
        %2191 = vmatpush1.bf16.msra.mxu0 %v1842
        %2192 = vmatprep.subr.bf16.mxu0 %v1839
        %2193 = vmatpush1.bf16.msra.mxu0 %v1838
        %2194 = vmatprep.subr.bf16.mxu0 %v1899
        %2195 = vmatpush2.bf16.msra.mxu0 %v1898
        %2196 = vmatprep.subr.bf16.mxu0 %v1895
        %2197 = vmatpush2.bf16.msra.mxu0 %v1894
        %2198 = vmatprep.subr.bf16.mxu0 %v1891
        %2199 = vmatpush2.bf16.msra.mxu0 %v1890
        %2200 = vmatprep.subr.bf16.mxu0 %v1887
        %2201 = vmatpush2.bf16.msra.mxu0 %v1886
        %2202 = vmatprep.subr.bf16.mxu0 %v1883
        %2203 = vmatpush2.bf16.msra.mxu0 %v1882
        %2204 = vmatprep.subr.bf16.mxu0 %v1879
        %2205 = vmatpush2.bf16.msra.mxu0 %v1878
        %2206 = vmatprep.subr.bf16.mxu0 %v1875
        %2207 = vmatpush2.bf16.msra.mxu0 %v1874
        %2208 = vmatprep.subr.bf16.mxu0 %v1871
        %2209 = vmatpush2.bf16.msra.mxu0 %v1870
        %2210 = vmatprep.mubr.bf16.mxu0 %v372
        %2211 = vmatmul.mubr.bf16.gmra.mxu0 %v371
        %v2212 = vpop.f32.mrf.mxu0
        %v2213 = vadd.f32 %v1444, %v2212
        %v2214 = vpop.f32.mrf.mxu0
        %v2215 = vadd.f32 %v1446, %v2214
        %v2216 = vpop.f32.mrf.mxu0
        %v2217 = vadd.f32 %v1448, %v2216
        %v2218 = vpop.f32.mrf.mxu0
        %v2219 = vadd.f32 %v1450, %v2218
        %2220 = vdwg.mxu0
        %2221 = vmatprep.subr.bf16.mxu0 %v1931
        %2222 = vmatpush1.bf16.msra.mxu0 %v1930
        %2223 = vmatprep.subr.bf16.mxu0 %v1927
        %2224 = vmatpush1.bf16.msra.mxu0 %v1926
        %2225 = vmatprep.subr.bf16.mxu0 %v1923
        %2226 = vmatpush1.bf16.msra.mxu0 %v1922
        %2227 = vmatprep.subr.bf16.mxu0 %v1919
        %2228 = vmatpush1.bf16.msra.mxu0 %v1918
        %2229 = vmatprep.subr.bf16.mxu0 %v1915
        %2230 = vmatpush1.bf16.msra.mxu0 %v1914
        %2231 = vmatprep.subr.bf16.mxu0 %v1911
        %2232 = vmatpush1.bf16.msra.mxu0 %v1910
        %2233 = vmatprep.subr.bf16.mxu0 %v1907
        %2234 = vmatpush1.bf16.msra.mxu0 %v1906
        %2235 = vmatprep.subr.bf16.mxu0 %v1903
        %2236 = vmatpush1.bf16.msra.mxu0 %v1902
        %2237 = vmatprep.subr.bf16.mxu0 %v1963
        %2238 = vmatpush2.bf16.msra.mxu0 %v1962
        %2239 = vmatprep.subr.bf16.mxu0 %v1959
        %2240 = vmatpush2.bf16.msra.mxu0 %v1958
        %2241 = vmatprep.subr.bf16.mxu0 %v1955
        %2242 = vmatpush2.bf16.msra.mxu0 %v1954
        %2243 = vmatprep.subr.bf16.mxu0 %v1951
        %2244 = vmatpush2.bf16.msra.mxu0 %v1950
        %2245 = vmatprep.subr.bf16.mxu0 %v1947
        %2246 = vmatpush2.bf16.msra.mxu0 %v1946
        %2247 = vmatprep.subr.bf16.mxu0 %v1943
        %2248 = vmatpush2.bf16.msra.mxu0 %v1942
        %2249 = vmatprep.subr.bf16.mxu0 %v1939
        %2250 = vmatpush2.bf16.msra.mxu0 %v1938
        %2251 = vmatprep.subr.bf16.mxu0 %v1935
        %2252 = vmatpush2.bf16.msra.mxu0 %v1934
        %2253 = vmatprep.mubr.bf16.mxu0 %v374
        %2254 = vmatmul.mubr.bf16.gmra.mxu0 %v373
        %v2255 = vpop.f32.mrf.mxu0
        %v2256 = vadd.f32 %v2213, %v2255
        %v2257 = vpop.f32.mrf.mxu0
        %v2258 = vadd.f32 %v2215, %v2257
        %v2259 = vpop.f32.mrf.mxu0
        %v2260 = vadd.f32 %v2217, %v2259
        %v2261 = vpop.f32.mrf.mxu0
        %v2262 = vadd.f32 %v2219, %v2261
        %2263 = vdwg.mxu0
        %s2264 = scalar_lea.vmem [#allocation5], 2048
        %v2265 = vld [vmem:[%s2264] sm:$0xff]
        %v2266 = vld [vmem:[%s2264 + $0x8] sm:$0xff]
        %v2267 = vld [vmem:[%s2264 + $0x10] sm:$0xff]
        %v2268 = vld [vmem:[%s2264 + $0x18] sm:$0xff]
        %v2269 = vld [vmem:[%s2264 + $0x20] sm:$0xff]
        %v2270 = vld [vmem:[%s2264 + $0x28] sm:$0xff]
        %v2271 = vld [vmem:[%s2264 + $0x30] sm:$0xff]
        %v2272 = vld [vmem:[%s2264 + $0x38] sm:$0xff]
        %v2273 = vld [vmem:[%s2264 + $0x40] sm:$0xff]
        %v2274 = vld [vmem:[%s2264 + $0x48] sm:$0xff]
        %v2275 = vld [vmem:[%s2264 + $0x50] sm:$0xff]
        %v2276 = vld [vmem:[%s2264 + $0x58] sm:$0xff]
        %v2277 = vld [vmem:[%s2264 + $0x60] sm:$0xff]
        %v2278 = vld [vmem:[%s2264 + $0x68] sm:$0xff]
        %v2279 = vld [vmem:[%s2264 + $0x70] sm:$0xff]
        %v2280 = vld [vmem:[%s2264 + $0x78] sm:$0xff]
        %v2281 = vld [vmem:[%s2264 + $0x80] sm:$0xff]
        %v2282 = vld [vmem:[%s2264 + $0x88] sm:$0xff]
        %v2283 = vld [vmem:[%s2264 + $0x90] sm:$0xff]
        %v2284 = vld [vmem:[%s2264 + $0x98] sm:$0xff]
        %v2285 = vld [vmem:[%s2264 + $0xa0] sm:$0xff]
        %v2286 = vld [vmem:[%s2264 + $0xa8] sm:$0xff]
        %v2287 = vld [vmem:[%s2264 + $0xb0] sm:$0xff]
        %v2288 = vld [vmem:[%s2264 + $0xb8] sm:$0xff]
        %v2289 = vld [vmem:[%s2264 + $0xc0] sm:$0xff]
        %v2290 = vld [vmem:[%s2264 + $0xc8] sm:$0xff]
        %v2291 = vld [vmem:[%s2264 + $0xd0] sm:$0xff]
        %v2292 = vld [vmem:[%s2264 + $0xd8] sm:$0xff]
        %v2293 = vld [vmem:[%s2264 + $0xe0] sm:$0xff]
        %v2294 = vld [vmem:[%s2264 + $0xe8] sm:$0xff]
        %v2295 = vld [vmem:[%s2264 + $0xf0] sm:$0xff]
        %v2296 = vld [vmem:[%s2264 + $0xf8] sm:$0xff]
        %v2297 = vld [vmem:[%s2264 + $0x100] sm:$0xff]
        %v2298 = vld [vmem:[%s2264 + $0x108] sm:$0xff]
        %v2299 = vld [vmem:[%s2264 + $0x110] sm:$0xff]
        %v2300 = vld [vmem:[%s2264 + $0x118] sm:$0xff]
        %v2301 = vld [vmem:[%s2264 + $0x120] sm:$0xff]
        %v2302 = vld [vmem:[%s2264 + $0x128] sm:$0xff]
        %v2303 = vld [vmem:[%s2264 + $0x130] sm:$0xff]
        %v2304 = vld [vmem:[%s2264 + $0x138] sm:$0xff]
        %v2305 = vld [vmem:[%s2264 + $0x140] sm:$0xff]
        %v2306 = vld [vmem:[%s2264 + $0x148] sm:$0xff]
        %v2307 = vld [vmem:[%s2264 + $0x150] sm:$0xff]
        %v2308 = vld [vmem:[%s2264 + $0x158] sm:$0xff]
        %v2309 = vld [vmem:[%s2264 + $0x160] sm:$0xff]
        %v2310 = vld [vmem:[%s2264 + $0x168] sm:$0xff]
        %v2311 = vld [vmem:[%s2264 + $0x170] sm:$0xff]
        %v2312 = vld [vmem:[%s2264 + $0x178] sm:$0xff]
        %v2313 = vld [vmem:[%s2264 + $0x180] sm:$0xff]
        %v2314 = vld [vmem:[%s2264 + $0x188] sm:$0xff]
        %v2315 = vld [vmem:[%s2264 + $0x190] sm:$0xff]
        %v2316 = vld [vmem:[%s2264 + $0x198] sm:$0xff]
        %v2317 = vld [vmem:[%s2264 + $0x1a0] sm:$0xff]
        %v2318 = vld [vmem:[%s2264 + $0x1a8] sm:$0xff]
        %v2319 = vld [vmem:[%s2264 + $0x1b0] sm:$0xff]
        %v2320 = vld [vmem:[%s2264 + $0x1b8] sm:$0xff]
        %v2321 = vld [vmem:[%s2264 + $0x1c0] sm:$0xff]
        %v2322 = vld [vmem:[%s2264 + $0x1c8] sm:$0xff]
        %v2323 = vld [vmem:[%s2264 + $0x1d0] sm:$0xff]
        %v2324 = vld [vmem:[%s2264 + $0x1d8] sm:$0xff]
        %v2325 = vld [vmem:[%s2264 + $0x1e0] sm:$0xff]
        %v2326 = vld [vmem:[%s2264 + $0x1e8] sm:$0xff]
        %v2327 = vld [vmem:[%s2264 + $0x1f0] sm:$0xff]
        %v2328 = vld [vmem:[%s2264 + $0x1f8] sm:$0xff]
        %v2329 = vld [vmem:[%s2264 + $0x200] sm:$0xff]
        %v2330 = vld [vmem:[%s2264 + $0x208] sm:$0xff]
        %v2331 = vld [vmem:[%s2264 + $0x210] sm:$0xff]
        %v2332 = vld [vmem:[%s2264 + $0x218] sm:$0xff]
        %v2333 = vld [vmem:[%s2264 + $0x220] sm:$0xff]
        %v2334 = vld [vmem:[%s2264 + $0x228] sm:$0xff]
        %v2335 = vld [vmem:[%s2264 + $0x230] sm:$0xff]
        %v2336 = vld [vmem:[%s2264 + $0x238] sm:$0xff]
        %v2337 = vld [vmem:[%s2264 + $0x240] sm:$0xff]
        %v2338 = vld [vmem:[%s2264 + $0x248] sm:$0xff]
        %v2339 = vld [vmem:[%s2264 + $0x250] sm:$0xff]
        %v2340 = vld [vmem:[%s2264 + $0x258] sm:$0xff]
        %v2341 = vld [vmem:[%s2264 + $0x260] sm:$0xff]
        %v2342 = vld [vmem:[%s2264 + $0x268] sm:$0xff]
        %v2343 = vld [vmem:[%s2264 + $0x270] sm:$0xff]
        %v2344 = vld [vmem:[%s2264 + $0x278] sm:$0xff]
        %v2345 = vld [vmem:[%s2264 + $0x280] sm:$0xff]
        %v2346 = vld [vmem:[%s2264 + $0x288] sm:$0xff]
        %v2347 = vld [vmem:[%s2264 + $0x290] sm:$0xff]
        %v2348 = vld [vmem:[%s2264 + $0x298] sm:$0xff]
        %v2349 = vld [vmem:[%s2264 + $0x2a0] sm:$0xff]
        %v2350 = vld [vmem:[%s2264 + $0x2a8] sm:$0xff]
        %v2351 = vld [vmem:[%s2264 + $0x2b0] sm:$0xff]
        %v2352 = vld [vmem:[%s2264 + $0x2b8] sm:$0xff]
        %v2353 = vld [vmem:[%s2264 + $0x2c0] sm:$0xff]
        %v2354 = vld [vmem:[%s2264 + $0x2c8] sm:$0xff]
        %v2355 = vld [vmem:[%s2264 + $0x2d0] sm:$0xff]
        %v2356 = vld [vmem:[%s2264 + $0x2d8] sm:$0xff]
        %v2357 = vld [vmem:[%s2264 + $0x2e0] sm:$0xff]
        %v2358 = vld [vmem:[%s2264 + $0x2e8] sm:$0xff]
        %v2359 = vld [vmem:[%s2264 + $0x2f0] sm:$0xff]
        %v2360 = vld [vmem:[%s2264 + $0x2f8] sm:$0xff]
        %v2361 = vld [vmem:[%s2264 + $0x300] sm:$0xff]
        %v2362 = vld [vmem:[%s2264 + $0x308] sm:$0xff]
        %v2363 = vld [vmem:[%s2264 + $0x310] sm:$0xff]
        %v2364 = vld [vmem:[%s2264 + $0x318] sm:$0xff]
        %v2365 = vld [vmem:[%s2264 + $0x320] sm:$0xff]
        %v2366 = vld [vmem:[%s2264 + $0x328] sm:$0xff]
        %v2367 = vld [vmem:[%s2264 + $0x330] sm:$0xff]
        %v2368 = vld [vmem:[%s2264 + $0x338] sm:$0xff]
        %v2369 = vld [vmem:[%s2264 + $0x340] sm:$0xff]
        %v2370 = vld [vmem:[%s2264 + $0x348] sm:$0xff]
        %v2371 = vld [vmem:[%s2264 + $0x350] sm:$0xff]
        %v2372 = vld [vmem:[%s2264 + $0x358] sm:$0xff]
        %v2373 = vld [vmem:[%s2264 + $0x360] sm:$0xff]
        %v2374 = vld [vmem:[%s2264 + $0x368] sm:$0xff]
        %v2375 = vld [vmem:[%s2264 + $0x370] sm:$0xff]
        %v2376 = vld [vmem:[%s2264 + $0x378] sm:$0xff]
        %v2377 = vld [vmem:[%s2264 + $0x380] sm:$0xff]
        %v2378 = vld [vmem:[%s2264 + $0x388] sm:$0xff]
        %v2379 = vld [vmem:[%s2264 + $0x390] sm:$0xff]
        %v2380 = vld [vmem:[%s2264 + $0x398] sm:$0xff]
        %v2381 = vld [vmem:[%s2264 + $0x3a0] sm:$0xff]
        %v2382 = vld [vmem:[%s2264 + $0x3a8] sm:$0xff]
        %v2383 = vld [vmem:[%s2264 + $0x3b0] sm:$0xff]
        %v2384 = vld [vmem:[%s2264 + $0x3b8] sm:$0xff]
        %v2385 = vld [vmem:[%s2264 + $0x3c0] sm:$0xff]
        %v2386 = vld [vmem:[%s2264 + $0x3c8] sm:$0xff]
        %v2387 = vld [vmem:[%s2264 + $0x3d0] sm:$0xff]
        %v2388 = vld [vmem:[%s2264 + $0x3d8] sm:$0xff]
        %v2389 = vld [vmem:[%s2264 + $0x3e0] sm:$0xff]
        %v2390 = vld [vmem:[%s2264 + $0x3e8] sm:$0xff]
        %v2391 = vld [vmem:[%s2264 + $0x3f0] sm:$0xff]
        %v2392 = vld [vmem:[%s2264 + $0x3f8] sm:$0xff]
        %v2521 = vunpack.c.l.b16 %v2265
        %v2522 = vunpack.c.h.b16 %v2265
        %v2523 = vunpack.c.l.b16 %v2266
        %v2524 = vunpack.c.h.b16 %v2266
        %v2525 = vunpack.c.l.b16 %v2267
        %v2526 = vunpack.c.h.b16 %v2267
        %v2527 = vunpack.c.l.b16 %v2268
        %v2528 = vunpack.c.h.b16 %v2268
        %v2529 = vunpack.c.l.b16 %v2269
        %v2530 = vunpack.c.h.b16 %v2269
        %v2531 = vunpack.c.l.b16 %v2270
        %v2532 = vunpack.c.h.b16 %v2270
        %v2533 = vunpack.c.l.b16 %v2271
        %v2534 = vunpack.c.h.b16 %v2271
        %v2535 = vunpack.c.l.b16 %v2272
        %v2536 = vunpack.c.h.b16 %v2272
        %v2537 = vunpack.c.l.b16 %v2273
        %v2538 = vunpack.c.h.b16 %v2273
        %v2539 = vunpack.c.l.b16 %v2274
        %v2540 = vunpack.c.h.b16 %v2274
        %v2541 = vunpack.c.l.b16 %v2275
        %v2542 = vunpack.c.h.b16 %v2275
        %v2543 = vunpack.c.l.b16 %v2276
        %v2544 = vunpack.c.h.b16 %v2276
        %v2545 = vunpack.c.l.b16 %v2277
        %v2546 = vunpack.c.h.b16 %v2277
        %v2547 = vunpack.c.l.b16 %v2278
        %v2548 = vunpack.c.h.b16 %v2278
        %v2549 = vunpack.c.l.b16 %v2279
        %v2550 = vunpack.c.h.b16 %v2279
        %v2551 = vunpack.c.l.b16 %v2280
        %v2552 = vunpack.c.h.b16 %v2280
        %v2553 = vunpack.c.l.b16 %v2281
        %v2554 = vunpack.c.h.b16 %v2281
        %v2555 = vunpack.c.l.b16 %v2282
        %v2556 = vunpack.c.h.b16 %v2282
        %v2557 = vunpack.c.l.b16 %v2283
        %v2558 = vunpack.c.h.b16 %v2283
        %v2559 = vunpack.c.l.b16 %v2284
        %v2560 = vunpack.c.h.b16 %v2284
        %v2561 = vunpack.c.l.b16 %v2285
        %v2562 = vunpack.c.h.b16 %v2285
        %v2563 = vunpack.c.l.b16 %v2286
        %v2564 = vunpack.c.h.b16 %v2286
        %v2565 = vunpack.c.l.b16 %v2287
        %v2566 = vunpack.c.h.b16 %v2287
        %v2567 = vunpack.c.l.b16 %v2288
        %v2568 = vunpack.c.h.b16 %v2288
        %v2569 = vunpack.c.l.b16 %v2289
        %v2570 = vunpack.c.h.b16 %v2289
        %v2571 = vunpack.c.l.b16 %v2290
        %v2572 = vunpack.c.h.b16 %v2290
        %v2573 = vunpack.c.l.b16 %v2291
        %v2574 = vunpack.c.h.b16 %v2291
        %v2575 = vunpack.c.l.b16 %v2292
        %v2576 = vunpack.c.h.b16 %v2292
        %v2577 = vunpack.c.l.b16 %v2293
        %v2578 = vunpack.c.h.b16 %v2293
        %v2579 = vunpack.c.l.b16 %v2294
        %v2580 = vunpack.c.h.b16 %v2294
        %v2581 = vunpack.c.l.b16 %v2295
        %v2582 = vunpack.c.h.b16 %v2295
        %v2583 = vunpack.c.l.b16 %v2296
        %v2584 = vunpack.c.h.b16 %v2296
        %v2585 = vunpack.c.l.b16 %v2297
        %v2586 = vunpack.c.h.b16 %v2297
        %v2587 = vunpack.c.l.b16 %v2298
        %v2588 = vunpack.c.h.b16 %v2298
        %v2589 = vunpack.c.l.b16 %v2299
        %v2590 = vunpack.c.h.b16 %v2299
        %v2591 = vunpack.c.l.b16 %v2300
        %v2592 = vunpack.c.h.b16 %v2300
        %v2593 = vunpack.c.l.b16 %v2301
        %v2594 = vunpack.c.h.b16 %v2301
        %v2595 = vunpack.c.l.b16 %v2302
        %v2596 = vunpack.c.h.b16 %v2302
        %v2597 = vunpack.c.l.b16 %v2303
        %v2598 = vunpack.c.h.b16 %v2303
        %v2599 = vunpack.c.l.b16 %v2304
        %v2600 = vunpack.c.h.b16 %v2304
        %v2601 = vunpack.c.l.b16 %v2305
        %v2602 = vunpack.c.h.b16 %v2305
        %v2603 = vunpack.c.l.b16 %v2306
        %v2604 = vunpack.c.h.b16 %v2306
        %v2605 = vunpack.c.l.b16 %v2307
        %v2606 = vunpack.c.h.b16 %v2307
        %v2607 = vunpack.c.l.b16 %v2308
        %v2608 = vunpack.c.h.b16 %v2308
        %v2609 = vunpack.c.l.b16 %v2309
        %v2610 = vunpack.c.h.b16 %v2309
        %v2611 = vunpack.c.l.b16 %v2310
        %v2612 = vunpack.c.h.b16 %v2310
        %v2613 = vunpack.c.l.b16 %v2311
        %v2614 = vunpack.c.h.b16 %v2311
        %v2615 = vunpack.c.l.b16 %v2312
        %v2616 = vunpack.c.h.b16 %v2312
        %v2617 = vunpack.c.l.b16 %v2313
        %v2618 = vunpack.c.h.b16 %v2313
        %v2619 = vunpack.c.l.b16 %v2314
        %v2620 = vunpack.c.h.b16 %v2314
        %v2621 = vunpack.c.l.b16 %v2315
        %v2622 = vunpack.c.h.b16 %v2315
        %v2623 = vunpack.c.l.b16 %v2316
        %v2624 = vunpack.c.h.b16 %v2316
        %v2625 = vunpack.c.l.b16 %v2317
        %v2626 = vunpack.c.h.b16 %v2317
        %v2627 = vunpack.c.l.b16 %v2318
        %v2628 = vunpack.c.h.b16 %v2318
        %v2629 = vunpack.c.l.b16 %v2319
        %v2630 = vunpack.c.h.b16 %v2319
        %v2631 = vunpack.c.l.b16 %v2320
        %v2632 = vunpack.c.h.b16 %v2320
        %v2633 = vunpack.c.l.b16 %v2321
        %v2634 = vunpack.c.h.b16 %v2321
        %v2635 = vunpack.c.l.b16 %v2322
        %v2636 = vunpack.c.h.b16 %v2322
        %v2637 = vunpack.c.l.b16 %v2323
        %v2638 = vunpack.c.h.b16 %v2323
        %v2639 = vunpack.c.l.b16 %v2324
        %v2640 = vunpack.c.h.b16 %v2324
        %v2641 = vunpack.c.l.b16 %v2325
        %v2642 = vunpack.c.h.b16 %v2325
        %v2643 = vunpack.c.l.b16 %v2326
        %v2644 = vunpack.c.h.b16 %v2326
        %v2645 = vunpack.c.l.b16 %v2327
        %v2646 = vunpack.c.h.b16 %v2327
        %v2647 = vunpack.c.l.b16 %v2328
        %v2648 = vunpack.c.h.b16 %v2328
        %v2649 = vunpack.c.l.b16 %v2329
        %v2650 = vunpack.c.h.b16 %v2329
        %v2651 = vunpack.c.l.b16 %v2330
        %v2652 = vunpack.c.h.b16 %v2330
        %v2653 = vunpack.c.l.b16 %v2331
        %v2654 = vunpack.c.h.b16 %v2331
        %v2655 = vunpack.c.l.b16 %v2332
        %v2656 = vunpack.c.h.b16 %v2332
        %v2657 = vunpack.c.l.b16 %v2333
        %v2658 = vunpack.c.h.b16 %v2333
        %v2659 = vunpack.c.l.b16 %v2334
        %v2660 = vunpack.c.h.b16 %v2334
        %v2661 = vunpack.c.l.b16 %v2335
        %v2662 = vunpack.c.h.b16 %v2335
        %v2663 = vunpack.c.l.b16 %v2336
        %v2664 = vunpack.c.h.b16 %v2336
        %v2665 = vunpack.c.l.b16 %v2337
        %v2666 = vunpack.c.h.b16 %v2337
        %v2667 = vunpack.c.l.b16 %v2338
        %v2668 = vunpack.c.h.b16 %v2338
        %v2669 = vunpack.c.l.b16 %v2339
        %v2670 = vunpack.c.h.b16 %v2339
        %v2671 = vunpack.c.l.b16 %v2340
        %v2672 = vunpack.c.h.b16 %v2340
        %v2673 = vunpack.c.l.b16 %v2341
        %v2674 = vunpack.c.h.b16 %v2341
        %v2675 = vunpack.c.l.b16 %v2342
        %v2676 = vunpack.c.h.b16 %v2342
        %v2677 = vunpack.c.l.b16 %v2343
        %v2678 = vunpack.c.h.b16 %v2343
        %v2679 = vunpack.c.l.b16 %v2344
        %v2680 = vunpack.c.h.b16 %v2344
        %v2681 = vunpack.c.l.b16 %v2345
        %v2682 = vunpack.c.h.b16 %v2345
        %v2683 = vunpack.c.l.b16 %v2346
        %v2684 = vunpack.c.h.b16 %v2346
        %v2685 = vunpack.c.l.b16 %v2347
        %v2686 = vunpack.c.h.b16 %v2347
        %v2687 = vunpack.c.l.b16 %v2348
        %v2688 = vunpack.c.h.b16 %v2348
        %v2689 = vunpack.c.l.b16 %v2349
        %v2690 = vunpack.c.h.b16 %v2349
        %v2691 = vunpack.c.l.b16 %v2350
        %v2692 = vunpack.c.h.b16 %v2350
        %v2693 = vunpack.c.l.b16 %v2351
        %v2694 = vunpack.c.h.b16 %v2351
        %v2695 = vunpack.c.l.b16 %v2352
        %v2696 = vunpack.c.h.b16 %v2352
        %v2697 = vunpack.c.l.b16 %v2353
        %v2698 = vunpack.c.h.b16 %v2353
        %v2699 = vunpack.c.l.b16 %v2354
        %v2700 = vunpack.c.h.b16 %v2354
        %v2701 = vunpack.c.l.b16 %v2355
        %v2702 = vunpack.c.h.b16 %v2355
        %v2703 = vunpack.c.l.b16 %v2356
        %v2704 = vunpack.c.h.b16 %v2356
        %v2705 = vunpack.c.l.b16 %v2357
        %v2706 = vunpack.c.h.b16 %v2357
        %v2707 = vunpack.c.l.b16 %v2358
        %v2708 = vunpack.c.h.b16 %v2358
        %v2709 = vunpack.c.l.b16 %v2359
        %v2710 = vunpack.c.h.b16 %v2359
        %v2711 = vunpack.c.l.b16 %v2360
        %v2712 = vunpack.c.h.b16 %v2360
        %v2713 = vunpack.c.l.b16 %v2361
        %v2714 = vunpack.c.h.b16 %v2361
        %v2715 = vunpack.c.l.b16 %v2362
        %v2716 = vunpack.c.h.b16 %v2362
        %v2717 = vunpack.c.l.b16 %v2363
        %v2718 = vunpack.c.h.b16 %v2363
        %v2719 = vunpack.c.l.b16 %v2364
        %v2720 = vunpack.c.h.b16 %v2364
        %v2721 = vunpack.c.l.b16 %v2365
        %v2722 = vunpack.c.h.b16 %v2365
        %v2723 = vunpack.c.l.b16 %v2366
        %v2724 = vunpack.c.h.b16 %v2366
        %v2725 = vunpack.c.l.b16 %v2367
        %v2726 = vunpack.c.h.b16 %v2367
        %v2727 = vunpack.c.l.b16 %v2368
        %v2728 = vunpack.c.h.b16 %v2368
        %v2729 = vunpack.c.l.b16 %v2369
        %v2730 = vunpack.c.h.b16 %v2369
        %v2731 = vunpack.c.l.b16 %v2370
        %v2732 = vunpack.c.h.b16 %v2370
        %v2733 = vunpack.c.l.b16 %v2371
        %v2734 = vunpack.c.h.b16 %v2371
        %v2735 = vunpack.c.l.b16 %v2372
        %v2736 = vunpack.c.h.b16 %v2372
        %v2737 = vunpack.c.l.b16 %v2373
        %v2738 = vunpack.c.h.b16 %v2373
        %v2739 = vunpack.c.l.b16 %v2374
        %v2740 = vunpack.c.h.b16 %v2374
        %v2741 = vunpack.c.l.b16 %v2375
        %v2742 = vunpack.c.h.b16 %v2375
        %v2743 = vunpack.c.l.b16 %v2376
        %v2744 = vunpack.c.h.b16 %v2376
        %v2745 = vunpack.c.l.b16 %v2377
        %v2746 = vunpack.c.h.b16 %v2377
        %v2747 = vunpack.c.l.b16 %v2378
        %v2748 = vunpack.c.h.b16 %v2378
        %v2749 = vunpack.c.l.b16 %v2379
        %v2750 = vunpack.c.h.b16 %v2379
        %v2751 = vunpack.c.l.b16 %v2380
        %v2752 = vunpack.c.h.b16 %v2380
        %v2753 = vunpack.c.l.b16 %v2381
        %v2754 = vunpack.c.h.b16 %v2381
        %v2755 = vunpack.c.l.b16 %v2382
        %v2756 = vunpack.c.h.b16 %v2382
        %v2757 = vunpack.c.l.b16 %v2383
        %v2758 = vunpack.c.h.b16 %v2383
        %v2759 = vunpack.c.l.b16 %v2384
        %v2760 = vunpack.c.h.b16 %v2384
        %v2761 = vunpack.c.l.b16 %v2385
        %v2762 = vunpack.c.h.b16 %v2385
        %v2763 = vunpack.c.l.b16 %v2386
        %v2764 = vunpack.c.h.b16 %v2386
        %v2765 = vunpack.c.l.b16 %v2387
        %v2766 = vunpack.c.h.b16 %v2387
        %v2767 = vunpack.c.l.b16 %v2388
        %v2768 = vunpack.c.h.b16 %v2388
        %v2769 = vunpack.c.l.b16 %v2389
        %v2770 = vunpack.c.h.b16 %v2389
        %v2771 = vunpack.c.l.b16 %v2390
        %v2772 = vunpack.c.h.b16 %v2390
        %v2773 = vunpack.c.l.b16 %v2391
        %v2774 = vunpack.c.h.b16 %v2391
        %v2775 = vunpack.c.l.b16 %v2392
        %v2776 = vunpack.c.h.b16 %v2392
        %v2777 = vpack.c.b16 %v2525, %v2521
        %v2778 = vpack.c.b16 %v2526, %v2522
        %v2779 = vpack.c.b16 %v2527, %v2523
        %v2780 = vpack.c.b16 %v2528, %v2524
        %v2781 = vpack.c.b16 %v2533, %v2529
        %v2782 = vpack.c.b16 %v2534, %v2530
        %v2783 = vpack.c.b16 %v2535, %v2531
        %v2784 = vpack.c.b16 %v2536, %v2532
        %v2785 = vpack.c.b16 %v2541, %v2537
        %v2786 = vpack.c.b16 %v2542, %v2538
        %v2787 = vpack.c.b16 %v2543, %v2539
        %v2788 = vpack.c.b16 %v2544, %v2540
        %v2789 = vpack.c.b16 %v2549, %v2545
        %v2790 = vpack.c.b16 %v2550, %v2546
        %v2791 = vpack.c.b16 %v2551, %v2547
        %v2792 = vpack.c.b16 %v2552, %v2548
        %v2793 = vpack.c.b16 %v2557, %v2553
        %v2794 = vpack.c.b16 %v2558, %v2554
        %v2795 = vpack.c.b16 %v2559, %v2555
        %v2796 = vpack.c.b16 %v2560, %v2556
        %v2797 = vpack.c.b16 %v2565, %v2561
        %v2798 = vpack.c.b16 %v2566, %v2562
        %v2799 = vpack.c.b16 %v2567, %v2563
        %v2800 = vpack.c.b16 %v2568, %v2564
        %v2801 = vpack.c.b16 %v2573, %v2569
        %v2802 = vpack.c.b16 %v2574, %v2570
        %v2803 = vpack.c.b16 %v2575, %v2571
        %v2804 = vpack.c.b16 %v2576, %v2572
        %v2805 = vpack.c.b16 %v2581, %v2577
        %v2806 = vpack.c.b16 %v2582, %v2578
        %v2807 = vpack.c.b16 %v2583, %v2579
        %v2808 = vpack.c.b16 %v2584, %v2580
        %v2809 = vpack.c.b16 %v2589, %v2585
        %v2810 = vpack.c.b16 %v2590, %v2586
        %v2811 = vpack.c.b16 %v2591, %v2587
        %v2812 = vpack.c.b16 %v2592, %v2588
        %v2813 = vpack.c.b16 %v2597, %v2593
        %v2814 = vpack.c.b16 %v2598, %v2594
        %v2815 = vpack.c.b16 %v2599, %v2595
        %v2816 = vpack.c.b16 %v2600, %v2596
        %v2817 = vpack.c.b16 %v2605, %v2601
        %v2818 = vpack.c.b16 %v2606, %v2602
        %v2819 = vpack.c.b16 %v2607, %v2603
        %v2820 = vpack.c.b16 %v2608, %v2604
        %v2821 = vpack.c.b16 %v2613, %v2609
        %v2822 = vpack.c.b16 %v2614, %v2610
        %v2823 = vpack.c.b16 %v2615, %v2611
        %v2824 = vpack.c.b16 %v2616, %v2612
        %v2825 = vpack.c.b16 %v2621, %v2617
        %v2826 = vpack.c.b16 %v2622, %v2618
        %v2827 = vpack.c.b16 %v2623, %v2619
        %v2828 = vpack.c.b16 %v2624, %v2620
        %v2829 = vpack.c.b16 %v2629, %v2625
        %v2830 = vpack.c.b16 %v2630, %v2626
        %v2831 = vpack.c.b16 %v2631, %v2627
        %v2832 = vpack.c.b16 %v2632, %v2628
        %v2833 = vpack.c.b16 %v2637, %v2633
        %v2834 = vpack.c.b16 %v2638, %v2634
        %v2835 = vpack.c.b16 %v2639, %v2635
        %v2836 = vpack.c.b16 %v2640, %v2636
        %v2837 = vpack.c.b16 %v2645, %v2641
        %v2838 = vpack.c.b16 %v2646, %v2642
        %v2839 = vpack.c.b16 %v2647, %v2643
        %v2840 = vpack.c.b16 %v2648, %v2644
        %v2841 = vpack.c.b16 %v2653, %v2649
        %v2842 = vpack.c.b16 %v2654, %v2650
        %v2843 = vpack.c.b16 %v2655, %v2651
        %v2844 = vpack.c.b16 %v2656, %v2652
        %v2845 = vpack.c.b16 %v2661, %v2657
        %v2846 = vpack.c.b16 %v2662, %v2658
        %v2847 = vpack.c.b16 %v2663, %v2659
        %v2848 = vpack.c.b16 %v2664, %v2660
        %v2849 = vpack.c.b16 %v2669, %v2665
        %v2850 = vpack.c.b16 %v2670, %v2666
        %v2851 = vpack.c.b16 %v2671, %v2667
        %v2852 = vpack.c.b16 %v2672, %v2668
        %v2853 = vpack.c.b16 %v2677, %v2673
        %v2854 = vpack.c.b16 %v2678, %v2674
        %v2855 = vpack.c.b16 %v2679, %v2675
        %v2856 = vpack.c.b16 %v2680, %v2676
        %v2857 = vpack.c.b16 %v2685, %v2681
        %v2858 = vpack.c.b16 %v2686, %v2682
        %v2859 = vpack.c.b16 %v2687, %v2683
        %v2860 = vpack.c.b16 %v2688, %v2684
        %v2861 = vpack.c.b16 %v2693, %v2689
        %v2862 = vpack.c.b16 %v2694, %v2690
        %v2863 = vpack.c.b16 %v2695, %v2691
        %v2864 = vpack.c.b16 %v2696, %v2692
        %v2865 = vpack.c.b16 %v2701, %v2697
        %v2866 = vpack.c.b16 %v2702, %v2698
        %v2867 = vpack.c.b16 %v2703, %v2699
        %v2868 = vpack.c.b16 %v2704, %v2700
        %v2869 = vpack.c.b16 %v2709, %v2705
        %v2870 = vpack.c.b16 %v2710, %v2706
        %v2871 = vpack.c.b16 %v2711, %v2707
        %v2872 = vpack.c.b16 %v2712, %v2708
        %v2873 = vpack.c.b16 %v2717, %v2713
        %v2874 = vpack.c.b16 %v2718, %v2714
        %v2875 = vpack.c.b16 %v2719, %v2715
        %v2876 = vpack.c.b16 %v2720, %v2716
        %v2877 = vpack.c.b16 %v2725, %v2721
        %v2878 = vpack.c.b16 %v2726, %v2722
        %v2879 = vpack.c.b16 %v2727, %v2723
        %v2880 = vpack.c.b16 %v2728, %v2724
        %v2881 = vpack.c.b16 %v2733, %v2729
        %v2882 = vpack.c.b16 %v2734, %v2730
        %v2883 = vpack.c.b16 %v2735, %v2731
        %v2884 = vpack.c.b16 %v2736, %v2732
        %v2885 = vpack.c.b16 %v2741, %v2737
        %v2886 = vpack.c.b16 %v2742, %v2738
        %v2887 = vpack.c.b16 %v2743, %v2739
        %v2888 = vpack.c.b16 %v2744, %v2740
        %v2889 = vpack.c.b16 %v2749, %v2745
        %v2890 = vpack.c.b16 %v2750, %v2746
        %v2891 = vpack.c.b16 %v2751, %v2747
        %v2892 = vpack.c.b16 %v2752, %v2748
        %v2893 = vpack.c.b16 %v2757, %v2753
        %v2894 = vpack.c.b16 %v2758, %v2754
        %v2895 = vpack.c.b16 %v2759, %v2755
        %v2896 = vpack.c.b16 %v2760, %v2756
        %v2897 = vpack.c.b16 %v2765, %v2761
        %v2898 = vpack.c.b16 %v2766, %v2762
        %v2899 = vpack.c.b16 %v2767, %v2763
        %v2900 = vpack.c.b16 %v2768, %v2764
        %v2901 = vpack.c.b16 %v2773, %v2769
        %v2902 = vpack.c.b16 %v2774, %v2770
        %v2903 = vpack.c.b16 %v2775, %v2771
        %v2904 = vpack.c.b16 %v2776, %v2772
        %3033 = vmatprep.subr.bf16.mxu0 %v2806
        %3034 = vmatpush1.bf16.msra.mxu0 %v2805
        %3035 = vmatprep.subr.bf16.mxu0 %v2802
        %3036 = vmatpush1.bf16.msra.mxu0 %v2801
        %3037 = vmatprep.subr.bf16.mxu0 %v2798
        %3038 = vmatpush1.bf16.msra.mxu0 %v2797
        %3039 = vmatprep.subr.bf16.mxu0 %v2794
        %3040 = vmatpush1.bf16.msra.mxu0 %v2793
        %3041 = vmatprep.subr.bf16.mxu0 %v2790
        %3042 = vmatpush1.bf16.msra.mxu0 %v2789
        %3043 = vmatprep.subr.bf16.mxu0 %v2786
        %3044 = vmatpush1.bf16.msra.mxu0 %v2785
        %3045 = vmatprep.subr.bf16.mxu0 %v2782
        %3046 = vmatpush1.bf16.msra.mxu0 %v2781
        %3047 = vmatprep.subr.bf16.mxu0 %v2778
        %3048 = vmatpush1.bf16.msra.mxu0 %v2777
        %3049 = vmatprep.subr.bf16.mxu0 %v2838
        %3050 = vmatpush2.bf16.msra.mxu0 %v2837
        %3051 = vmatprep.subr.bf16.mxu0 %v2834
        %3052 = vmatpush2.bf16.msra.mxu0 %v2833
        %3053 = vmatprep.subr.bf16.mxu0 %v2830
        %3054 = vmatpush2.bf16.msra.mxu0 %v2829
        %3055 = vmatprep.subr.bf16.mxu0 %v2826
        %3056 = vmatpush2.bf16.msra.mxu0 %v2825
        %3057 = vmatprep.subr.bf16.mxu0 %v2822
        %3058 = vmatpush2.bf16.msra.mxu0 %v2821
        %3059 = vmatprep.subr.bf16.mxu0 %v2818
        %3060 = vmatpush2.bf16.msra.mxu0 %v2817
        %3061 = vmatprep.subr.bf16.mxu0 %v2814
        %3062 = vmatpush2.bf16.msra.mxu0 %v2813
        %3063 = vmatprep.subr.bf16.mxu0 %v2810
        %3064 = vmatpush2.bf16.msra.mxu0 %v2809
        %3065 = vmatprep.mubr.bf16.mxu0 %v380
        %3066 = vmatmul.mubr.bf16.gmra.mxu0 %v379
        %v3067 = vpop.f32.mrf.mxu0
        %v3068 = vadd.f32 0.0, %v3067
        %v3069 = vpop.f32.mrf.mxu0
        %v3070 = vadd.f32 0.0, %v3069
        %v3071 = vpop.f32.mrf.mxu0
        %v3072 = vadd.f32 0.0, %v3071
        %v3073 = vpop.f32.mrf.mxu0
        %v3074 = vadd.f32 0.0, %v3073
        %3075 = vdwg.mxu0
        %3076 = vmatprep.subr.bf16.mxu0 %v2870
        %3077 = vmatpush1.bf16.msra.mxu0 %v2869
        %3078 = vmatprep.subr.bf16.mxu0 %v2866
        %3079 = vmatpush1.bf16.msra.mxu0 %v2865
        %3080 = vmatprep.subr.bf16.mxu0 %v2862
        %3081 = vmatpush1.bf16.msra.mxu0 %v2861
        %3082 = vmatprep.subr.bf16.mxu0 %v2858
        %3083 = vmatpush1.bf16.msra.mxu0 %v2857
        %3084 = vmatprep.subr.bf16.mxu0 %v2854
        %3085 = vmatpush1.bf16.msra.mxu0 %v2853
        %3086 = vmatprep.subr.bf16.mxu0 %v2850
        %3087 = vmatpush1.bf16.msra.mxu0 %v2849
        %3088 = vmatprep.subr.bf16.mxu0 %v2846
        %3089 = vmatpush1.bf16.msra.mxu0 %v2845
        %3090 = vmatprep.subr.bf16.mxu0 %v2842
        %3091 = vmatpush1.bf16.msra.mxu0 %v2841
        %3092 = vmatprep.subr.bf16.mxu0 %v2902
        %3093 = vmatpush2.bf16.msra.mxu0 %v2901
        %3094 = vmatprep.subr.bf16.mxu0 %v2898
        %3095 = vmatpush2.bf16.msra.mxu0 %v2897
        %3096 = vmatprep.subr.bf16.mxu0 %v2894
        %3097 = vmatpush2.bf16.msra.mxu0 %v2893
        %3098 = vmatprep.subr.bf16.mxu0 %v2890
        %3099 = vmatpush2.bf16.msra.mxu0 %v2889
        %3100 = vmatprep.subr.bf16.mxu0 %v2886
        %3101 = vmatpush2.bf16.msra.mxu0 %v2885
        %3102 = vmatprep.subr.bf16.mxu0 %v2882
        %3103 = vmatpush2.bf16.msra.mxu0 %v2881
        %3104 = vmatprep.subr.bf16.mxu0 %v2878
        %3105 = vmatpush2.bf16.msra.mxu0 %v2877
        %3106 = vmatprep.subr.bf16.mxu0 %v2874
        %3107 = vmatpush2.bf16.msra.mxu0 %v2873
        %3108 = vmatprep.mubr.bf16.mxu0 %v382
        %3109 = vmatmul.mubr.bf16.gmra.mxu0 %v381
        %v3110 = vpop.f32.mrf.mxu0
        %v3111 = vadd.f32 %v3068, %v3110
        %v3112 = vpop.f32.mrf.mxu0
        %v3113 = vadd.f32 %v3070, %v3112
        %v3114 = vpop.f32.mrf.mxu0
        %v3115 = vadd.f32 %v3072, %v3114
        %v3116 = vpop.f32.mrf.mxu0
        %v3117 = vadd.f32 %v3074, %v3116
        %3118 = vdwg.mxu0
        %3119 = vmatprep.subr.bf16.mxu0 %v2808
        %3120 = vmatpush1.bf16.msra.mxu0 %v2807
        %3121 = vmatprep.subr.bf16.mxu0 %v2804
        %3122 = vmatpush1.bf16.msra.mxu0 %v2803
        %3123 = vmatprep.subr.bf16.mxu0 %v2800
        %3124 = vmatpush1.bf16.msra.mxu0 %v2799
        %3125 = vmatprep.subr.bf16.mxu0 %v2796
        %3126 = vmatpush1.bf16.msra.mxu0 %v2795
        %3127 = vmatprep.subr.bf16.mxu0 %v2792
        %3128 = vmatpush1.bf16.msra.mxu0 %v2791
        %3129 = vmatprep.subr.bf16.mxu0 %v2788
        %3130 = vmatpush1.bf16.msra.mxu0 %v2787
        %3131 = vmatprep.subr.bf16.mxu0 %v2784
        %3132 = vmatpush1.bf16.msra.mxu0 %v2783
        %3133 = vmatprep.subr.bf16.mxu0 %v2780
        %3134 = vmatpush1.bf16.msra.mxu0 %v2779
        %3135 = vmatprep.subr.bf16.mxu0 %v2840
        %3136 = vmatpush2.bf16.msra.mxu0 %v2839
        %3137 = vmatprep.subr.bf16.mxu0 %v2836
        %3138 = vmatpush2.bf16.msra.mxu0 %v2835
        %3139 = vmatprep.subr.bf16.mxu0 %v2832
        %3140 = vmatpush2.bf16.msra.mxu0 %v2831
        %3141 = vmatprep.subr.bf16.mxu0 %v2828
        %3142 = vmatpush2.bf16.msra.mxu0 %v2827
        %3143 = vmatprep.subr.bf16.mxu0 %v2824
        %3144 = vmatpush2.bf16.msra.mxu0 %v2823
        %3145 = vmatprep.subr.bf16.mxu0 %v2820
        %3146 = vmatpush2.bf16.msra.mxu0 %v2819
        %3147 = vmatprep.subr.bf16.mxu0 %v2816
        %3148 = vmatpush2.bf16.msra.mxu0 %v2815
        %3149 = vmatprep.subr.bf16.mxu0 %v2812
        %3150 = vmatpush2.bf16.msra.mxu0 %v2811
        %3151 = vmatprep.mubr.bf16.mxu0 %v380
        %3152 = vmatmul.mubr.bf16.gmra.mxu0 %v379
        %v3153 = vpop.f32.mrf.mxu0
        %v3154 = vadd.f32 0.0, %v3153
        %v3155 = vpop.f32.mrf.mxu0
        %v3156 = vadd.f32 0.0, %v3155
        %v3157 = vpop.f32.mrf.mxu0
        %v3158 = vadd.f32 0.0, %v3157
        %v3159 = vpop.f32.mrf.mxu0
        %v3160 = vadd.f32 0.0, %v3159
        %3161 = vdwg.mxu0
        %3162 = vmatprep.subr.bf16.mxu0 %v2872
        %3163 = vmatpush1.bf16.msra.mxu0 %v2871
        %3164 = vmatprep.subr.bf16.mxu0 %v2868
        %3165 = vmatpush1.bf16.msra.mxu0 %v2867
        %3166 = vmatprep.subr.bf16.mxu0 %v2864
        %3167 = vmatpush1.bf16.msra.mxu0 %v2863
        %3168 = vmatprep.subr.bf16.mxu0 %v2860
        %3169 = vmatpush1.bf16.msra.mxu0 %v2859
        %3170 = vmatprep.subr.bf16.mxu0 %v2856
        %3171 = vmatpush1.bf16.msra.mxu0 %v2855
        %3172 = vmatprep.subr.bf16.mxu0 %v2852
        %3173 = vmatpush1.bf16.msra.mxu0 %v2851
        %3174 = vmatprep.subr.bf16.mxu0 %v2848
        %3175 = vmatpush1.bf16.msra.mxu0 %v2847
        %3176 = vmatprep.subr.bf16.mxu0 %v2844
        %3177 = vmatpush1.bf16.msra.mxu0 %v2843
        %3178 = vmatprep.subr.bf16.mxu0 %v2904
        %3179 = vmatpush2.bf16.msra.mxu0 %v2903
        %3180 = vmatprep.subr.bf16.mxu0 %v2900
        %3181 = vmatpush2.bf16.msra.mxu0 %v2899
        %3182 = vmatprep.subr.bf16.mxu0 %v2896
        %3183 = vmatpush2.bf16.msra.mxu0 %v2895
        %3184 = vmatprep.subr.bf16.mxu0 %v2892
        %3185 = vmatpush2.bf16.msra.mxu0 %v2891
        %3186 = vmatprep.subr.bf16.mxu0 %v2888
        %3187 = vmatpush2.bf16.msra.mxu0 %v2887
        %3188 = vmatprep.subr.bf16.mxu0 %v2884
        %3189 = vmatpush2.bf16.msra.mxu0 %v2883
        %3190 = vmatprep.subr.bf16.mxu0 %v2880
        %3191 = vmatpush2.bf16.msra.mxu0 %v2879
        %3192 = vmatprep.subr.bf16.mxu0 %v2876
        %3193 = vmatpush2.bf16.msra.mxu0 %v2875
        %3194 = vmatprep.mubr.bf16.mxu0 %v382
        %3195 = vmatmul.mubr.bf16.gmra.mxu0 %v381
        %v3196 = vpop.f32.mrf.mxu0
        %v3197 = vadd.f32 %v3154, %v3196
        %v3198 = vpop.f32.mrf.mxu0
        %v3199 = vadd.f32 %v3156, %v3198
        %v3200 = vpop.f32.mrf.mxu0
        %v3201 = vadd.f32 %v3158, %v3200
        %v3202 = vpop.f32.mrf.mxu0
        %v3203 = vadd.f32 %v3160, %v3202
        %3204 = vdwg.mxu0
        %v3205 = vadd.f32 %v2170, %v3111
        %v3206 = vadd.f32 %v2172, %v3113
        %v3207 = vadd.f32 %v2256, %v3197
        %v3208 = vadd.f32 %v2258, %v3199
        %v3209 = vadd.f32 %v2174, %v3115
        %v3210 = vadd.f32 %v2176, %v3117
        %v3211 = vadd.f32 %v2260, %v3201
        %v3212 = vadd.f32 %v2262, %v3203
        %v3213 = vld [vmem:[#allocation7] sm:$0xf]
        %v3215 = vlaneseq
        %v3216 = vshrl.u32 %v3215, 7
        %v3217 = vsub.s32 0, %v3216
        %v3218 = vrot.slane %v3213, %v3217
        %v3219 = vlaneseq
        %v3220 = vshrl.u32 %v3219, 7
        %v3221 = vsub.s32 1, %v3220
        %v3222 = vrot.slane %v3213, %v3221
        %v3223 = vlaneseq
        %v3224 = vshrl.u32 %v3223, 7
        %v3225 = vsub.s32 2, %v3224
        %v3226 = vrot.slane %v3213, %v3225
        %v3227 = vlaneseq
        %v3228 = vshrl.u32 %v3227, 7
        %v3229 = vsub.s32 3, %v3228
        %v3230 = vrot.slane %v3213, %v3229
        %v3235 = vadd.f32 %v3205, %v3218
        %v3236 = vadd.f32 %v3206, %v3222
        %v3237 = vadd.f32 %v3207, %v3226
        %v3238 = vadd.f32 %v3208, %v3230
        %v3239 = vadd.f32 %v3209, %v3218
        %v3240 = vadd.f32 %v3210, %v3222
        %v3241 = vadd.f32 %v3211, %v3226
        %v3242 = vadd.f32 %v3212, %v3230
        %v3243 = vmax.f32 %v3235, 0.0
        %v3244 = vmax.f32 %v3236, 0.0
        %v3245 = vmax.f32 %v3237, 0.0
        %v3246 = vmax.f32 %v3238, 0.0
        %v3247 = vmax.f32 %v3239, 0.0
        %v3248 = vmax.f32 %v3240, 0.0
        %v3249 = vmax.f32 %v3241, 0.0
        %v3250 = vmax.f32 %v3242, 0.0
        %v3255 = vrot.slane %v3243, 1
        %v3256 = vrot.slane %v3244, 1
        %v3257 = vrot.slane %v3245, 1
        %v3258 = vrot.slane %v3246, 1
        %v3267 = vrot.slane %v3243, 7
        %v3268 = vrot.slane %v3244, 7
        %v3269 = vrot.slane %v3245, 7
        %v3270 = vrot.slane %v3246, 7
        %v3271 = vrot.slane %v3247, 7
        %v3272 = vsel %vm321, %v3267, %v3271
        %v3273 = vrot.slane %v3248, 7
        %v3274 = vsel %vm321, %v3268, %v3273
        %v3275 = vrot.slane %v3249, 7
        %v3276 = vsel %vm321, %v3269, %v3275
        %v3277 = vrot.slane %v3250, 7
        %v3278 = vsel %vm321, %v3270, %v3277
        %v3287 = vsel %vm321, %v3255, %v3267
        %v3288 = vsel %vm321, %v3256, %v3268
        %v3289 = vsel %vm321, %v3257, %v3269
        %v3290 = vsel %vm321, %v3258, %v3270
        %v3291 = vrot.slane %v3247, 1
        %v3292 = vsel %vm346, %v3255, %v3291
        %v3293 = vrot.slane %v3248, 1
        %v3294 = vsel %vm346, %v3256, %v3293
        %v3295 = vrot.slane %v3249, 1
        %v3296 = vsel %vm346, %v3257, %v3295
        %v3297 = vrot.slane %v3250, 1
        %v3298 = vsel %vm346, %v3258, %v3297
        %v3311 = vsel %vm346, %v3291, %v3271
        %v3312 = vsel %vm346, %v3293, %v3273
        %v3313 = vsel %vm346, %v3295, %v3275
        %v3314 = vsel %vm346, %v3297, %v3277
        %v3315 = vpack.c.bf16 %v3272, %v3287
        %v3316 = vpack.c.bf16 %v3274, %v3288
        %v3317 = vpack.c.bf16 %v3276, %v3289
        %v3318 = vpack.c.bf16 %v3278, %v3290
        %v3319 = vpack.c.bf16 %v3247, %v3243
        %v3320 = vpack.c.bf16 %v3248, %v3244
        %v3321 = vpack.c.bf16 %v3249, %v3245
        %v3322 = vpack.c.bf16 %v3250, %v3246
        %v3323 = vpack.c.bf16 %v3311, %v3292
        %v3324 = vpack.c.bf16 %v3312, %v3294
        %v3325 = vpack.c.bf16 %v3313, %v3296
        %v3326 = vpack.c.bf16 %v3314, %v3298
        %v3327 = vld [vmem:[#allocation8] sm:$0xff]
        %v3328 = vld [vmem:[#allocation8 + $0x8] sm:$0xff]
        %v3329 = vld [vmem:[#allocation8 + $0x10] sm:$0xff]
        %v3330 = vld [vmem:[#allocation8 + $0x18] sm:$0xff]
        %v3331 = vld [vmem:[#allocation8 + $0x20] sm:$0xff]
        %v3332 = vld [vmem:[#allocation8 + $0x28] sm:$0xff]
        %v3333 = vld [vmem:[#allocation8 + $0x30] sm:$0xff]
        %v3334 = vld [vmem:[#allocation8 + $0x38] sm:$0xff]
        %v3335 = vld [vmem:[#allocation8 + $0x40] sm:$0xff]
        %v3336 = vld [vmem:[#allocation8 + $0x48] sm:$0xff]
        %v3337 = vld [vmem:[#allocation8 + $0x50] sm:$0xff]
        %v3338 = vld [vmem:[#allocation8 + $0x58] sm:$0xff]
        %v3339 = vld [vmem:[#allocation8 + $0x60] sm:$0xff]
        %v3340 = vld [vmem:[#allocation8 + $0x68] sm:$0xff]
        %v3341 = vld [vmem:[#allocation8 + $0x70] sm:$0xff]
        %v3342 = vld [vmem:[#allocation8 + $0x78] sm:$0xff]
        %v3343 = vld [vmem:[#allocation8 + $0x80] sm:$0xff]
        %v3344 = vld [vmem:[#allocation8 + $0x88] sm:$0xff]
        %v3345 = vld [vmem:[#allocation8 + $0x90] sm:$0xff]
        %v3346 = vld [vmem:[#allocation8 + $0x98] sm:$0xff]
        %v3347 = vld [vmem:[#allocation8 + $0xa0] sm:$0xff]
        %v3348 = vld [vmem:[#allocation8 + $0xa8] sm:$0xff]
        %v3349 = vld [vmem:[#allocation8 + $0xb0] sm:$0xff]
        %v3350 = vld [vmem:[#allocation8 + $0xb8] sm:$0xff]
        %v3351 = vld [vmem:[#allocation8 + $0xc0] sm:$0xff]
        %v3352 = vld [vmem:[#allocation8 + $0xc8] sm:$0xff]
        %v3353 = vld [vmem:[#allocation8 + $0xd0] sm:$0xff]
        %v3354 = vld [vmem:[#allocation8 + $0xd8] sm:$0xff]
        %v3355 = vld [vmem:[#allocation8 + $0xe0] sm:$0xff]
        %v3356 = vld [vmem:[#allocation8 + $0xe8] sm:$0xff]
        %v3357 = vld [vmem:[#allocation8 + $0xf0] sm:$0xff]
        %v3358 = vld [vmem:[#allocation8 + $0xf8] sm:$0xff]
        %v3359 = vld [vmem:[#allocation8 + $0x100] sm:$0xff]
        %v3360 = vld [vmem:[#allocation8 + $0x108] sm:$0xff]
        %v3361 = vld [vmem:[#allocation8 + $0x110] sm:$0xff]
        %v3362 = vld [vmem:[#allocation8 + $0x118] sm:$0xff]
        %v3363 = vld [vmem:[#allocation8 + $0x120] sm:$0xff]
        %v3364 = vld [vmem:[#allocation8 + $0x128] sm:$0xff]
        %v3365 = vld [vmem:[#allocation8 + $0x130] sm:$0xff]
        %v3366 = vld [vmem:[#allocation8 + $0x138] sm:$0xff]
        %v3367 = vld [vmem:[#allocation8 + $0x140] sm:$0xff]
        %v3368 = vld [vmem:[#allocation8 + $0x148] sm:$0xff]
        %v3369 = vld [vmem:[#allocation8 + $0x150] sm:$0xff]
        %v3370 = vld [vmem:[#allocation8 + $0x158] sm:$0xff]
        %v3371 = vld [vmem:[#allocation8 + $0x160] sm:$0xff]
        %v3372 = vld [vmem:[#allocation8 + $0x168] sm:$0xff]
        %v3373 = vld [vmem:[#allocation8 + $0x170] sm:$0xff]
        %v3374 = vld [vmem:[#allocation8 + $0x178] sm:$0xff]
        %v3375 = vld [vmem:[#allocation8 + $0x180] sm:$0xff]
        %v3376 = vld [vmem:[#allocation8 + $0x188] sm:$0xff]
        %v3377 = vld [vmem:[#allocation8 + $0x190] sm:$0xff]
        %v3378 = vld [vmem:[#allocation8 + $0x198] sm:$0xff]
        %v3379 = vld [vmem:[#allocation8 + $0x1a0] sm:$0xff]
        %v3380 = vld [vmem:[#allocation8 + $0x1a8] sm:$0xff]
        %v3381 = vld [vmem:[#allocation8 + $0x1b0] sm:$0xff]
        %v3382 = vld [vmem:[#allocation8 + $0x1b8] sm:$0xff]
        %v3383 = vld [vmem:[#allocation8 + $0x1c0] sm:$0xff]
        %v3384 = vld [vmem:[#allocation8 + $0x1c8] sm:$0xff]
        %v3385 = vld [vmem:[#allocation8 + $0x1d0] sm:$0xff]
        %v3386 = vld [vmem:[#allocation8 + $0x1d8] sm:$0xff]
        %v3387 = vld [vmem:[#allocation8 + $0x1e0] sm:$0xff]
        %v3388 = vld [vmem:[#allocation8 + $0x1e8] sm:$0xff]
        %v3389 = vld [vmem:[#allocation8 + $0x1f0] sm:$0xff]
        %v3390 = vld [vmem:[#allocation8 + $0x1f8] sm:$0xff]
        %v3391 = vld [vmem:[#allocation8 + $0x200] sm:$0xff]
        %v3392 = vld [vmem:[#allocation8 + $0x208] sm:$0xff]
        %v3393 = vld [vmem:[#allocation8 + $0x210] sm:$0xff]
        %v3394 = vld [vmem:[#allocation8 + $0x218] sm:$0xff]
        %v3395 = vld [vmem:[#allocation8 + $0x220] sm:$0xff]
        %v3396 = vld [vmem:[#allocation8 + $0x228] sm:$0xff]
        %v3397 = vld [vmem:[#allocation8 + $0x230] sm:$0xff]
        %v3398 = vld [vmem:[#allocation8 + $0x238] sm:$0xff]
        %v3399 = vld [vmem:[#allocation8 + $0x240] sm:$0xff]
        %v3400 = vld [vmem:[#allocation8 + $0x248] sm:$0xff]
        %v3401 = vld [vmem:[#allocation8 + $0x250] sm:$0xff]
        %v3402 = vld [vmem:[#allocation8 + $0x258] sm:$0xff]
        %v3403 = vld [vmem:[#allocation8 + $0x260] sm:$0xff]
        %v3404 = vld [vmem:[#allocation8 + $0x268] sm:$0xff]
        %v3405 = vld [vmem:[#allocation8 + $0x270] sm:$0xff]
        %v3406 = vld [vmem:[#allocation8 + $0x278] sm:$0xff]
        %v3407 = vld [vmem:[#allocation8 + $0x280] sm:$0xff]
        %v3408 = vld [vmem:[#allocation8 + $0x288] sm:$0xff]
        %v3409 = vld [vmem:[#allocation8 + $0x290] sm:$0xff]
        %v3410 = vld [vmem:[#allocation8 + $0x298] sm:$0xff]
        %v3411 = vld [vmem:[#allocation8 + $0x2a0] sm:$0xff]
        %v3412 = vld [vmem:[#allocation8 + $0x2a8] sm:$0xff]
        %v3413 = vld [vmem:[#allocation8 + $0x2b0] sm:$0xff]
        %v3414 = vld [vmem:[#allocation8 + $0x2b8] sm:$0xff]
        %v3415 = vld [vmem:[#allocation8 + $0x2c0] sm:$0xff]
        %v3416 = vld [vmem:[#allocation8 + $0x2c8] sm:$0xff]
        %v3417 = vld [vmem:[#allocation8 + $0x2d0] sm:$0xff]
        %v3418 = vld [vmem:[#allocation8 + $0x2d8] sm:$0xff]
        %v3419 = vld [vmem:[#allocation8 + $0x2e0] sm:$0xff]
        %v3420 = vld [vmem:[#allocation8 + $0x2e8] sm:$0xff]
        %v3421 = vld [vmem:[#allocation8 + $0x2f0] sm:$0xff]
        %v3422 = vld [vmem:[#allocation8 + $0x2f8] sm:$0xff]
        %v3423 = vld [vmem:[#allocation8 + $0x300] sm:$0xff]
        %v3424 = vld [vmem:[#allocation8 + $0x308] sm:$0xff]
        %v3425 = vld [vmem:[#allocation8 + $0x310] sm:$0xff]
        %v3426 = vld [vmem:[#allocation8 + $0x318] sm:$0xff]
        %v3427 = vld [vmem:[#allocation8 + $0x320] sm:$0xff]
        %v3428 = vld [vmem:[#allocation8 + $0x328] sm:$0xff]
        %v3429 = vld [vmem:[#allocation8 + $0x330] sm:$0xff]
        %v3430 = vld [vmem:[#allocation8 + $0x338] sm:$0xff]
        %v3431 = vld [vmem:[#allocation8 + $0x340] sm:$0xff]
        %v3432 = vld [vmem:[#allocation8 + $0x348] sm:$0xff]
        %v3433 = vld [vmem:[#allocation8 + $0x350] sm:$0xff]
        %v3434 = vld [vmem:[#allocation8 + $0x358] sm:$0xff]
        %v3435 = vld [vmem:[#allocation8 + $0x360] sm:$0xff]
        %v3436 = vld [vmem:[#allocation8 + $0x368] sm:$0xff]
        %v3437 = vld [vmem:[#allocation8 + $0x370] sm:$0xff]
        %v3438 = vld [vmem:[#allocation8 + $0x378] sm:$0xff]
        %v3439 = vld [vmem:[#allocation8 + $0x380] sm:$0xff]
        %v3440 = vld [vmem:[#allocation8 + $0x388] sm:$0xff]
        %v3441 = vld [vmem:[#allocation8 + $0x390] sm:$0xff]
        %v3442 = vld [vmem:[#allocation8 + $0x398] sm:$0xff]
        %v3443 = vld [vmem:[#allocation8 + $0x3a0] sm:$0xff]
        %v3444 = vld [vmem:[#allocation8 + $0x3a8] sm:$0xff]
        %v3445 = vld [vmem:[#allocation8 + $0x3b0] sm:$0xff]
        %v3446 = vld [vmem:[#allocation8 + $0x3b8] sm:$0xff]
        %v3447 = vld [vmem:[#allocation8 + $0x3c0] sm:$0xff]
        %v3448 = vld [vmem:[#allocation8 + $0x3c8] sm:$0xff]
        %v3449 = vld [vmem:[#allocation8 + $0x3d0] sm:$0xff]
        %v3450 = vld [vmem:[#allocation8 + $0x3d8] sm:$0xff]
        %v3451 = vld [vmem:[#allocation8 + $0x3e0] sm:$0xff]
        %v3452 = vld [vmem:[#allocation8 + $0x3e8] sm:$0xff]
        %v3453 = vld [vmem:[#allocation8 + $0x3f0] sm:$0xff]
        %v3454 = vld [vmem:[#allocation8 + $0x3f8] sm:$0xff]
        %s3455 = scalar_lea.vmem [#allocation8], 1024
        %v3456 = vld [vmem:[%s3455] sm:$0xff]
        %v3457 = vld [vmem:[%s3455 + $0x8] sm:$0xff]
        %v3458 = vld [vmem:[%s3455 + $0x10] sm:$0xff]
        %v3459 = vld [vmem:[%s3455 + $0x18] sm:$0xff]
        %v3460 = vld [vmem:[%s3455 + $0x20] sm:$0xff]
        %v3461 = vld [vmem:[%s3455 + $0x28] sm:$0xff]
        %v3462 = vld [vmem:[%s3455 + $0x30] sm:$0xff]
        %v3463 = vld [vmem:[%s3455 + $0x38] sm:$0xff]
        %v3464 = vld [vmem:[%s3455 + $0x40] sm:$0xff]
        %v3465 = vld [vmem:[%s3455 + $0x48] sm:$0xff]
        %v3466 = vld [vmem:[%s3455 + $0x50] sm:$0xff]
        %v3467 = vld [vmem:[%s3455 + $0x58] sm:$0xff]
        %v3468 = vld [vmem:[%s3455 + $0x60] sm:$0xff]
        %v3469 = vld [vmem:[%s3455 + $0x68] sm:$0xff]
        %v3470 = vld [vmem:[%s3455 + $0x70] sm:$0xff]
        %v3471 = vld [vmem:[%s3455 + $0x78] sm:$0xff]
        %v3472 = vld [vmem:[%s3455 + $0x80] sm:$0xff]
        %v3473 = vld [vmem:[%s3455 + $0x88] sm:$0xff]
        %v3474 = vld [vmem:[%s3455 + $0x90] sm:$0xff]
        %v3475 = vld [vmem:[%s3455 + $0x98] sm:$0xff]
        %v3476 = vld [vmem:[%s3455 + $0xa0] sm:$0xff]
        %v3477 = vld [vmem:[%s3455 + $0xa8] sm:$0xff]
        %v3478 = vld [vmem:[%s3455 + $0xb0] sm:$0xff]
        %v3479 = vld [vmem:[%s3455 + $0xb8] sm:$0xff]
        %v3480 = vld [vmem:[%s3455 + $0xc0] sm:$0xff]
        %v3481 = vld [vmem:[%s3455 + $0xc8] sm:$0xff]
        %v3482 = vld [vmem:[%s3455 + $0xd0] sm:$0xff]
        %v3483 = vld [vmem:[%s3455 + $0xd8] sm:$0xff]
        %v3484 = vld [vmem:[%s3455 + $0xe0] sm:$0xff]
        %v3485 = vld [vmem:[%s3455 + $0xe8] sm:$0xff]
        %v3486 = vld [vmem:[%s3455 + $0xf0] sm:$0xff]
        %v3487 = vld [vmem:[%s3455 + $0xf8] sm:$0xff]
        %v3488 = vld [vmem:[%s3455 + $0x100] sm:$0xff]
        %v3489 = vld [vmem:[%s3455 + $0x108] sm:$0xff]
        %v3490 = vld [vmem:[%s3455 + $0x110] sm:$0xff]
        %v3491 = vld [vmem:[%s3455 + $0x118] sm:$0xff]
        %v3492 = vld [vmem:[%s3455 + $0x120] sm:$0xff]
        %v3493 = vld [vmem:[%s3455 + $0x128] sm:$0xff]
        %v3494 = vld [vmem:[%s3455 + $0x130] sm:$0xff]
        %v3495 = vld [vmem:[%s3455 + $0x138] sm:$0xff]
        %v3496 = vld [vmem:[%s3455 + $0x140] sm:$0xff]
        %v3497 = vld [vmem:[%s3455 + $0x148] sm:$0xff]
        %v3498 = vld [vmem:[%s3455 + $0x150] sm:$0xff]
        %v3499 = vld [vmem:[%s3455 + $0x158] sm:$0xff]
        %v3500 = vld [vmem:[%s3455 + $0x160] sm:$0xff]
        %v3501 = vld [vmem:[%s3455 + $0x168] sm:$0xff]
        %v3502 = vld [vmem:[%s3455 + $0x170] sm:$0xff]
        %v3503 = vld [vmem:[%s3455 + $0x178] sm:$0xff]
        %v3504 = vld [vmem:[%s3455 + $0x180] sm:$0xff]
        %v3505 = vld [vmem:[%s3455 + $0x188] sm:$0xff]
        %v3506 = vld [vmem:[%s3455 + $0x190] sm:$0xff]
        %v3507 = vld [vmem:[%s3455 + $0x198] sm:$0xff]
        %v3508 = vld [vmem:[%s3455 + $0x1a0] sm:$0xff]
        %v3509 = vld [vmem:[%s3455 + $0x1a8] sm:$0xff]
        %v3510 = vld [vmem:[%s3455 + $0x1b0] sm:$0xff]
        %v3511 = vld [vmem:[%s3455 + $0x1b8] sm:$0xff]
        %v3512 = vld [vmem:[%s3455 + $0x1c0] sm:$0xff]
        %v3513 = vld [vmem:[%s3455 + $0x1c8] sm:$0xff]
        %v3514 = vld [vmem:[%s3455 + $0x1d0] sm:$0xff]
        %v3515 = vld [vmem:[%s3455 + $0x1d8] sm:$0xff]
        %v3516 = vld [vmem:[%s3455 + $0x1e0] sm:$0xff]
        %v3517 = vld [vmem:[%s3455 + $0x1e8] sm:$0xff]
        %v3518 = vld [vmem:[%s3455 + $0x1f0] sm:$0xff]
        %v3519 = vld [vmem:[%s3455 + $0x1f8] sm:$0xff]
        %v3520 = vld [vmem:[%s3455 + $0x200] sm:$0xff]
        %v3521 = vld [vmem:[%s3455 + $0x208] sm:$0xff]
        %v3522 = vld [vmem:[%s3455 + $0x210] sm:$0xff]
        %v3523 = vld [vmem:[%s3455 + $0x218] sm:$0xff]
        %v3524 = vld [vmem:[%s3455 + $0x220] sm:$0xff]
        %v3525 = vld [vmem:[%s3455 + $0x228] sm:$0xff]
        %v3526 = vld [vmem:[%s3455 + $0x230] sm:$0xff]
        %v3527 = vld [vmem:[%s3455 + $0x238] sm:$0xff]
        %v3528 = vld [vmem:[%s3455 + $0x240] sm:$0xff]
        %v3529 = vld [vmem:[%s3455 + $0x248] sm:$0xff]
        %v3530 = vld [vmem:[%s3455 + $0x250] sm:$0xff]
        %v3531 = vld [vmem:[%s3455 + $0x258] sm:$0xff]
        %v3532 = vld [vmem:[%s3455 + $0x260] sm:$0xff]
        %v3533 = vld [vmem:[%s3455 + $0x268] sm:$0xff]
        %v3534 = vld [vmem:[%s3455 + $0x270] sm:$0xff]
        %v3535 = vld [vmem:[%s3455 + $0x278] sm:$0xff]
        %v3536 = vld [vmem:[%s3455 + $0x280] sm:$0xff]
        %v3537 = vld [vmem:[%s3455 + $0x288] sm:$0xff]
        %v3538 = vld [vmem:[%s3455 + $0x290] sm:$0xff]
        %v3539 = vld [vmem:[%s3455 + $0x298] sm:$0xff]
        %v3540 = vld [vmem:[%s3455 + $0x2a0] sm:$0xff]
        %v3541 = vld [vmem:[%s3455 + $0x2a8] sm:$0xff]
        %v3542 = vld [vmem:[%s3455 + $0x2b0] sm:$0xff]
        %v3543 = vld [vmem:[%s3455 + $0x2b8] sm:$0xff]
        %v3544 = vld [vmem:[%s3455 + $0x2c0] sm:$0xff]
        %v3545 = vld [vmem:[%s3455 + $0x2c8] sm:$0xff]
        %v3546 = vld [vmem:[%s3455 + $0x2d0] sm:$0xff]
        %v3547 = vld [vmem:[%s3455 + $0x2d8] sm:$0xff]
        %v3548 = vld [vmem:[%s3455 + $0x2e0] sm:$0xff]
        %v3549 = vld [vmem:[%s3455 + $0x2e8] sm:$0xff]
        %v3550 = vld [vmem:[%s3455 + $0x2f0] sm:$0xff]
        %v3551 = vld [vmem:[%s3455 + $0x2f8] sm:$0xff]
        %v3552 = vld [vmem:[%s3455 + $0x300] sm:$0xff]
        %v3553 = vld [vmem:[%s3455 + $0x308] sm:$0xff]
        %v3554 = vld [vmem:[%s3455 + $0x310] sm:$0xff]
        %v3555 = vld [vmem:[%s3455 + $0x318] sm:$0xff]
        %v3556 = vld [vmem:[%s3455 + $0x320] sm:$0xff]
        %v3557 = vld [vmem:[%s3455 + $0x328] sm:$0xff]
        %v3558 = vld [vmem:[%s3455 + $0x330] sm:$0xff]
        %v3559 = vld [vmem:[%s3455 + $0x338] sm:$0xff]
        %v3560 = vld [vmem:[%s3455 + $0x340] sm:$0xff]
        %v3561 = vld [vmem:[%s3455 + $0x348] sm:$0xff]
        %v3562 = vld [vmem:[%s3455 + $0x350] sm:$0xff]
        %v3563 = vld [vmem:[%s3455 + $0x358] sm:$0xff]
        %v3564 = vld [vmem:[%s3455 + $0x360] sm:$0xff]
        %v3565 = vld [vmem:[%s3455 + $0x368] sm:$0xff]
        %v3566 = vld [vmem:[%s3455 + $0x370] sm:$0xff]
        %v3567 = vld [vmem:[%s3455 + $0x378] sm:$0xff]
        %v3568 = vld [vmem:[%s3455 + $0x380] sm:$0xff]
        %v3569 = vld [vmem:[%s3455 + $0x388] sm:$0xff]
        %v3570 = vld [vmem:[%s3455 + $0x390] sm:$0xff]
        %v3571 = vld [vmem:[%s3455 + $0x398] sm:$0xff]
        %v3572 = vld [vmem:[%s3455 + $0x3a0] sm:$0xff]
        %v3573 = vld [vmem:[%s3455 + $0x3a8] sm:$0xff]
        %v3574 = vld [vmem:[%s3455 + $0x3b0] sm:$0xff]
        %v3575 = vld [vmem:[%s3455 + $0x3b8] sm:$0xff]
        %v3576 = vld [vmem:[%s3455 + $0x3c0] sm:$0xff]
        %v3577 = vld [vmem:[%s3455 + $0x3c8] sm:$0xff]
        %v3578 = vld [vmem:[%s3455 + $0x3d0] sm:$0xff]
        %v3579 = vld [vmem:[%s3455 + $0x3d8] sm:$0xff]
        %v3580 = vld [vmem:[%s3455 + $0x3e0] sm:$0xff]
        %v3581 = vld [vmem:[%s3455 + $0x3e8] sm:$0xff]
        %v3582 = vld [vmem:[%s3455 + $0x3f0] sm:$0xff]
        %v3583 = vld [vmem:[%s3455 + $0x3f8] sm:$0xff]
        %v3712 = vunpack.c.l.b16 %v3456
        %v3713 = vunpack.c.h.b16 %v3456
        %v3714 = vunpack.c.l.b16 %v3457
        %v3715 = vunpack.c.h.b16 %v3457
        %v3716 = vunpack.c.l.b16 %v3458
        %v3717 = vunpack.c.h.b16 %v3458
        %v3718 = vunpack.c.l.b16 %v3459
        %v3719 = vunpack.c.h.b16 %v3459
        %v3720 = vunpack.c.l.b16 %v3460
        %v3721 = vunpack.c.h.b16 %v3460
        %v3722 = vunpack.c.l.b16 %v3461
        %v3723 = vunpack.c.h.b16 %v3461
        %v3724 = vunpack.c.l.b16 %v3462
        %v3725 = vunpack.c.h.b16 %v3462
        %v3726 = vunpack.c.l.b16 %v3463
        %v3727 = vunpack.c.h.b16 %v3463
        %v3728 = vunpack.c.l.b16 %v3464
        %v3729 = vunpack.c.h.b16 %v3464
        %v3730 = vunpack.c.l.b16 %v3465
        %v3731 = vunpack.c.h.b16 %v3465
        %v3732 = vunpack.c.l.b16 %v3466
        %v3733 = vunpack.c.h.b16 %v3466
        %v3734 = vunpack.c.l.b16 %v3467
        %v3735 = vunpack.c.h.b16 %v3467
        %v3736 = vunpack.c.l.b16 %v3468
        %v3737 = vunpack.c.h.b16 %v3468
        %v3738 = vunpack.c.l.b16 %v3469
        %v3739 = vunpack.c.h.b16 %v3469
        %v3740 = vunpack.c.l.b16 %v3470
        %v3741 = vunpack.c.h.b16 %v3470
        %v3742 = vunpack.c.l.b16 %v3471
        %v3743 = vunpack.c.h.b16 %v3471
        %v3744 = vunpack.c.l.b16 %v3472
        %v3745 = vunpack.c.h.b16 %v3472
        %v3746 = vunpack.c.l.b16 %v3473
        %v3747 = vunpack.c.h.b16 %v3473
        %v3748 = vunpack.c.l.b16 %v3474
        %v3749 = vunpack.c.h.b16 %v3474
        %v3750 = vunpack.c.l.b16 %v3475
        %v3751 = vunpack.c.h.b16 %v3475
        %v3752 = vunpack.c.l.b16 %v3476
        %v3753 = vunpack.c.h.b16 %v3476
        %v3754 = vunpack.c.l.b16 %v3477
        %v3755 = vunpack.c.h.b16 %v3477
        %v3756 = vunpack.c.l.b16 %v3478
        %v3757 = vunpack.c.h.b16 %v3478
        %v3758 = vunpack.c.l.b16 %v3479
        %v3759 = vunpack.c.h.b16 %v3479
        %v3760 = vunpack.c.l.b16 %v3480
        %v3761 = vunpack.c.h.b16 %v3480
        %v3762 = vunpack.c.l.b16 %v3481
        %v3763 = vunpack.c.h.b16 %v3481
        %v3764 = vunpack.c.l.b16 %v3482
        %v3765 = vunpack.c.h.b16 %v3482
        %v3766 = vunpack.c.l.b16 %v3483
        %v3767 = vunpack.c.h.b16 %v3483
        %v3768 = vunpack.c.l.b16 %v3484
        %v3769 = vunpack.c.h.b16 %v3484
        %v3770 = vunpack.c.l.b16 %v3485
        %v3771 = vunpack.c.h.b16 %v3485
        %v3772 = vunpack.c.l.b16 %v3486
        %v3773 = vunpack.c.h.b16 %v3486
        %v3774 = vunpack.c.l.b16 %v3487
        %v3775 = vunpack.c.h.b16 %v3487
        %v3776 = vunpack.c.l.b16 %v3488
        %v3777 = vunpack.c.h.b16 %v3488
        %v3778 = vunpack.c.l.b16 %v3489
        %v3779 = vunpack.c.h.b16 %v3489
        %v3780 = vunpack.c.l.b16 %v3490
        %v3781 = vunpack.c.h.b16 %v3490
        %v3782 = vunpack.c.l.b16 %v3491
        %v3783 = vunpack.c.h.b16 %v3491
        %v3784 = vunpack.c.l.b16 %v3492
        %v3785 = vunpack.c.h.b16 %v3492
        %v3786 = vunpack.c.l.b16 %v3493
        %v3787 = vunpack.c.h.b16 %v3493
        %v3788 = vunpack.c.l.b16 %v3494
        %v3789 = vunpack.c.h.b16 %v3494
        %v3790 = vunpack.c.l.b16 %v3495
        %v3791 = vunpack.c.h.b16 %v3495
        %v3792 = vunpack.c.l.b16 %v3496
        %v3793 = vunpack.c.h.b16 %v3496
        %v3794 = vunpack.c.l.b16 %v3497
        %v3795 = vunpack.c.h.b16 %v3497
        %v3796 = vunpack.c.l.b16 %v3498
        %v3797 = vunpack.c.h.b16 %v3498
        %v3798 = vunpack.c.l.b16 %v3499
        %v3799 = vunpack.c.h.b16 %v3499
        %v3800 = vunpack.c.l.b16 %v3500
        %v3801 = vunpack.c.h.b16 %v3500
        %v3802 = vunpack.c.l.b16 %v3501
        %v3803 = vunpack.c.h.b16 %v3501
        %v3804 = vunpack.c.l.b16 %v3502
        %v3805 = vunpack.c.h.b16 %v3502
        %v3806 = vunpack.c.l.b16 %v3503
        %v3807 = vunpack.c.h.b16 %v3503
        %v3808 = vunpack.c.l.b16 %v3504
        %v3809 = vunpack.c.h.b16 %v3504
        %v3810 = vunpack.c.l.b16 %v3505
        %v3811 = vunpack.c.h.b16 %v3505
        %v3812 = vunpack.c.l.b16 %v3506
        %v3813 = vunpack.c.h.b16 %v3506
        %v3814 = vunpack.c.l.b16 %v3507
        %v3815 = vunpack.c.h.b16 %v3507
        %v3816 = vunpack.c.l.b16 %v3508
        %v3817 = vunpack.c.h.b16 %v3508
        %v3818 = vunpack.c.l.b16 %v3509
        %v3819 = vunpack.c.h.b16 %v3509
        %v3820 = vunpack.c.l.b16 %v3510
        %v3821 = vunpack.c.h.b16 %v3510
        %v3822 = vunpack.c.l.b16 %v3511
        %v3823 = vunpack.c.h.b16 %v3511
        %v3824 = vunpack.c.l.b16 %v3512
        %v3825 = vunpack.c.h.b16 %v3512
        %v3826 = vunpack.c.l.b16 %v3513
        %v3827 = vunpack.c.h.b16 %v3513
        %v3828 = vunpack.c.l.b16 %v3514
        %v3829 = vunpack.c.h.b16 %v3514
        %v3830 = vunpack.c.l.b16 %v3515
        %v3831 = vunpack.c.h.b16 %v3515
        %v3832 = vunpack.c.l.b16 %v3516
        %v3833 = vunpack.c.h.b16 %v3516
        %v3834 = vunpack.c.l.b16 %v3517
        %v3835 = vunpack.c.h.b16 %v3517
        %v3836 = vunpack.c.l.b16 %v3518
        %v3837 = vunpack.c.h.b16 %v3518
        %v3838 = vunpack.c.l.b16 %v3519
        %v3839 = vunpack.c.h.b16 %v3519
        %v3840 = vunpack.c.l.b16 %v3520
        %v3841 = vunpack.c.h.b16 %v3520
        %v3842 = vunpack.c.l.b16 %v3521
        %v3843 = vunpack.c.h.b16 %v3521
        %v3844 = vunpack.c.l.b16 %v3522
        %v3845 = vunpack.c.h.b16 %v3522
        %v3846 = vunpack.c.l.b16 %v3523
        %v3847 = vunpack.c.h.b16 %v3523
        %v3848 = vunpack.c.l.b16 %v3524
        %v3849 = vunpack.c.h.b16 %v3524
        %v3850 = vunpack.c.l.b16 %v3525
        %v3851 = vunpack.c.h.b16 %v3525
        %v3852 = vunpack.c.l.b16 %v3526
        %v3853 = vunpack.c.h.b16 %v3526
        %v3854 = vunpack.c.l.b16 %v3527
        %v3855 = vunpack.c.h.b16 %v3527
        %v3856 = vunpack.c.l.b16 %v3528
        %v3857 = vunpack.c.h.b16 %v3528
        %v3858 = vunpack.c.l.b16 %v3529
        %v3859 = vunpack.c.h.b16 %v3529
        %v3860 = vunpack.c.l.b16 %v3530
        %v3861 = vunpack.c.h.b16 %v3530
        %v3862 = vunpack.c.l.b16 %v3531
        %v3863 = vunpack.c.h.b16 %v3531
        %v3864 = vunpack.c.l.b16 %v3532
        %v3865 = vunpack.c.h.b16 %v3532
        %v3866 = vunpack.c.l.b16 %v3533
        %v3867 = vunpack.c.h.b16 %v3533
        %v3868 = vunpack.c.l.b16 %v3534
        %v3869 = vunpack.c.h.b16 %v3534
        %v3870 = vunpack.c.l.b16 %v3535
        %v3871 = vunpack.c.h.b16 %v3535
        %v3872 = vunpack.c.l.b16 %v3536
        %v3873 = vunpack.c.h.b16 %v3536
        %v3874 = vunpack.c.l.b16 %v3537
        %v3875 = vunpack.c.h.b16 %v3537
        %v3876 = vunpack.c.l.b16 %v3538
        %v3877 = vunpack.c.h.b16 %v3538
        %v3878 = vunpack.c.l.b16 %v3539
        %v3879 = vunpack.c.h.b16 %v3539
        %v3880 = vunpack.c.l.b16 %v3540
        %v3881 = vunpack.c.h.b16 %v3540
        %v3882 = vunpack.c.l.b16 %v3541
        %v3883 = vunpack.c.h.b16 %v3541
        %v3884 = vunpack.c.l.b16 %v3542
        %v3885 = vunpack.c.h.b16 %v3542
        %v3886 = vunpack.c.l.b16 %v3543
        %v3887 = vunpack.c.h.b16 %v3543
        %v3888 = vunpack.c.l.b16 %v3544
        %v3889 = vunpack.c.h.b16 %v3544
        %v3890 = vunpack.c.l.b16 %v3545
        %v3891 = vunpack.c.h.b16 %v3545
        %v3892 = vunpack.c.l.b16 %v3546
        %v3893 = vunpack.c.h.b16 %v3546
        %v3894 = vunpack.c.l.b16 %v3547
        %v3895 = vunpack.c.h.b16 %v3547
        %v3896 = vunpack.c.l.b16 %v3548
        %v3897 = vunpack.c.h.b16 %v3548
        %v3898 = vunpack.c.l.b16 %v3549
        %v3899 = vunpack.c.h.b16 %v3549
        %v3900 = vunpack.c.l.b16 %v3550
        %v3901 = vunpack.c.h.b16 %v3550
        %v3902 = vunpack.c.l.b16 %v3551
        %v3903 = vunpack.c.h.b16 %v3551
        %v3904 = vunpack.c.l.b16 %v3552
        %v3905 = vunpack.c.h.b16 %v3552
        %v3906 = vunpack.c.l.b16 %v3553
        %v3907 = vunpack.c.h.b16 %v3553
        %v3908 = vunpack.c.l.b16 %v3554
        %v3909 = vunpack.c.h.b16 %v3554
        %v3910 = vunpack.c.l.b16 %v3555
        %v3911 = vunpack.c.h.b16 %v3555
        %v3912 = vunpack.c.l.b16 %v3556
        %v3913 = vunpack.c.h.b16 %v3556
        %v3914 = vunpack.c.l.b16 %v3557
        %v3915 = vunpack.c.h.b16 %v3557
        %v3916 = vunpack.c.l.b16 %v3558
        %v3917 = vunpack.c.h.b16 %v3558
        %v3918 = vunpack.c.l.b16 %v3559
        %v3919 = vunpack.c.h.b16 %v3559
        %v3920 = vunpack.c.l.b16 %v3560
        %v3921 = vunpack.c.h.b16 %v3560
        %v3922 = vunpack.c.l.b16 %v3561
        %v3923 = vunpack.c.h.b16 %v3561
        %v3924 = vunpack.c.l.b16 %v3562
        %v3925 = vunpack.c.h.b16 %v3562
        %v3926 = vunpack.c.l.b16 %v3563
        %v3927 = vunpack.c.h.b16 %v3563
        %v3928 = vunpack.c.l.b16 %v3564
        %v3929 = vunpack.c.h.b16 %v3564
        %v3930 = vunpack.c.l.b16 %v3565
        %v3931 = vunpack.c.h.b16 %v3565
        %v3932 = vunpack.c.l.b16 %v3566
        %v3933 = vunpack.c.h.b16 %v3566
        %v3934 = vunpack.c.l.b16 %v3567
        %v3935 = vunpack.c.h.b16 %v3567
        %v3936 = vunpack.c.l.b16 %v3568
        %v3937 = vunpack.c.h.b16 %v3568
        %v3938 = vunpack.c.l.b16 %v3569
        %v3939 = vunpack.c.h.b16 %v3569
        %v3940 = vunpack.c.l.b16 %v3570
        %v3941 = vunpack.c.h.b16 %v3570
        %v3942 = vunpack.c.l.b16 %v3571
        %v3943 = vunpack.c.h.b16 %v3571
        %v3944 = vunpack.c.l.b16 %v3572
        %v3945 = vunpack.c.h.b16 %v3572
        %v3946 = vunpack.c.l.b16 %v3573
        %v3947 = vunpack.c.h.b16 %v3573
        %v3948 = vunpack.c.l.b16 %v3574
        %v3949 = vunpack.c.h.b16 %v3574
        %v3950 = vunpack.c.l.b16 %v3575
        %v3951 = vunpack.c.h.b16 %v3575
        %v3952 = vunpack.c.l.b16 %v3576
        %v3953 = vunpack.c.h.b16 %v3576
        %v3954 = vunpack.c.l.b16 %v3577
        %v3955 = vunpack.c.h.b16 %v3577
        %v3956 = vunpack.c.l.b16 %v3578
        %v3957 = vunpack.c.h.b16 %v3578
        %v3958 = vunpack.c.l.b16 %v3579
        %v3959 = vunpack.c.h.b16 %v3579
        %v3960 = vunpack.c.l.b16 %v3580
        %v3961 = vunpack.c.h.b16 %v3580
        %v3962 = vunpack.c.l.b16 %v3581
        %v3963 = vunpack.c.h.b16 %v3581
        %v3964 = vunpack.c.l.b16 %v3582
        %v3965 = vunpack.c.h.b16 %v3582
        %v3966 = vunpack.c.l.b16 %v3583
        %v3967 = vunpack.c.h.b16 %v3583
        %v3968 = vpack.c.b16 %v3716, %v3712
        %v3969 = vpack.c.b16 %v3717, %v3713
        %v3970 = vpack.c.b16 %v3718, %v3714
        %v3971 = vpack.c.b16 %v3719, %v3715
        %v3972 = vpack.c.b16 %v3724, %v3720
        %v3973 = vpack.c.b16 %v3725, %v3721
        %v3974 = vpack.c.b16 %v3726, %v3722
        %v3975 = vpack.c.b16 %v3727, %v3723
        %v3976 = vpack.c.b16 %v3732, %v3728
        %v3977 = vpack.c.b16 %v3733, %v3729
        %v3978 = vpack.c.b16 %v3734, %v3730
        %v3979 = vpack.c.b16 %v3735, %v3731
        %v3980 = vpack.c.b16 %v3740, %v3736
        %v3981 = vpack.c.b16 %v3741, %v3737
        %v3982 = vpack.c.b16 %v3742, %v3738
        %v3983 = vpack.c.b16 %v3743, %v3739
        %v3984 = vpack.c.b16 %v3748, %v3744
        %v3985 = vpack.c.b16 %v3749, %v3745
        %v3986 = vpack.c.b16 %v3750, %v3746
        %v3987 = vpack.c.b16 %v3751, %v3747
        %v3988 = vpack.c.b16 %v3756, %v3752
        %v3989 = vpack.c.b16 %v3757, %v3753
        %v3990 = vpack.c.b16 %v3758, %v3754
        %v3991 = vpack.c.b16 %v3759, %v3755
        %v3992 = vpack.c.b16 %v3764, %v3760
        %v3993 = vpack.c.b16 %v3765, %v3761
        %v3994 = vpack.c.b16 %v3766, %v3762
        %v3995 = vpack.c.b16 %v3767, %v3763
        %v3996 = vpack.c.b16 %v3772, %v3768
        %v3997 = vpack.c.b16 %v3773, %v3769
        %v3998 = vpack.c.b16 %v3774, %v3770
        %v3999 = vpack.c.b16 %v3775, %v3771
        %v4000 = vpack.c.b16 %v3780, %v3776
        %v4001 = vpack.c.b16 %v3781, %v3777
        %v4002 = vpack.c.b16 %v3782, %v3778
        %v4003 = vpack.c.b16 %v3783, %v3779
        %v4004 = vpack.c.b16 %v3788, %v3784
        %v4005 = vpack.c.b16 %v3789, %v3785
        %v4006 = vpack.c.b16 %v3790, %v3786
        %v4007 = vpack.c.b16 %v3791, %v3787
        %v4008 = vpack.c.b16 %v3796, %v3792
        %v4009 = vpack.c.b16 %v3797, %v3793
        %v4010 = vpack.c.b16 %v3798, %v3794
        %v4011 = vpack.c.b16 %v3799, %v3795
        %v4012 = vpack.c.b16 %v3804, %v3800
        %v4013 = vpack.c.b16 %v3805, %v3801
        %v4014 = vpack.c.b16 %v3806, %v3802
        %v4015 = vpack.c.b16 %v3807, %v3803
        %v4016 = vpack.c.b16 %v3812, %v3808
        %v4017 = vpack.c.b16 %v3813, %v3809
        %v4018 = vpack.c.b16 %v3814, %v3810
        %v4019 = vpack.c.b16 %v3815, %v3811
        %v4020 = vpack.c.b16 %v3820, %v3816
        %v4021 = vpack.c.b16 %v3821, %v3817
        %v4022 = vpack.c.b16 %v3822, %v3818
        %v4023 = vpack.c.b16 %v3823, %v3819
        %v4024 = vpack.c.b16 %v3828, %v3824
        %v4025 = vpack.c.b16 %v3829, %v3825
        %v4026 = vpack.c.b16 %v3830, %v3826
        %v4027 = vpack.c.b16 %v3831, %v3827
        %v4028 = vpack.c.b16 %v3836, %v3832
        %v4029 = vpack.c.b16 %v3837, %v3833
        %v4030 = vpack.c.b16 %v3838, %v3834
        %v4031 = vpack.c.b16 %v3839, %v3835
        %v4032 = vpack.c.b16 %v3844, %v3840
        %v4033 = vpack.c.b16 %v3845, %v3841
        %v4034 = vpack.c.b16 %v3846, %v3842
        %v4035 = vpack.c.b16 %v3847, %v3843
        %v4036 = vpack.c.b16 %v3852, %v3848
        %v4037 = vpack.c.b16 %v3853, %v3849
        %v4038 = vpack.c.b16 %v3854, %v3850
        %v4039 = vpack.c.b16 %v3855, %v3851
        %v4040 = vpack.c.b16 %v3860, %v3856
        %v4041 = vpack.c.b16 %v3861, %v3857
        %v4042 = vpack.c.b16 %v3862, %v3858
        %v4043 = vpack.c.b16 %v3863, %v3859
        %v4044 = vpack.c.b16 %v3868, %v3864
        %v4045 = vpack.c.b16 %v3869, %v3865
        %v4046 = vpack.c.b16 %v3870, %v3866
        %v4047 = vpack.c.b16 %v3871, %v3867
        %v4048 = vpack.c.b16 %v3876, %v3872
        %v4049 = vpack.c.b16 %v3877, %v3873
        %v4050 = vpack.c.b16 %v3878, %v3874
        %v4051 = vpack.c.b16 %v3879, %v3875
        %v4052 = vpack.c.b16 %v3884, %v3880
        %v4053 = vpack.c.b16 %v3885, %v3881
        %v4054 = vpack.c.b16 %v3886, %v3882
        %v4055 = vpack.c.b16 %v3887, %v3883
        %v4056 = vpack.c.b16 %v3892, %v3888
        %v4057 = vpack.c.b16 %v3893, %v3889
        %v4058 = vpack.c.b16 %v3894, %v3890
        %v4059 = vpack.c.b16 %v3895, %v3891
        %v4060 = vpack.c.b16 %v3900, %v3896
        %v4061 = vpack.c.b16 %v3901, %v3897
        %v4062 = vpack.c.b16 %v3902, %v3898
        %v4063 = vpack.c.b16 %v3903, %v3899
        %v4064 = vpack.c.b16 %v3908, %v3904
        %v4065 = vpack.c.b16 %v3909, %v3905
        %v4066 = vpack.c.b16 %v3910, %v3906
        %v4067 = vpack.c.b16 %v3911, %v3907
        %v4068 = vpack.c.b16 %v3916, %v3912
        %v4069 = vpack.c.b16 %v3917, %v3913
        %v4070 = vpack.c.b16 %v3918, %v3914
        %v4071 = vpack.c.b16 %v3919, %v3915
        %v4072 = vpack.c.b16 %v3924, %v3920
        %v4073 = vpack.c.b16 %v3925, %v3921
        %v4074 = vpack.c.b16 %v3926, %v3922
        %v4075 = vpack.c.b16 %v3927, %v3923
        %v4076 = vpack.c.b16 %v3932, %v3928
        %v4077 = vpack.c.b16 %v3933, %v3929
        %v4078 = vpack.c.b16 %v3934, %v3930
        %v4079 = vpack.c.b16 %v3935, %v3931
        %v4080 = vpack.c.b16 %v3940, %v3936
        %v4081 = vpack.c.b16 %v3941, %v3937
        %v4082 = vpack.c.b16 %v3942, %v3938
        %v4083 = vpack.c.b16 %v3943, %v3939
        %v4084 = vpack.c.b16 %v3948, %v3944
        %v4085 = vpack.c.b16 %v3949, %v3945
        %v4086 = vpack.c.b16 %v3950, %v3946
        %v4087 = vpack.c.b16 %v3951, %v3947
        %v4088 = vpack.c.b16 %v3956, %v3952
        %v4089 = vpack.c.b16 %v3957, %v3953
        %v4090 = vpack.c.b16 %v3958, %v3954
        %v4091 = vpack.c.b16 %v3959, %v3955
        %v4092 = vpack.c.b16 %v3964, %v3960
        %v4093 = vpack.c.b16 %v3965, %v3961
        %v4094 = vpack.c.b16 %v3966, %v3962
        %v4095 = vpack.c.b16 %v3967, %v3963
        %4224 = vmatprep.subr.bf16.mxu0 %v3997
        %4225 = vmatpush1.bf16.msra.mxu0 %v3996
        %4226 = vmatprep.subr.bf16.mxu0 %v3993
        %4227 = vmatpush1.bf16.msra.mxu0 %v3992
        %4228 = vmatprep.subr.bf16.mxu0 %v3989
        %4229 = vmatpush1.bf16.msra.mxu0 %v3988
        %4230 = vmatprep.subr.bf16.mxu0 %v3985
        %4231 = vmatpush1.bf16.msra.mxu0 %v3984
        %4232 = vmatprep.subr.bf16.mxu0 %v3981
        %4233 = vmatpush1.bf16.msra.mxu0 %v3980
        %4234 = vmatprep.subr.bf16.mxu0 %v3977
        %4235 = vmatpush1.bf16.msra.mxu0 %v3976
        %4236 = vmatprep.subr.bf16.mxu0 %v3973
        %4237 = vmatpush1.bf16.msra.mxu0 %v3972
        %4238 = vmatprep.subr.bf16.mxu0 %v3969
        %4239 = vmatpush1.bf16.msra.mxu0 %v3968
        %4240 = vmatprep.subr.bf16.mxu0 %v4029
        %4241 = vmatpush2.bf16.msra.mxu0 %v4028
        %4242 = vmatprep.subr.bf16.mxu0 %v4025
        %4243 = vmatpush2.bf16.msra.mxu0 %v4024
        %4244 = vmatprep.subr.bf16.mxu0 %v4021
        %4245 = vmatpush2.bf16.msra.mxu0 %v4020
        %4246 = vmatprep.subr.bf16.mxu0 %v4017
        %4247 = vmatpush2.bf16.msra.mxu0 %v4016
        %4248 = vmatprep.subr.bf16.mxu0 %v4013
        %4249 = vmatpush2.bf16.msra.mxu0 %v4012
        %4250 = vmatprep.subr.bf16.mxu0 %v4009
        %4251 = vmatpush2.bf16.msra.mxu0 %v4008
        %4252 = vmatprep.subr.bf16.mxu0 %v4005
        %4253 = vmatpush2.bf16.msra.mxu0 %v4004
        %4254 = vmatprep.subr.bf16.mxu0 %v4001
        %4255 = vmatpush2.bf16.msra.mxu0 %v4000
        %4256 = vmatprep.mubr.bf16.mxu0 %v3320
        %4257 = vmatmul.mubr.bf16.gmra.mxu0 %v3319
        %v4258 = vpop.f32.mrf.mxu0
        %v4259 = vadd.f32 0.0, %v4258
        %v4260 = vpop.f32.mrf.mxu0
        %v4261 = vadd.f32 0.0, %v4260
        %v4262 = vpop.f32.mrf.mxu0
        %v4263 = vadd.f32 0.0, %v4262
        %v4264 = vpop.f32.mrf.mxu0
        %v4265 = vadd.f32 0.0, %v4264
        %4266 = vdwg.mxu0
        %4267 = vmatprep.subr.bf16.mxu0 %v4061
        %4268 = vmatpush1.bf16.msra.mxu0 %v4060
        %4269 = vmatprep.subr.bf16.mxu0 %v4057
        %4270 = vmatpush1.bf16.msra.mxu0 %v4056
        %4271 = vmatprep.subr.bf16.mxu0 %v4053
        %4272 = vmatpush1.bf16.msra.mxu0 %v4052
        %4273 = vmatprep.subr.bf16.mxu0 %v4049
        %4274 = vmatpush1.bf16.msra.mxu0 %v4048
        %4275 = vmatprep.subr.bf16.mxu0 %v4045
        %4276 = vmatpush1.bf16.msra.mxu0 %v4044
        %4277 = vmatprep.subr.bf16.mxu0 %v4041
        %4278 = vmatpush1.bf16.msra.mxu0 %v4040
        %4279 = vmatprep.subr.bf16.mxu0 %v4037
        %4280 = vmatpush1.bf16.msra.mxu0 %v4036
        %4281 = vmatprep.subr.bf16.mxu0 %v4033
        %4282 = vmatpush1.bf16.msra.mxu0 %v4032
        %4283 = vmatprep.subr.bf16.mxu0 %v4093
        %4284 = vmatpush2.bf16.msra.mxu0 %v4092
        %4285 = vmatprep.subr.bf16.mxu0 %v4089
        %4286 = vmatpush2.bf16.msra.mxu0 %v4088
        %4287 = vmatprep.subr.bf16.mxu0 %v4085
        %4288 = vmatpush2.bf16.msra.mxu0 %v4084
        %4289 = vmatprep.subr.bf16.mxu0 %v4081
        %4290 = vmatpush2.bf16.msra.mxu0 %v4080
        %4291 = vmatprep.subr.bf16.mxu0 %v4077
        %4292 = vmatpush2.bf16.msra.mxu0 %v4076
        %4293 = vmatprep.subr.bf16.mxu0 %v4073
        %4294 = vmatpush2.bf16.msra.mxu0 %v4072
        %4295 = vmatprep.subr.bf16.mxu0 %v4069
        %4296 = vmatpush2.bf16.msra.mxu0 %v4068
        %4297 = vmatprep.subr.bf16.mxu0 %v4065
        %4298 = vmatpush2.bf16.msra.mxu0 %v4064
        %4299 = vmatprep.mubr.bf16.mxu0 %v3322
        %4300 = vmatmul.mubr.bf16.gmra.mxu0 %v3321
        %v4301 = vpop.f32.mrf.mxu0
        %v4302 = vadd.f32 %v4259, %v4301
        %v4303 = vpop.f32.mrf.mxu0
        %v4304 = vadd.f32 %v4261, %v4303
        %v4305 = vpop.f32.mrf.mxu0
        %v4306 = vadd.f32 %v4263, %v4305
        %v4307 = vpop.f32.mrf.mxu0
        %v4308 = vadd.f32 %v4265, %v4307
        %4309 = vdwg.mxu0
        %4310 = vmatprep.subr.bf16.mxu0 %v3999
        %4311 = vmatpush1.bf16.msra.mxu0 %v3998
        %4312 = vmatprep.subr.bf16.mxu0 %v3995
        %4313 = vmatpush1.bf16.msra.mxu0 %v3994
        %4314 = vmatprep.subr.bf16.mxu0 %v3991
        %4315 = vmatpush1.bf16.msra.mxu0 %v3990
        %4316 = vmatprep.subr.bf16.mxu0 %v3987
        %4317 = vmatpush1.bf16.msra.mxu0 %v3986
        %4318 = vmatprep.subr.bf16.mxu0 %v3983
        %4319 = vmatpush1.bf16.msra.mxu0 %v3982
        %4320 = vmatprep.subr.bf16.mxu0 %v3979
        %4321 = vmatpush1.bf16.msra.mxu0 %v3978
        %4322 = vmatprep.subr.bf16.mxu0 %v3975
        %4323 = vmatpush1.bf16.msra.mxu0 %v3974
        %4324 = vmatprep.subr.bf16.mxu0 %v3971
        %4325 = vmatpush1.bf16.msra.mxu0 %v3970
        %4326 = vmatprep.subr.bf16.mxu0 %v4031
        %4327 = vmatpush2.bf16.msra.mxu0 %v4030
        %4328 = vmatprep.subr.bf16.mxu0 %v4027
        %4329 = vmatpush2.bf16.msra.mxu0 %v4026
        %4330 = vmatprep.subr.bf16.mxu0 %v4023
        %4331 = vmatpush2.bf16.msra.mxu0 %v4022
        %4332 = vmatprep.subr.bf16.mxu0 %v4019
        %4333 = vmatpush2.bf16.msra.mxu0 %v4018
        %4334 = vmatprep.subr.bf16.mxu0 %v4015
        %4335 = vmatpush2.bf16.msra.mxu0 %v4014
        %4336 = vmatprep.subr.bf16.mxu0 %v4011
        %4337 = vmatpush2.bf16.msra.mxu0 %v4010
        %4338 = vmatprep.subr.bf16.mxu0 %v4007
        %4339 = vmatpush2.bf16.msra.mxu0 %v4006
        %4340 = vmatprep.subr.bf16.mxu0 %v4003
        %4341 = vmatpush2.bf16.msra.mxu0 %v4002
        %4342 = vmatprep.mubr.bf16.mxu0 %v3320
        %4343 = vmatmul.mubr.bf16.gmra.mxu0 %v3319
        %v4344 = vpop.f32.mrf.mxu0
        %v4345 = vadd.f32 0.0, %v4344
        %v4346 = vpop.f32.mrf.mxu0
        %v4347 = vadd.f32 0.0, %v4346
        %v4348 = vpop.f32.mrf.mxu0
        %v4349 = vadd.f32 0.0, %v4348
        %v4350 = vpop.f32.mrf.mxu0
        %v4351 = vadd.f32 0.0, %v4350
        %4352 = vdwg.mxu0
        %4353 = vmatprep.subr.bf16.mxu0 %v4063
        %4354 = vmatpush1.bf16.msra.mxu0 %v4062
        %4355 = vmatprep.subr.bf16.mxu0 %v4059
        %4356 = vmatpush1.bf16.msra.mxu0 %v4058
        %4357 = vmatprep.subr.bf16.mxu0 %v4055
        %4358 = vmatpush1.bf16.msra.mxu0 %v4054
        %4359 = vmatprep.subr.bf16.mxu0 %v4051
        %4360 = vmatpush1.bf16.msra.mxu0 %v4050
        %4361 = vmatprep.subr.bf16.mxu0 %v4047
        %4362 = vmatpush1.bf16.msra.mxu0 %v4046
        %4363 = vmatprep.subr.bf16.mxu0 %v4043
        %4364 = vmatpush1.bf16.msra.mxu0 %v4042
        %4365 = vmatprep.subr.bf16.mxu0 %v4039
        %4366 = vmatpush1.bf16.msra.mxu0 %v4038
        %4367 = vmatprep.subr.bf16.mxu0 %v4035
        %4368 = vmatpush1.bf16.msra.mxu0 %v4034
        %4369 = vmatprep.subr.bf16.mxu0 %v4095
        %4370 = vmatpush2.bf16.msra.mxu0 %v4094
        %4371 = vmatprep.subr.bf16.mxu0 %v4091
        %4372 = vmatpush2.bf16.msra.mxu0 %v4090
        %4373 = vmatprep.subr.bf16.mxu0 %v4087
        %4374 = vmatpush2.bf16.msra.mxu0 %v4086
        %4375 = vmatprep.subr.bf16.mxu0 %v4083
        %4376 = vmatpush2.bf16.msra.mxu0 %v4082
        %4377 = vmatprep.subr.bf16.mxu0 %v4079
        %4378 = vmatpush2.bf16.msra.mxu0 %v4078
        %4379 = vmatprep.subr.bf16.mxu0 %v4075
        %4380 = vmatpush2.bf16.msra.mxu0 %v4074
        %4381 = vmatprep.subr.bf16.mxu0 %v4071
        %4382 = vmatpush2.bf16.msra.mxu0 %v4070
        %4383 = vmatprep.subr.bf16.mxu0 %v4067
        %4384 = vmatpush2.bf16.msra.mxu0 %v4066
        %4385 = vmatprep.mubr.bf16.mxu0 %v3322
        %4386 = vmatmul.mubr.bf16.gmra.mxu0 %v3321
        %v4387 = vpop.f32.mrf.mxu0
        %v4388 = vadd.f32 %v4345, %v4387
        %v4389 = vpop.f32.mrf.mxu0
        %v4390 = vadd.f32 %v4347, %v4389
        %v4391 = vpop.f32.mrf.mxu0
        %v4392 = vadd.f32 %v4349, %v4391
        %v4393 = vpop.f32.mrf.mxu0
        %v4394 = vadd.f32 %v4351, %v4393
        %4395 = vdwg.mxu0
        %v4524 = vunpack.c.l.b16 %v3327
        %v4525 = vunpack.c.h.b16 %v3327
        %v4526 = vunpack.c.l.b16 %v3328
        %v4527 = vunpack.c.h.b16 %v3328
        %v4528 = vunpack.c.l.b16 %v3329
        %v4529 = vunpack.c.h.b16 %v3329
        %v4530 = vunpack.c.l.b16 %v3330
        %v4531 = vunpack.c.h.b16 %v3330
        %v4532 = vunpack.c.l.b16 %v3331
        %v4533 = vunpack.c.h.b16 %v3331
        %v4534 = vunpack.c.l.b16 %v3332
        %v4535 = vunpack.c.h.b16 %v3332
        %v4536 = vunpack.c.l.b16 %v3333
        %v4537 = vunpack.c.h.b16 %v3333
        %v4538 = vunpack.c.l.b16 %v3334
        %v4539 = vunpack.c.h.b16 %v3334
        %v4540 = vunpack.c.l.b16 %v3335
        %v4541 = vunpack.c.h.b16 %v3335
        %v4542 = vunpack.c.l.b16 %v3336
        %v4543 = vunpack.c.h.b16 %v3336
        %v4544 = vunpack.c.l.b16 %v3337
        %v4545 = vunpack.c.h.b16 %v3337
        %v4546 = vunpack.c.l.b16 %v3338
        %v4547 = vunpack.c.h.b16 %v3338
        %v4548 = vunpack.c.l.b16 %v3339
        %v4549 = vunpack.c.h.b16 %v3339
        %v4550 = vunpack.c.l.b16 %v3340
        %v4551 = vunpack.c.h.b16 %v3340
        %v4552 = vunpack.c.l.b16 %v3341
        %v4553 = vunpack.c.h.b16 %v3341
        %v4554 = vunpack.c.l.b16 %v3342
        %v4555 = vunpack.c.h.b16 %v3342
        %v4556 = vunpack.c.l.b16 %v3343
        %v4557 = vunpack.c.h.b16 %v3343
        %v4558 = vunpack.c.l.b16 %v3344
        %v4559 = vunpack.c.h.b16 %v3344
        %v4560 = vunpack.c.l.b16 %v3345
        %v4561 = vunpack.c.h.b16 %v3345
        %v4562 = vunpack.c.l.b16 %v3346
        %v4563 = vunpack.c.h.b16 %v3346
        %v4564 = vunpack.c.l.b16 %v3347
        %v4565 = vunpack.c.h.b16 %v3347
        %v4566 = vunpack.c.l.b16 %v3348
        %v4567 = vunpack.c.h.b16 %v3348
        %v4568 = vunpack.c.l.b16 %v3349
        %v4569 = vunpack.c.h.b16 %v3349
        %v4570 = vunpack.c.l.b16 %v3350
        %v4571 = vunpack.c.h.b16 %v3350
        %v4572 = vunpack.c.l.b16 %v3351
        %v4573 = vunpack.c.h.b16 %v3351
        %v4574 = vunpack.c.l.b16 %v3352
        %v4575 = vunpack.c.h.b16 %v3352
        %v4576 = vunpack.c.l.b16 %v3353
        %v4577 = vunpack.c.h.b16 %v3353
        %v4578 = vunpack.c.l.b16 %v3354
        %v4579 = vunpack.c.h.b16 %v3354
        %v4580 = vunpack.c.l.b16 %v3355
        %v4581 = vunpack.c.h.b16 %v3355
        %v4582 = vunpack.c.l.b16 %v3356
        %v4583 = vunpack.c.h.b16 %v3356
        %v4584 = vunpack.c.l.b16 %v3357
        %v4585 = vunpack.c.h.b16 %v3357
        %v4586 = vunpack.c.l.b16 %v3358
        %v4587 = vunpack.c.h.b16 %v3358
        %v4588 = vunpack.c.l.b16 %v3359
        %v4589 = vunpack.c.h.b16 %v3359
        %v4590 = vunpack.c.l.b16 %v3360
        %v4591 = vunpack.c.h.b16 %v3360
        %v4592 = vunpack.c.l.b16 %v3361
        %v4593 = vunpack.c.h.b16 %v3361
        %v4594 = vunpack.c.l.b16 %v3362
        %v4595 = vunpack.c.h.b16 %v3362
        %v4596 = vunpack.c.l.b16 %v3363
        %v4597 = vunpack.c.h.b16 %v3363
        %v4598 = vunpack.c.l.b16 %v3364
        %v4599 = vunpack.c.h.b16 %v3364
        %v4600 = vunpack.c.l.b16 %v3365
        %v4601 = vunpack.c.h.b16 %v3365
        %v4602 = vunpack.c.l.b16 %v3366
        %v4603 = vunpack.c.h.b16 %v3366
        %v4604 = vunpack.c.l.b16 %v3367
        %v4605 = vunpack.c.h.b16 %v3367
        %v4606 = vunpack.c.l.b16 %v3368
        %v4607 = vunpack.c.h.b16 %v3368
        %v4608 = vunpack.c.l.b16 %v3369
        %v4609 = vunpack.c.h.b16 %v3369
        %v4610 = vunpack.c.l.b16 %v3370
        %v4611 = vunpack.c.h.b16 %v3370
        %v4612 = vunpack.c.l.b16 %v3371
        %v4613 = vunpack.c.h.b16 %v3371
        %v4614 = vunpack.c.l.b16 %v3372
        %v4615 = vunpack.c.h.b16 %v3372
        %v4616 = vunpack.c.l.b16 %v3373
        %v4617 = vunpack.c.h.b16 %v3373
        %v4618 = vunpack.c.l.b16 %v3374
        %v4619 = vunpack.c.h.b16 %v3374
        %v4620 = vunpack.c.l.b16 %v3375
        %v4621 = vunpack.c.h.b16 %v3375
        %v4622 = vunpack.c.l.b16 %v3376
        %v4623 = vunpack.c.h.b16 %v3376
        %v4624 = vunpack.c.l.b16 %v3377
        %v4625 = vunpack.c.h.b16 %v3377
        %v4626 = vunpack.c.l.b16 %v3378
        %v4627 = vunpack.c.h.b16 %v3378
        %v4628 = vunpack.c.l.b16 %v3379
        %v4629 = vunpack.c.h.b16 %v3379
        %v4630 = vunpack.c.l.b16 %v3380
        %v4631 = vunpack.c.h.b16 %v3380
        %v4632 = vunpack.c.l.b16 %v3381
        %v4633 = vunpack.c.h.b16 %v3381
        %v4634 = vunpack.c.l.b16 %v3382
        %v4635 = vunpack.c.h.b16 %v3382
        %v4636 = vunpack.c.l.b16 %v3383
        %v4637 = vunpack.c.h.b16 %v3383
        %v4638 = vunpack.c.l.b16 %v3384
        %v4639 = vunpack.c.h.b16 %v3384
        %v4640 = vunpack.c.l.b16 %v3385
        %v4641 = vunpack.c.h.b16 %v3385
        %v4642 = vunpack.c.l.b16 %v3386
        %v4643 = vunpack.c.h.b16 %v3386
        %v4644 = vunpack.c.l.b16 %v3387
        %v4645 = vunpack.c.h.b16 %v3387
        %v4646 = vunpack.c.l.b16 %v3388
        %v4647 = vunpack.c.h.b16 %v3388
        %v4648 = vunpack.c.l.b16 %v3389
        %v4649 = vunpack.c.h.b16 %v3389
        %v4650 = vunpack.c.l.b16 %v3390
        %v4651 = vunpack.c.h.b16 %v3390
        %v4652 = vunpack.c.l.b16 %v3391
        %v4653 = vunpack.c.h.b16 %v3391
        %v4654 = vunpack.c.l.b16 %v3392
        %v4655 = vunpack.c.h.b16 %v3392
        %v4656 = vunpack.c.l.b16 %v3393
        %v4657 = vunpack.c.h.b16 %v3393
        %v4658 = vunpack.c.l.b16 %v3394
        %v4659 = vunpack.c.h.b16 %v3394
        %v4660 = vunpack.c.l.b16 %v3395
        %v4661 = vunpack.c.h.b16 %v3395
        %v4662 = vunpack.c.l.b16 %v3396
        %v4663 = vunpack.c.h.b16 %v3396
        %v4664 = vunpack.c.l.b16 %v3397
        %v4665 = vunpack.c.h.b16 %v3397
        %v4666 = vunpack.c.l.b16 %v3398
        %v4667 = vunpack.c.h.b16 %v3398
        %v4668 = vunpack.c.l.b16 %v3399
        %v4669 = vunpack.c.h.b16 %v3399
        %v4670 = vunpack.c.l.b16 %v3400
        %v4671 = vunpack.c.h.b16 %v3400
        %v4672 = vunpack.c.l.b16 %v3401
        %v4673 = vunpack.c.h.b16 %v3401
        %v4674 = vunpack.c.l.b16 %v3402
        %v4675 = vunpack.c.h.b16 %v3402
        %v4676 = vunpack.c.l.b16 %v3403
        %v4677 = vunpack.c.h.b16 %v3403
        %v4678 = vunpack.c.l.b16 %v3404
        %v4679 = vunpack.c.h.b16 %v3404
        %v4680 = vunpack.c.l.b16 %v3405
        %v4681 = vunpack.c.h.b16 %v3405
        %v4682 = vunpack.c.l.b16 %v3406
        %v4683 = vunpack.c.h.b16 %v3406
        %v4684 = vunpack.c.l.b16 %v3407
        %v4685 = vunpack.c.h.b16 %v3407
        %v4686 = vunpack.c.l.b16 %v3408
        %v4687 = vunpack.c.h.b16 %v3408
        %v4688 = vunpack.c.l.b16 %v3409
        %v4689 = vunpack.c.h.b16 %v3409
        %v4690 = vunpack.c.l.b16 %v3410
        %v4691 = vunpack.c.h.b16 %v3410
        %v4692 = vunpack.c.l.b16 %v3411
        %v4693 = vunpack.c.h.b16 %v3411
        %v4694 = vunpack.c.l.b16 %v3412
        %v4695 = vunpack.c.h.b16 %v3412
        %v4696 = vunpack.c.l.b16 %v3413
        %v4697 = vunpack.c.h.b16 %v3413
        %v4698 = vunpack.c.l.b16 %v3414
        %v4699 = vunpack.c.h.b16 %v3414
        %v4700 = vunpack.c.l.b16 %v3415
        %v4701 = vunpack.c.h.b16 %v3415
        %v4702 = vunpack.c.l.b16 %v3416
        %v4703 = vunpack.c.h.b16 %v3416
        %v4704 = vunpack.c.l.b16 %v3417
        %v4705 = vunpack.c.h.b16 %v3417
        %v4706 = vunpack.c.l.b16 %v3418
        %v4707 = vunpack.c.h.b16 %v3418
        %v4708 = vunpack.c.l.b16 %v3419
        %v4709 = vunpack.c.h.b16 %v3419
        %v4710 = vunpack.c.l.b16 %v3420
        %v4711 = vunpack.c.h.b16 %v3420
        %v4712 = vunpack.c.l.b16 %v3421
        %v4713 = vunpack.c.h.b16 %v3421
        %v4714 = vunpack.c.l.b16 %v3422
        %v4715 = vunpack.c.h.b16 %v3422
        %v4716 = vunpack.c.l.b16 %v3423
        %v4717 = vunpack.c.h.b16 %v3423
        %v4718 = vunpack.c.l.b16 %v3424
        %v4719 = vunpack.c.h.b16 %v3424
        %v4720 = vunpack.c.l.b16 %v3425
        %v4721 = vunpack.c.h.b16 %v3425
        %v4722 = vunpack.c.l.b16 %v3426
        %v4723 = vunpack.c.h.b16 %v3426
        %v4724 = vunpack.c.l.b16 %v3427
        %v4725 = vunpack.c.h.b16 %v3427
        %v4726 = vunpack.c.l.b16 %v3428
        %v4727 = vunpack.c.h.b16 %v3428
        %v4728 = vunpack.c.l.b16 %v3429
        %v4729 = vunpack.c.h.b16 %v3429
        %v4730 = vunpack.c.l.b16 %v3430
        %v4731 = vunpack.c.h.b16 %v3430
        %v4732 = vunpack.c.l.b16 %v3431
        %v4733 = vunpack.c.h.b16 %v3431
        %v4734 = vunpack.c.l.b16 %v3432
        %v4735 = vunpack.c.h.b16 %v3432
        %v4736 = vunpack.c.l.b16 %v3433
        %v4737 = vunpack.c.h.b16 %v3433
        %v4738 = vunpack.c.l.b16 %v3434
        %v4739 = vunpack.c.h.b16 %v3434
        %v4740 = vunpack.c.l.b16 %v3435
        %v4741 = vunpack.c.h.b16 %v3435
        %v4742 = vunpack.c.l.b16 %v3436
        %v4743 = vunpack.c.h.b16 %v3436
        %v4744 = vunpack.c.l.b16 %v3437
        %v4745 = vunpack.c.h.b16 %v3437
        %v4746 = vunpack.c.l.b16 %v3438
        %v4747 = vunpack.c.h.b16 %v3438
        %v4748 = vunpack.c.l.b16 %v3439
        %v4749 = vunpack.c.h.b16 %v3439
        %v4750 = vunpack.c.l.b16 %v3440
        %v4751 = vunpack.c.h.b16 %v3440
        %v4752 = vunpack.c.l.b16 %v3441
        %v4753 = vunpack.c.h.b16 %v3441
        %v4754 = vunpack.c.l.b16 %v3442
        %v4755 = vunpack.c.h.b16 %v3442
        %v4756 = vunpack.c.l.b16 %v3443
        %v4757 = vunpack.c.h.b16 %v3443
        %v4758 = vunpack.c.l.b16 %v3444
        %v4759 = vunpack.c.h.b16 %v3444
        %v4760 = vunpack.c.l.b16 %v3445
        %v4761 = vunpack.c.h.b16 %v3445
        %v4762 = vunpack.c.l.b16 %v3446
        %v4763 = vunpack.c.h.b16 %v3446
        %v4764 = vunpack.c.l.b16 %v3447
        %v4765 = vunpack.c.h.b16 %v3447
        %v4766 = vunpack.c.l.b16 %v3448
        %v4767 = vunpack.c.h.b16 %v3448
        %v4768 = vunpack.c.l.b16 %v3449
        %v4769 = vunpack.c.h.b16 %v3449
        %v4770 = vunpack.c.l.b16 %v3450
        %v4771 = vunpack.c.h.b16 %v3450
        %v4772 = vunpack.c.l.b16 %v3451
        %v4773 = vunpack.c.h.b16 %v3451
        %v4774 = vunpack.c.l.b16 %v3452
        %v4775 = vunpack.c.h.b16 %v3452
        %v4776 = vunpack.c.l.b16 %v3453
        %v4777 = vunpack.c.h.b16 %v3453
        %v4778 = vunpack.c.l.b16 %v3454
        %v4779 = vunpack.c.h.b16 %v3454
        %v4780 = vpack.c.b16 %v4528, %v4524
        %v4781 = vpack.c.b16 %v4529, %v4525
        %v4782 = vpack.c.b16 %v4530, %v4526
        %v4783 = vpack.c.b16 %v4531, %v4527
        %v4784 = vpack.c.b16 %v4536, %v4532
        %v4785 = vpack.c.b16 %v4537, %v4533
        %v4786 = vpack.c.b16 %v4538, %v4534
        %v4787 = vpack.c.b16 %v4539, %v4535
        %v4788 = vpack.c.b16 %v4544, %v4540
        %v4789 = vpack.c.b16 %v4545, %v4541
        %v4790 = vpack.c.b16 %v4546, %v4542
        %v4791 = vpack.c.b16 %v4547, %v4543
        %v4792 = vpack.c.b16 %v4552, %v4548
        %v4793 = vpack.c.b16 %v4553, %v4549
        %v4794 = vpack.c.b16 %v4554, %v4550
        %v4795 = vpack.c.b16 %v4555, %v4551
        %v4796 = vpack.c.b16 %v4560, %v4556
        %v4797 = vpack.c.b16 %v4561, %v4557
        %v4798 = vpack.c.b16 %v4562, %v4558
        %v4799 = vpack.c.b16 %v4563, %v4559
        %v4800 = vpack.c.b16 %v4568, %v4564
        %v4801 = vpack.c.b16 %v4569, %v4565
        %v4802 = vpack.c.b16 %v4570, %v4566
        %v4803 = vpack.c.b16 %v4571, %v4567
        %v4804 = vpack.c.b16 %v4576, %v4572
        %v4805 = vpack.c.b16 %v4577, %v4573
        %v4806 = vpack.c.b16 %v4578, %v4574
        %v4807 = vpack.c.b16 %v4579, %v4575
        %v4808 = vpack.c.b16 %v4584, %v4580
        %v4809 = vpack.c.b16 %v4585, %v4581
        %v4810 = vpack.c.b16 %v4586, %v4582
        %v4811 = vpack.c.b16 %v4587, %v4583
        %v4812 = vpack.c.b16 %v4592, %v4588
        %v4813 = vpack.c.b16 %v4593, %v4589
        %v4814 = vpack.c.b16 %v4594, %v4590
        %v4815 = vpack.c.b16 %v4595, %v4591
        %v4816 = vpack.c.b16 %v4600, %v4596
        %v4817 = vpack.c.b16 %v4601, %v4597
        %v4818 = vpack.c.b16 %v4602, %v4598
        %v4819 = vpack.c.b16 %v4603, %v4599
        %v4820 = vpack.c.b16 %v4608, %v4604
        %v4821 = vpack.c.b16 %v4609, %v4605
        %v4822 = vpack.c.b16 %v4610, %v4606
        %v4823 = vpack.c.b16 %v4611, %v4607
        %v4824 = vpack.c.b16 %v4616, %v4612
        %v4825 = vpack.c.b16 %v4617, %v4613
        %v4826 = vpack.c.b16 %v4618, %v4614
        %v4827 = vpack.c.b16 %v4619, %v4615
        %v4828 = vpack.c.b16 %v4624, %v4620
        %v4829 = vpack.c.b16 %v4625, %v4621
        %v4830 = vpack.c.b16 %v4626, %v4622
        %v4831 = vpack.c.b16 %v4627, %v4623
        %v4832 = vpack.c.b16 %v4632, %v4628
        %v4833 = vpack.c.b16 %v4633, %v4629
        %v4834 = vpack.c.b16 %v4634, %v4630
        %v4835 = vpack.c.b16 %v4635, %v4631
        %v4836 = vpack.c.b16 %v4640, %v4636
        %v4837 = vpack.c.b16 %v4641, %v4637
        %v4838 = vpack.c.b16 %v4642, %v4638
        %v4839 = vpack.c.b16 %v4643, %v4639
        %v4840 = vpack.c.b16 %v4648, %v4644
        %v4841 = vpack.c.b16 %v4649, %v4645
        %v4842 = vpack.c.b16 %v4650, %v4646
        %v4843 = vpack.c.b16 %v4651, %v4647
        %v4844 = vpack.c.b16 %v4656, %v4652
        %v4845 = vpack.c.b16 %v4657, %v4653
        %v4846 = vpack.c.b16 %v4658, %v4654
        %v4847 = vpack.c.b16 %v4659, %v4655
        %v4848 = vpack.c.b16 %v4664, %v4660
        %v4849 = vpack.c.b16 %v4665, %v4661
        %v4850 = vpack.c.b16 %v4666, %v4662
        %v4851 = vpack.c.b16 %v4667, %v4663
        %v4852 = vpack.c.b16 %v4672, %v4668
        %v4853 = vpack.c.b16 %v4673, %v4669
        %v4854 = vpack.c.b16 %v4674, %v4670
        %v4855 = vpack.c.b16 %v4675, %v4671
        %v4856 = vpack.c.b16 %v4680, %v4676
        %v4857 = vpack.c.b16 %v4681, %v4677
        %v4858 = vpack.c.b16 %v4682, %v4678
        %v4859 = vpack.c.b16 %v4683, %v4679
        %v4860 = vpack.c.b16 %v4688, %v4684
        %v4861 = vpack.c.b16 %v4689, %v4685
        %v4862 = vpack.c.b16 %v4690, %v4686
        %v4863 = vpack.c.b16 %v4691, %v4687
        %v4864 = vpack.c.b16 %v4696, %v4692
        %v4865 = vpack.c.b16 %v4697, %v4693
        %v4866 = vpack.c.b16 %v4698, %v4694
        %v4867 = vpack.c.b16 %v4699, %v4695
        %v4868 = vpack.c.b16 %v4704, %v4700
        %v4869 = vpack.c.b16 %v4705, %v4701
        %v4870 = vpack.c.b16 %v4706, %v4702
        %v4871 = vpack.c.b16 %v4707, %v4703
        %v4872 = vpack.c.b16 %v4712, %v4708
        %v4873 = vpack.c.b16 %v4713, %v4709
        %v4874 = vpack.c.b16 %v4714, %v4710
        %v4875 = vpack.c.b16 %v4715, %v4711
        %v4876 = vpack.c.b16 %v4720, %v4716
        %v4877 = vpack.c.b16 %v4721, %v4717
        %v4878 = vpack.c.b16 %v4722, %v4718
        %v4879 = vpack.c.b16 %v4723, %v4719
        %v4880 = vpack.c.b16 %v4728, %v4724
        %v4881 = vpack.c.b16 %v4729, %v4725
        %v4882 = vpack.c.b16 %v4730, %v4726
        %v4883 = vpack.c.b16 %v4731, %v4727
        %v4884 = vpack.c.b16 %v4736, %v4732
        %v4885 = vpack.c.b16 %v4737, %v4733
        %v4886 = vpack.c.b16 %v4738, %v4734
        %v4887 = vpack.c.b16 %v4739, %v4735
        %v4888 = vpack.c.b16 %v4744, %v4740
        %v4889 = vpack.c.b16 %v4745, %v4741
        %v4890 = vpack.c.b16 %v4746, %v4742
        %v4891 = vpack.c.b16 %v4747, %v4743
        %v4892 = vpack.c.b16 %v4752, %v4748
        %v4893 = vpack.c.b16 %v4753, %v4749
        %v4894 = vpack.c.b16 %v4754, %v4750
        %v4895 = vpack.c.b16 %v4755, %v4751
        %v4896 = vpack.c.b16 %v4760, %v4756
        %v4897 = vpack.c.b16 %v4761, %v4757
        %v4898 = vpack.c.b16 %v4762, %v4758
        %v4899 = vpack.c.b16 %v4763, %v4759
        %v4900 = vpack.c.b16 %v4768, %v4764
        %v4901 = vpack.c.b16 %v4769, %v4765
        %v4902 = vpack.c.b16 %v4770, %v4766
        %v4903 = vpack.c.b16 %v4771, %v4767
        %v4904 = vpack.c.b16 %v4776, %v4772
        %v4905 = vpack.c.b16 %v4777, %v4773
        %v4906 = vpack.c.b16 %v4778, %v4774
        %v4907 = vpack.c.b16 %v4779, %v4775
        %5036 = vmatprep.subr.bf16.mxu0 %v4809
        %5037 = vmatpush1.bf16.msra.mxu0 %v4808
        %5038 = vmatprep.subr.bf16.mxu0 %v4805
        %5039 = vmatpush1.bf16.msra.mxu0 %v4804
        %5040 = vmatprep.subr.bf16.mxu0 %v4801
        %5041 = vmatpush1.bf16.msra.mxu0 %v4800
        %5042 = vmatprep.subr.bf16.mxu0 %v4797
        %5043 = vmatpush1.bf16.msra.mxu0 %v4796
        %5044 = vmatprep.subr.bf16.mxu0 %v4793
        %5045 = vmatpush1.bf16.msra.mxu0 %v4792
        %5046 = vmatprep.subr.bf16.mxu0 %v4789
        %5047 = vmatpush1.bf16.msra.mxu0 %v4788
        %5048 = vmatprep.subr.bf16.mxu0 %v4785
        %5049 = vmatpush1.bf16.msra.mxu0 %v4784
        %5050 = vmatprep.subr.bf16.mxu0 %v4781
        %5051 = vmatpush1.bf16.msra.mxu0 %v4780
        %5052 = vmatprep.subr.bf16.mxu0 %v4841
        %5053 = vmatpush2.bf16.msra.mxu0 %v4840
        %5054 = vmatprep.subr.bf16.mxu0 %v4837
        %5055 = vmatpush2.bf16.msra.mxu0 %v4836
        %5056 = vmatprep.subr.bf16.mxu0 %v4833
        %5057 = vmatpush2.bf16.msra.mxu0 %v4832
        %5058 = vmatprep.subr.bf16.mxu0 %v4829
        %5059 = vmatpush2.bf16.msra.mxu0 %v4828
        %5060 = vmatprep.subr.bf16.mxu0 %v4825
        %5061 = vmatpush2.bf16.msra.mxu0 %v4824
        %5062 = vmatprep.subr.bf16.mxu0 %v4821
        %5063 = vmatpush2.bf16.msra.mxu0 %v4820
        %5064 = vmatprep.subr.bf16.mxu0 %v4817
        %5065 = vmatpush2.bf16.msra.mxu0 %v4816
        %5066 = vmatprep.subr.bf16.mxu0 %v4813
        %5067 = vmatpush2.bf16.msra.mxu0 %v4812
        %5068 = vmatprep.mubr.bf16.mxu0 %v3316
        %5069 = vmatmul.mubr.bf16.gmra.mxu0 %v3315
        %v5070 = vpop.f32.mrf.mxu0
        %v5071 = vadd.f32 %v4302, %v5070
        %v5072 = vpop.f32.mrf.mxu0
        %v5073 = vadd.f32 %v4304, %v5072
        %v5074 = vpop.f32.mrf.mxu0
        %v5075 = vadd.f32 %v4306, %v5074
        %v5076 = vpop.f32.mrf.mxu0
        %v5077 = vadd.f32 %v4308, %v5076
        %5078 = vdwg.mxu0
        %5079 = vmatprep.subr.bf16.mxu0 %v4873
        %5080 = vmatpush1.bf16.msra.mxu0 %v4872
        %5081 = vmatprep.subr.bf16.mxu0 %v4869
        %5082 = vmatpush1.bf16.msra.mxu0 %v4868
        %5083 = vmatprep.subr.bf16.mxu0 %v4865
        %5084 = vmatpush1.bf16.msra.mxu0 %v4864
        %5085 = vmatprep.subr.bf16.mxu0 %v4861
        %5086 = vmatpush1.bf16.msra.mxu0 %v4860
        %5087 = vmatprep.subr.bf16.mxu0 %v4857
        %5088 = vmatpush1.bf16.msra.mxu0 %v4856
        %5089 = vmatprep.subr.bf16.mxu0 %v4853
        %5090 = vmatpush1.bf16.msra.mxu0 %v4852
        %5091 = vmatprep.subr.bf16.mxu0 %v4849
        %5092 = vmatpush1.bf16.msra.mxu0 %v4848
        %5093 = vmatprep.subr.bf16.mxu0 %v4845
        %5094 = vmatpush1.bf16.msra.mxu0 %v4844
        %5095 = vmatprep.subr.bf16.mxu0 %v4905
        %5096 = vmatpush2.bf16.msra.mxu0 %v4904
        %5097 = vmatprep.subr.bf16.mxu0 %v4901
        %5098 = vmatpush2.bf16.msra.mxu0 %v4900
        %5099 = vmatprep.subr.bf16.mxu0 %v4897
        %5100 = vmatpush2.bf16.msra.mxu0 %v4896
        %5101 = vmatprep.subr.bf16.mxu0 %v4893
        %5102 = vmatpush2.bf16.msra.mxu0 %v4892
        %5103 = vmatprep.subr.bf16.mxu0 %v4889
        %5104 = vmatpush2.bf16.msra.mxu0 %v4888
        %5105 = vmatprep.subr.bf16.mxu0 %v4885
        %5106 = vmatpush2.bf16.msra.mxu0 %v4884
        %5107 = vmatprep.subr.bf16.mxu0 %v4881
        %5108 = vmatpush2.bf16.msra.mxu0 %v4880
        %5109 = vmatprep.subr.bf16.mxu0 %v4877
        %5110 = vmatpush2.bf16.msra.mxu0 %v4876
        %5111 = vmatprep.mubr.bf16.mxu0 %v3318
        %5112 = vmatmul.mubr.bf16.gmra.mxu0 %v3317
        %v5113 = vpop.f32.mrf.mxu0
        %v5114 = vadd.f32 %v5071, %v5113
        %v5115 = vpop.f32.mrf.mxu0
        %v5116 = vadd.f32 %v5073, %v5115
        %v5117 = vpop.f32.mrf.mxu0
        %v5118 = vadd.f32 %v5075, %v5117
        %v5119 = vpop.f32.mrf.mxu0
        %v5120 = vadd.f32 %v5077, %v5119
        %5121 = vdwg.mxu0
        %5122 = vmatprep.subr.bf16.mxu0 %v4811
        %5123 = vmatpush1.bf16.msra.mxu0 %v4810
        %5124 = vmatprep.subr.bf16.mxu0 %v4807
        %5125 = vmatpush1.bf16.msra.mxu0 %v4806
        %5126 = vmatprep.subr.bf16.mxu0 %v4803
        %5127 = vmatpush1.bf16.msra.mxu0 %v4802
        %5128 = vmatprep.subr.bf16.mxu0 %v4799
        %5129 = vmatpush1.bf16.msra.mxu0 %v4798
        %5130 = vmatprep.subr.bf16.mxu0 %v4795
        %5131 = vmatpush1.bf16.msra.mxu0 %v4794
        %5132 = vmatprep.subr.bf16.mxu0 %v4791
        %5133 = vmatpush1.bf16.msra.mxu0 %v4790
        %5134 = vmatprep.subr.bf16.mxu0 %v4787
        %5135 = vmatpush1.bf16.msra.mxu0 %v4786
        %5136 = vmatprep.subr.bf16.mxu0 %v4783
        %5137 = vmatpush1.bf16.msra.mxu0 %v4782
        %5138 = vmatprep.subr.bf16.mxu0 %v4843
        %5139 = vmatpush2.bf16.msra.mxu0 %v4842
        %5140 = vmatprep.subr.bf16.mxu0 %v4839
        %5141 = vmatpush2.bf16.msra.mxu0 %v4838
        %5142 = vmatprep.subr.bf16.mxu0 %v4835
        %5143 = vmatpush2.bf16.msra.mxu0 %v4834
        %5144 = vmatprep.subr.bf16.mxu0 %v4831
        %5145 = vmatpush2.bf16.msra.mxu0 %v4830
        %5146 = vmatprep.subr.bf16.mxu0 %v4827
        %5147 = vmatpush2.bf16.msra.mxu0 %v4826
        %5148 = vmatprep.subr.bf16.mxu0 %v4823
        %5149 = vmatpush2.bf16.msra.mxu0 %v4822
        %5150 = vmatprep.subr.bf16.mxu0 %v4819
        %5151 = vmatpush2.bf16.msra.mxu0 %v4818
        %5152 = vmatprep.subr.bf16.mxu0 %v4815
        %5153 = vmatpush2.bf16.msra.mxu0 %v4814
        %5154 = vmatprep.mubr.bf16.mxu0 %v3316
        %5155 = vmatmul.mubr.bf16.gmra.mxu0 %v3315
        %v5156 = vpop.f32.mrf.mxu0
        %v5157 = vadd.f32 %v4388, %v5156
        %v5158 = vpop.f32.mrf.mxu0
        %v5159 = vadd.f32 %v4390, %v5158
        %v5160 = vpop.f32.mrf.mxu0
        %v5161 = vadd.f32 %v4392, %v5160
        %v5162 = vpop.f32.mrf.mxu0
        %v5163 = vadd.f32 %v4394, %v5162
        %5164 = vdwg.mxu0
        %5165 = vmatprep.subr.bf16.mxu0 %v4875
        %5166 = vmatpush1.bf16.msra.mxu0 %v4874
        %5167 = vmatprep.subr.bf16.mxu0 %v4871
        %5168 = vmatpush1.bf16.msra.mxu0 %v4870
        %5169 = vmatprep.subr.bf16.mxu0 %v4867
        %5170 = vmatpush1.bf16.msra.mxu0 %v4866
        %5171 = vmatprep.subr.bf16.mxu0 %v4863
        %5172 = vmatpush1.bf16.msra.mxu0 %v4862
        %5173 = vmatprep.subr.bf16.mxu0 %v4859
        %5174 = vmatpush1.bf16.msra.mxu0 %v4858
        %5175 = vmatprep.subr.bf16.mxu0 %v4855
        %5176 = vmatpush1.bf16.msra.mxu0 %v4854
        %5177 = vmatprep.subr.bf16.mxu0 %v4851
        %5178 = vmatpush1.bf16.msra.mxu0 %v4850
        %5179 = vmatprep.subr.bf16.mxu0 %v4847
        %5180 = vmatpush1.bf16.msra.mxu0 %v4846
        %5181 = vmatprep.subr.bf16.mxu0 %v4907
        %5182 = vmatpush2.bf16.msra.mxu0 %v4906
        %5183 = vmatprep.subr.bf16.mxu0 %v4903
        %5184 = vmatpush2.bf16.msra.mxu0 %v4902
        %5185 = vmatprep.subr.bf16.mxu0 %v4899
        %5186 = vmatpush2.bf16.msra.mxu0 %v4898
        %5187 = vmatprep.subr.bf16.mxu0 %v4895
        %5188 = vmatpush2.bf16.msra.mxu0 %v4894
        %5189 = vmatprep.subr.bf16.mxu0 %v4891
        %5190 = vmatpush2.bf16.msra.mxu0 %v4890
        %5191 = vmatprep.subr.bf16.mxu0 %v4887
        %5192 = vmatpush2.bf16.msra.mxu0 %v4886
        %5193 = vmatprep.subr.bf16.mxu0 %v4883
        %5194 = vmatpush2.bf16.msra.mxu0 %v4882
        %5195 = vmatprep.subr.bf16.mxu0 %v4879
        %5196 = vmatpush2.bf16.msra.mxu0 %v4878
        %5197 = vmatprep.mubr.bf16.mxu0 %v3318
        %5198 = vmatmul.mubr.bf16.gmra.mxu0 %v3317
        %v5199 = vpop.f32.mrf.mxu0
        %v5200 = vadd.f32 %v5157, %v5199
        %v5201 = vpop.f32.mrf.mxu0
        %v5202 = vadd.f32 %v5159, %v5201
        %v5203 = vpop.f32.mrf.mxu0
        %v5204 = vadd.f32 %v5161, %v5203
        %v5205 = vpop.f32.mrf.mxu0
        %v5206 = vadd.f32 %v5163, %v5205
        %5207 = vdwg.mxu0
        %s5208 = scalar_lea.vmem [#allocation8], 2048
        %v5209 = vld [vmem:[%s5208] sm:$0xff]
        %v5210 = vld [vmem:[%s5208 + $0x8] sm:$0xff]
        %v5211 = vld [vmem:[%s5208 + $0x10] sm:$0xff]
        %v5212 = vld [vmem:[%s5208 + $0x18] sm:$0xff]
        %v5213 = vld [vmem:[%s5208 + $0x20] sm:$0xff]
        %v5214 = vld [vmem:[%s5208 + $0x28] sm:$0xff]
        %v5215 = vld [vmem:[%s5208 + $0x30] sm:$0xff]
        %v5216 = vld [vmem:[%s5208 + $0x38] sm:$0xff]
        %v5217 = vld [vmem:[%s5208 + $0x40] sm:$0xff]
        %v5218 = vld [vmem:[%s5208 + $0x48] sm:$0xff]
        %v5219 = vld [vmem:[%s5208 + $0x50] sm:$0xff]
        %v5220 = vld [vmem:[%s5208 + $0x58] sm:$0xff]
        %v5221 = vld [vmem:[%s5208 + $0x60] sm:$0xff]
        %v5222 = vld [vmem:[%s5208 + $0x68] sm:$0xff]
        %v5223 = vld [vmem:[%s5208 + $0x70] sm:$0xff]
        %v5224 = vld [vmem:[%s5208 + $0x78] sm:$0xff]
        %v5225 = vld [vmem:[%s5208 + $0x80] sm:$0xff]
        %v5226 = vld [vmem:[%s5208 + $0x88] sm:$0xff]
        %v5227 = vld [vmem:[%s5208 + $0x90] sm:$0xff]
        %v5228 = vld [vmem:[%s5208 + $0x98] sm:$0xff]
        %v5229 = vld [vmem:[%s5208 + $0xa0] sm:$0xff]
        %v5230 = vld [vmem:[%s5208 + $0xa8] sm:$0xff]
        %v5231 = vld [vmem:[%s5208 + $0xb0] sm:$0xff]
        %v5232 = vld [vmem:[%s5208 + $0xb8] sm:$0xff]
        %v5233 = vld [vmem:[%s5208 + $0xc0] sm:$0xff]
        %v5234 = vld [vmem:[%s5208 + $0xc8] sm:$0xff]
        %v5235 = vld [vmem:[%s5208 + $0xd0] sm:$0xff]
        %v5236 = vld [vmem:[%s5208 + $0xd8] sm:$0xff]
        %v5237 = vld [vmem:[%s5208 + $0xe0] sm:$0xff]
        %v5238 = vld [vmem:[%s5208 + $0xe8] sm:$0xff]
        %v5239 = vld [vmem:[%s5208 + $0xf0] sm:$0xff]
        %v5240 = vld [vmem:[%s5208 + $0xf8] sm:$0xff]
        %v5241 = vld [vmem:[%s5208 + $0x100] sm:$0xff]
        %v5242 = vld [vmem:[%s5208 + $0x108] sm:$0xff]
        %v5243 = vld [vmem:[%s5208 + $0x110] sm:$0xff]
        %v5244 = vld [vmem:[%s5208 + $0x118] sm:$0xff]
        %v5245 = vld [vmem:[%s5208 + $0x120] sm:$0xff]
        %v5246 = vld [vmem:[%s5208 + $0x128] sm:$0xff]
        %v5247 = vld [vmem:[%s5208 + $0x130] sm:$0xff]
        %v5248 = vld [vmem:[%s5208 + $0x138] sm:$0xff]
        %v5249 = vld [vmem:[%s5208 + $0x140] sm:$0xff]
        %v5250 = vld [vmem:[%s5208 + $0x148] sm:$0xff]
        %v5251 = vld [vmem:[%s5208 + $0x150] sm:$0xff]
        %v5252 = vld [vmem:[%s5208 + $0x158] sm:$0xff]
        %v5253 = vld [vmem:[%s5208 + $0x160] sm:$0xff]
        %v5254 = vld [vmem:[%s5208 + $0x168] sm:$0xff]
        %v5255 = vld [vmem:[%s5208 + $0x170] sm:$0xff]
        %v5256 = vld [vmem:[%s5208 + $0x178] sm:$0xff]
        %v5257 = vld [vmem:[%s5208 + $0x180] sm:$0xff]
        %v5258 = vld [vmem:[%s5208 + $0x188] sm:$0xff]
        %v5259 = vld [vmem:[%s5208 + $0x190] sm:$0xff]
        %v5260 = vld [vmem:[%s5208 + $0x198] sm:$0xff]
        %v5261 = vld [vmem:[%s5208 + $0x1a0] sm:$0xff]
        %v5262 = vld [vmem:[%s5208 + $0x1a8] sm:$0xff]
        %v5263 = vld [vmem:[%s5208 + $0x1b0] sm:$0xff]
        %v5264 = vld [vmem:[%s5208 + $0x1b8] sm:$0xff]
        %v5265 = vld [vmem:[%s5208 + $0x1c0] sm:$0xff]
        %v5266 = vld [vmem:[%s5208 + $0x1c8] sm:$0xff]
        %v5267 = vld [vmem:[%s5208 + $0x1d0] sm:$0xff]
        %v5268 = vld [vmem:[%s5208 + $0x1d8] sm:$0xff]
        %v5269 = vld [vmem:[%s5208 + $0x1e0] sm:$0xff]
        %v5270 = vld [vmem:[%s5208 + $0x1e8] sm:$0xff]
        %v5271 = vld [vmem:[%s5208 + $0x1f0] sm:$0xff]
        %v5272 = vld [vmem:[%s5208 + $0x1f8] sm:$0xff]
        %v5273 = vld [vmem:[%s5208 + $0x200] sm:$0xff]
        %v5274 = vld [vmem:[%s5208 + $0x208] sm:$0xff]
        %v5275 = vld [vmem:[%s5208 + $0x210] sm:$0xff]
        %v5276 = vld [vmem:[%s5208 + $0x218] sm:$0xff]
        %v5277 = vld [vmem:[%s5208 + $0x220] sm:$0xff]
        %v5278 = vld [vmem:[%s5208 + $0x228] sm:$0xff]
        %v5279 = vld [vmem:[%s5208 + $0x230] sm:$0xff]
        %v5280 = vld [vmem:[%s5208 + $0x238] sm:$0xff]
        %v5281 = vld [vmem:[%s5208 + $0x240] sm:$0xff]
        %v5282 = vld [vmem:[%s5208 + $0x248] sm:$0xff]
        %v5283 = vld [vmem:[%s5208 + $0x250] sm:$0xff]
        %v5284 = vld [vmem:[%s5208 + $0x258] sm:$0xff]
        %v5285 = vld [vmem:[%s5208 + $0x260] sm:$0xff]
        %v5286 = vld [vmem:[%s5208 + $0x268] sm:$0xff]
        %v5287 = vld [vmem:[%s5208 + $0x270] sm:$0xff]
        %v5288 = vld [vmem:[%s5208 + $0x278] sm:$0xff]
        %v5289 = vld [vmem:[%s5208 + $0x280] sm:$0xff]
        %v5290 = vld [vmem:[%s5208 + $0x288] sm:$0xff]
        %v5291 = vld [vmem:[%s5208 + $0x290] sm:$0xff]
        %v5292 = vld [vmem:[%s5208 + $0x298] sm:$0xff]
        %v5293 = vld [vmem:[%s5208 + $0x2a0] sm:$0xff]
        %v5294 = vld [vmem:[%s5208 + $0x2a8] sm:$0xff]
        %v5295 = vld [vmem:[%s5208 + $0x2b0] sm:$0xff]
        %v5296 = vld [vmem:[%s5208 + $0x2b8] sm:$0xff]
        %v5297 = vld [vmem:[%s5208 + $0x2c0] sm:$0xff]
        %v5298 = vld [vmem:[%s5208 + $0x2c8] sm:$0xff]
        %v5299 = vld [vmem:[%s5208 + $0x2d0] sm:$0xff]
        %v5300 = vld [vmem:[%s5208 + $0x2d8] sm:$0xff]
        %v5301 = vld [vmem:[%s5208 + $0x2e0] sm:$0xff]
        %v5302 = vld [vmem:[%s5208 + $0x2e8] sm:$0xff]
        %v5303 = vld [vmem:[%s5208 + $0x2f0] sm:$0xff]
        %v5304 = vld [vmem:[%s5208 + $0x2f8] sm:$0xff]
        %v5305 = vld [vmem:[%s5208 + $0x300] sm:$0xff]
        %v5306 = vld [vmem:[%s5208 + $0x308] sm:$0xff]
        %v5307 = vld [vmem:[%s5208 + $0x310] sm:$0xff]
        %v5308 = vld [vmem:[%s5208 + $0x318] sm:$0xff]
        %v5309 = vld [vmem:[%s5208 + $0x320] sm:$0xff]
        %v5310 = vld [vmem:[%s5208 + $0x328] sm:$0xff]
        %v5311 = vld [vmem:[%s5208 + $0x330] sm:$0xff]
        %v5312 = vld [vmem:[%s5208 + $0x338] sm:$0xff]
        %v5313 = vld [vmem:[%s5208 + $0x340] sm:$0xff]
        %v5314 = vld [vmem:[%s5208 + $0x348] sm:$0xff]
        %v5315 = vld [vmem:[%s5208 + $0x350] sm:$0xff]
        %v5316 = vld [vmem:[%s5208 + $0x358] sm:$0xff]
        %v5317 = vld [vmem:[%s5208 + $0x360] sm:$0xff]
        %v5318 = vld [vmem:[%s5208 + $0x368] sm:$0xff]
        %v5319 = vld [vmem:[%s5208 + $0x370] sm:$0xff]
        %v5320 = vld [vmem:[%s5208 + $0x378] sm:$0xff]
        %v5321 = vld [vmem:[%s5208 + $0x380] sm:$0xff]
        %v5322 = vld [vmem:[%s5208 + $0x388] sm:$0xff]
        %v5323 = vld [vmem:[%s5208 + $0x390] sm:$0xff]
        %v5324 = vld [vmem:[%s5208 + $0x398] sm:$0xff]
        %v5325 = vld [vmem:[%s5208 + $0x3a0] sm:$0xff]
        %v5326 = vld [vmem:[%s5208 + $0x3a8] sm:$0xff]
        %v5327 = vld [vmem:[%s5208 + $0x3b0] sm:$0xff]
        %v5328 = vld [vmem:[%s5208 + $0x3b8] sm:$0xff]
        %v5329 = vld [vmem:[%s5208 + $0x3c0] sm:$0xff]
        %v5330 = vld [vmem:[%s5208 + $0x3c8] sm:$0xff]
        %v5331 = vld [vmem:[%s5208 + $0x3d0] sm:$0xff]
        %v5332 = vld [vmem:[%s5208 + $0x3d8] sm:$0xff]
        %v5333 = vld [vmem:[%s5208 + $0x3e0] sm:$0xff]
        %v5334 = vld [vmem:[%s5208 + $0x3e8] sm:$0xff]
        %v5335 = vld [vmem:[%s5208 + $0x3f0] sm:$0xff]
        %v5336 = vld [vmem:[%s5208 + $0x3f8] sm:$0xff]
        %v5465 = vunpack.c.l.b16 %v5209
        %v5466 = vunpack.c.h.b16 %v5209
        %v5467 = vunpack.c.l.b16 %v5210
        %v5468 = vunpack.c.h.b16 %v5210
        %v5469 = vunpack.c.l.b16 %v5211
        %v5470 = vunpack.c.h.b16 %v5211
        %v5471 = vunpack.c.l.b16 %v5212
        %v5472 = vunpack.c.h.b16 %v5212
        %v5473 = vunpack.c.l.b16 %v5213
        %v5474 = vunpack.c.h.b16 %v5213
        %v5475 = vunpack.c.l.b16 %v5214
        %v5476 = vunpack.c.h.b16 %v5214
        %v5477 = vunpack.c.l.b16 %v5215
        %v5478 = vunpack.c.h.b16 %v5215
        %v5479 = vunpack.c.l.b16 %v5216
        %v5480 = vunpack.c.h.b16 %v5216
        %v5481 = vunpack.c.l.b16 %v5217
        %v5482 = vunpack.c.h.b16 %v5217
        %v5483 = vunpack.c.l.b16 %v5218
        %v5484 = vunpack.c.h.b16 %v5218
        %v5485 = vunpack.c.l.b16 %v5219
        %v5486 = vunpack.c.h.b16 %v5219
        %v5487 = vunpack.c.l.b16 %v5220
        %v5488 = vunpack.c.h.b16 %v5220
        %v5489 = vunpack.c.l.b16 %v5221
        %v5490 = vunpack.c.h.b16 %v5221
        %v5491 = vunpack.c.l.b16 %v5222
        %v5492 = vunpack.c.h.b16 %v5222
        %v5493 = vunpack.c.l.b16 %v5223
        %v5494 = vunpack.c.h.b16 %v5223
        %v5495 = vunpack.c.l.b16 %v5224
        %v5496 = vunpack.c.h.b16 %v5224
        %v5497 = vunpack.c.l.b16 %v5225
        %v5498 = vunpack.c.h.b16 %v5225
        %v5499 = vunpack.c.l.b16 %v5226
        %v5500 = vunpack.c.h.b16 %v5226
        %v5501 = vunpack.c.l.b16 %v5227
        %v5502 = vunpack.c.h.b16 %v5227
        %v5503 = vunpack.c.l.b16 %v5228
        %v5504 = vunpack.c.h.b16 %v5228
        %v5505 = vunpack.c.l.b16 %v5229
        %v5506 = vunpack.c.h.b16 %v5229
        %v5507 = vunpack.c.l.b16 %v5230
        %v5508 = vunpack.c.h.b16 %v5230
        %v5509 = vunpack.c.l.b16 %v5231
        %v5510 = vunpack.c.h.b16 %v5231
        %v5511 = vunpack.c.l.b16 %v5232
        %v5512 = vunpack.c.h.b16 %v5232
        %v5513 = vunpack.c.l.b16 %v5233
        %v5514 = vunpack.c.h.b16 %v5233
        %v5515 = vunpack.c.l.b16 %v5234
        %v5516 = vunpack.c.h.b16 %v5234
        %v5517 = vunpack.c.l.b16 %v5235
        %v5518 = vunpack.c.h.b16 %v5235
        %v5519 = vunpack.c.l.b16 %v5236
        %v5520 = vunpack.c.h.b16 %v5236
        %v5521 = vunpack.c.l.b16 %v5237
        %v5522 = vunpack.c.h.b16 %v5237
        %v5523 = vunpack.c.l.b16 %v5238
        %v5524 = vunpack.c.h.b16 %v5238
        %v5525 = vunpack.c.l.b16 %v5239
        %v5526 = vunpack.c.h.b16 %v5239
        %v5527 = vunpack.c.l.b16 %v5240
        %v5528 = vunpack.c.h.b16 %v5240
        %v5529 = vunpack.c.l.b16 %v5241
        %v5530 = vunpack.c.h.b16 %v5241
        %v5531 = vunpack.c.l.b16 %v5242
        %v5532 = vunpack.c.h.b16 %v5242
        %v5533 = vunpack.c.l.b16 %v5243
        %v5534 = vunpack.c.h.b16 %v5243
        %v5535 = vunpack.c.l.b16 %v5244
        %v5536 = vunpack.c.h.b16 %v5244
        %v5537 = vunpack.c.l.b16 %v5245
        %v5538 = vunpack.c.h.b16 %v5245
        %v5539 = vunpack.c.l.b16 %v5246
        %v5540 = vunpack.c.h.b16 %v5246
        %v5541 = vunpack.c.l.b16 %v5247
        %v5542 = vunpack.c.h.b16 %v5247
        %v5543 = vunpack.c.l.b16 %v5248
        %v5544 = vunpack.c.h.b16 %v5248
        %v5545 = vunpack.c.l.b16 %v5249
        %v5546 = vunpack.c.h.b16 %v5249
        %v5547 = vunpack.c.l.b16 %v5250
        %v5548 = vunpack.c.h.b16 %v5250
        %v5549 = vunpack.c.l.b16 %v5251
        %v5550 = vunpack.c.h.b16 %v5251
        %v5551 = vunpack.c.l.b16 %v5252
        %v5552 = vunpack.c.h.b16 %v5252
        %v5553 = vunpack.c.l.b16 %v5253
        %v5554 = vunpack.c.h.b16 %v5253
        %v5555 = vunpack.c.l.b16 %v5254
        %v5556 = vunpack.c.h.b16 %v5254
        %v5557 = vunpack.c.l.b16 %v5255
        %v5558 = vunpack.c.h.b16 %v5255
        %v5559 = vunpack.c.l.b16 %v5256
        %v5560 = vunpack.c.h.b16 %v5256
        %v5561 = vunpack.c.l.b16 %v5257
        %v5562 = vunpack.c.h.b16 %v5257
        %v5563 = vunpack.c.l.b16 %v5258
        %v5564 = vunpack.c.h.b16 %v5258
        %v5565 = vunpack.c.l.b16 %v5259
        %v5566 = vunpack.c.h.b16 %v5259
        %v5567 = vunpack.c.l.b16 %v5260
        %v5568 = vunpack.c.h.b16 %v5260
        %v5569 = vunpack.c.l.b16 %v5261
        %v5570 = vunpack.c.h.b16 %v5261
        %v5571 = vunpack.c.l.b16 %v5262
        %v5572 = vunpack.c.h.b16 %v5262
        %v5573 = vunpack.c.l.b16 %v5263
        %v5574 = vunpack.c.h.b16 %v5263
        %v5575 = vunpack.c.l.b16 %v5264
        %v5576 = vunpack.c.h.b16 %v5264
        %v5577 = vunpack.c.l.b16 %v5265
        %v5578 = vunpack.c.h.b16 %v5265
        %v5579 = vunpack.c.l.b16 %v5266
        %v5580 = vunpack.c.h.b16 %v5266
        %v5581 = vunpack.c.l.b16 %v5267
        %v5582 = vunpack.c.h.b16 %v5267
        %v5583 = vunpack.c.l.b16 %v5268
        %v5584 = vunpack.c.h.b16 %v5268
        %v5585 = vunpack.c.l.b16 %v5269
        %v5586 = vunpack.c.h.b16 %v5269
        %v5587 = vunpack.c.l.b16 %v5270
        %v5588 = vunpack.c.h.b16 %v5270
        %v5589 = vunpack.c.l.b16 %v5271
        %v5590 = vunpack.c.h.b16 %v5271
        %v5591 = vunpack.c.l.b16 %v5272
        %v5592 = vunpack.c.h.b16 %v5272
        %v5593 = vunpack.c.l.b16 %v5273
        %v5594 = vunpack.c.h.b16 %v5273
        %v5595 = vunpack.c.l.b16 %v5274
        %v5596 = vunpack.c.h.b16 %v5274
        %v5597 = vunpack.c.l.b16 %v5275
        %v5598 = vunpack.c.h.b16 %v5275
        %v5599 = vunpack.c.l.b16 %v5276
        %v5600 = vunpack.c.h.b16 %v5276
        %v5601 = vunpack.c.l.b16 %v5277
        %v5602 = vunpack.c.h.b16 %v5277
        %v5603 = vunpack.c.l.b16 %v5278
        %v5604 = vunpack.c.h.b16 %v5278
        %v5605 = vunpack.c.l.b16 %v5279
        %v5606 = vunpack.c.h.b16 %v5279
        %v5607 = vunpack.c.l.b16 %v5280
        %v5608 = vunpack.c.h.b16 %v5280
        %v5609 = vunpack.c.l.b16 %v5281
        %v5610 = vunpack.c.h.b16 %v5281
        %v5611 = vunpack.c.l.b16 %v5282
        %v5612 = vunpack.c.h.b16 %v5282
        %v5613 = vunpack.c.l.b16 %v5283
        %v5614 = vunpack.c.h.b16 %v5283
        %v5615 = vunpack.c.l.b16 %v5284
        %v5616 = vunpack.c.h.b16 %v5284
        %v5617 = vunpack.c.l.b16 %v5285
        %v5618 = vunpack.c.h.b16 %v5285
        %v5619 = vunpack.c.l.b16 %v5286
        %v5620 = vunpack.c.h.b16 %v5286
        %v5621 = vunpack.c.l.b16 %v5287
        %v5622 = vunpack.c.h.b16 %v5287
        %v5623 = vunpack.c.l.b16 %v5288
        %v5624 = vunpack.c.h.b16 %v5288
        %v5625 = vunpack.c.l.b16 %v5289
        %v5626 = vunpack.c.h.b16 %v5289
        %v5627 = vunpack.c.l.b16 %v5290
        %v5628 = vunpack.c.h.b16 %v5290
        %v5629 = vunpack.c.l.b16 %v5291
        %v5630 = vunpack.c.h.b16 %v5291
        %v5631 = vunpack.c.l.b16 %v5292
        %v5632 = vunpack.c.h.b16 %v5292
        %v5633 = vunpack.c.l.b16 %v5293
        %v5634 = vunpack.c.h.b16 %v5293
        %v5635 = vunpack.c.l.b16 %v5294
        %v5636 = vunpack.c.h.b16 %v5294
        %v5637 = vunpack.c.l.b16 %v5295
        %v5638 = vunpack.c.h.b16 %v5295
        %v5639 = vunpack.c.l.b16 %v5296
        %v5640 = vunpack.c.h.b16 %v5296
        %v5641 = vunpack.c.l.b16 %v5297
        %v5642 = vunpack.c.h.b16 %v5297
        %v5643 = vunpack.c.l.b16 %v5298
        %v5644 = vunpack.c.h.b16 %v5298
        %v5645 = vunpack.c.l.b16 %v5299
        %v5646 = vunpack.c.h.b16 %v5299
        %v5647 = vunpack.c.l.b16 %v5300
        %v5648 = vunpack.c.h.b16 %v5300
        %v5649 = vunpack.c.l.b16 %v5301
        %v5650 = vunpack.c.h.b16 %v5301
        %v5651 = vunpack.c.l.b16 %v5302
        %v5652 = vunpack.c.h.b16 %v5302
        %v5653 = vunpack.c.l.b16 %v5303
        %v5654 = vunpack.c.h.b16 %v5303
        %v5655 = vunpack.c.l.b16 %v5304
        %v5656 = vunpack.c.h.b16 %v5304
        %v5657 = vunpack.c.l.b16 %v5305
        %v5658 = vunpack.c.h.b16 %v5305
        %v5659 = vunpack.c.l.b16 %v5306
        %v5660 = vunpack.c.h.b16 %v5306
        %v5661 = vunpack.c.l.b16 %v5307
        %v5662 = vunpack.c.h.b16 %v5307
        %v5663 = vunpack.c.l.b16 %v5308
        %v5664 = vunpack.c.h.b16 %v5308
        %v5665 = vunpack.c.l.b16 %v5309
        %v5666 = vunpack.c.h.b16 %v5309
        %v5667 = vunpack.c.l.b16 %v5310
        %v5668 = vunpack.c.h.b16 %v5310
        %v5669 = vunpack.c.l.b16 %v5311
        %v5670 = vunpack.c.h.b16 %v5311
        %v5671 = vunpack.c.l.b16 %v5312
        %v5672 = vunpack.c.h.b16 %v5312
        %v5673 = vunpack.c.l.b16 %v5313
        %v5674 = vunpack.c.h.b16 %v5313
        %v5675 = vunpack.c.l.b16 %v5314
        %v5676 = vunpack.c.h.b16 %v5314
        %v5677 = vunpack.c.l.b16 %v5315
        %v5678 = vunpack.c.h.b16 %v5315
        %v5679 = vunpack.c.l.b16 %v5316
        %v5680 = vunpack.c.h.b16 %v5316
        %v5681 = vunpack.c.l.b16 %v5317
        %v5682 = vunpack.c.h.b16 %v5317
        %v5683 = vunpack.c.l.b16 %v5318
        %v5684 = vunpack.c.h.b16 %v5318
        %v5685 = vunpack.c.l.b16 %v5319
        %v5686 = vunpack.c.h.b16 %v5319
        %v5687 = vunpack.c.l.b16 %v5320
        %v5688 = vunpack.c.h.b16 %v5320
        %v5689 = vunpack.c.l.b16 %v5321
        %v5690 = vunpack.c.h.b16 %v5321
        %v5691 = vunpack.c.l.b16 %v5322
        %v5692 = vunpack.c.h.b16 %v5322
        %v5693 = vunpack.c.l.b16 %v5323
        %v5694 = vunpack.c.h.b16 %v5323
        %v5695 = vunpack.c.l.b16 %v5324
        %v5696 = vunpack.c.h.b16 %v5324
        %v5697 = vunpack.c.l.b16 %v5325
        %v5698 = vunpack.c.h.b16 %v5325
        %v5699 = vunpack.c.l.b16 %v5326
        %v5700 = vunpack.c.h.b16 %v5326
        %v5701 = vunpack.c.l.b16 %v5327
        %v5702 = vunpack.c.h.b16 %v5327
        %v5703 = vunpack.c.l.b16 %v5328
        %v5704 = vunpack.c.h.b16 %v5328
        %v5705 = vunpack.c.l.b16 %v5329
        %v5706 = vunpack.c.h.b16 %v5329
        %v5707 = vunpack.c.l.b16 %v5330
        %v5708 = vunpack.c.h.b16 %v5330
        %v5709 = vunpack.c.l.b16 %v5331
        %v5710 = vunpack.c.h.b16 %v5331
        %v5711 = vunpack.c.l.b16 %v5332
        %v5712 = vunpack.c.h.b16 %v5332
        %v5713 = vunpack.c.l.b16 %v5333
        %v5714 = vunpack.c.h.b16 %v5333
        %v5715 = vunpack.c.l.b16 %v5334
        %v5716 = vunpack.c.h.b16 %v5334
        %v5717 = vunpack.c.l.b16 %v5335
        %v5718 = vunpack.c.h.b16 %v5335
        %v5719 = vunpack.c.l.b16 %v5336
        %v5720 = vunpack.c.h.b16 %v5336
        %v5721 = vpack.c.b16 %v5469, %v5465
        %v5722 = vpack.c.b16 %v5470, %v5466
        %v5723 = vpack.c.b16 %v5471, %v5467
        %v5724 = vpack.c.b16 %v5472, %v5468
        %v5725 = vpack.c.b16 %v5477, %v5473
        %v5726 = vpack.c.b16 %v5478, %v5474
        %v5727 = vpack.c.b16 %v5479, %v5475
        %v5728 = vpack.c.b16 %v5480, %v5476
        %v5729 = vpack.c.b16 %v5485, %v5481
        %v5730 = vpack.c.b16 %v5486, %v5482
        %v5731 = vpack.c.b16 %v5487, %v5483
        %v5732 = vpack.c.b16 %v5488, %v5484
        %v5733 = vpack.c.b16 %v5493, %v5489
        %v5734 = vpack.c.b16 %v5494, %v5490
        %v5735 = vpack.c.b16 %v5495, %v5491
        %v5736 = vpack.c.b16 %v5496, %v5492
        %v5737 = vpack.c.b16 %v5501, %v5497
        %v5738 = vpack.c.b16 %v5502, %v5498
        %v5739 = vpack.c.b16 %v5503, %v5499
        %v5740 = vpack.c.b16 %v5504, %v5500
        %v5741 = vpack.c.b16 %v5509, %v5505
        %v5742 = vpack.c.b16 %v5510, %v5506
        %v5743 = vpack.c.b16 %v5511, %v5507
        %v5744 = vpack.c.b16 %v5512, %v5508
        %v5745 = vpack.c.b16 %v5517, %v5513
        %v5746 = vpack.c.b16 %v5518, %v5514
        %v5747 = vpack.c.b16 %v5519, %v5515
        %v5748 = vpack.c.b16 %v5520, %v5516
        %v5749 = vpack.c.b16 %v5525, %v5521
        %v5750 = vpack.c.b16 %v5526, %v5522
        %v5751 = vpack.c.b16 %v5527, %v5523
        %v5752 = vpack.c.b16 %v5528, %v5524
        %v5753 = vpack.c.b16 %v5533, %v5529
        %v5754 = vpack.c.b16 %v5534, %v5530
        %v5755 = vpack.c.b16 %v5535, %v5531
        %v5756 = vpack.c.b16 %v5536, %v5532
        %v5757 = vpack.c.b16 %v5541, %v5537
        %v5758 = vpack.c.b16 %v5542, %v5538
        %v5759 = vpack.c.b16 %v5543, %v5539
        %v5760 = vpack.c.b16 %v5544, %v5540
        %v5761 = vpack.c.b16 %v5549, %v5545
        %v5762 = vpack.c.b16 %v5550, %v5546
        %v5763 = vpack.c.b16 %v5551, %v5547
        %v5764 = vpack.c.b16 %v5552, %v5548
        %v5765 = vpack.c.b16 %v5557, %v5553
        %v5766 = vpack.c.b16 %v5558, %v5554
        %v5767 = vpack.c.b16 %v5559, %v5555
        %v5768 = vpack.c.b16 %v5560, %v5556
        %v5769 = vpack.c.b16 %v5565, %v5561
        %v5770 = vpack.c.b16 %v5566, %v5562
        %v5771 = vpack.c.b16 %v5567, %v5563
        %v5772 = vpack.c.b16 %v5568, %v5564
        %v5773 = vpack.c.b16 %v5573, %v5569
        %v5774 = vpack.c.b16 %v5574, %v5570
        %v5775 = vpack.c.b16 %v5575, %v5571
        %v5776 = vpack.c.b16 %v5576, %v5572
        %v5777 = vpack.c.b16 %v5581, %v5577
        %v5778 = vpack.c.b16 %v5582, %v5578
        %v5779 = vpack.c.b16 %v5583, %v5579
        %v5780 = vpack.c.b16 %v5584, %v5580
        %v5781 = vpack.c.b16 %v5589, %v5585
        %v5782 = vpack.c.b16 %v5590, %v5586
        %v5783 = vpack.c.b16 %v5591, %v5587
        %v5784 = vpack.c.b16 %v5592, %v5588
        %v5785 = vpack.c.b16 %v5597, %v5593
        %v5786 = vpack.c.b16 %v5598, %v5594
        %v5787 = vpack.c.b16 %v5599, %v5595
        %v5788 = vpack.c.b16 %v5600, %v5596
        %v5789 = vpack.c.b16 %v5605, %v5601
        %v5790 = vpack.c.b16 %v5606, %v5602
        %v5791 = vpack.c.b16 %v5607, %v5603
        %v5792 = vpack.c.b16 %v5608, %v5604
        %v5793 = vpack.c.b16 %v5613, %v5609
        %v5794 = vpack.c.b16 %v5614, %v5610
        %v5795 = vpack.c.b16 %v5615, %v5611
        %v5796 = vpack.c.b16 %v5616, %v5612
        %v5797 = vpack.c.b16 %v5621, %v5617
        %v5798 = vpack.c.b16 %v5622, %v5618
        %v5799 = vpack.c.b16 %v5623, %v5619
        %v5800 = vpack.c.b16 %v5624, %v5620
        %v5801 = vpack.c.b16 %v5629, %v5625
        %v5802 = vpack.c.b16 %v5630, %v5626
        %v5803 = vpack.c.b16 %v5631, %v5627
        %v5804 = vpack.c.b16 %v5632, %v5628
        %v5805 = vpack.c.b16 %v5637, %v5633
        %v5806 = vpack.c.b16 %v5638, %v5634
        %v5807 = vpack.c.b16 %v5639, %v5635
        %v5808 = vpack.c.b16 %v5640, %v5636
        %v5809 = vpack.c.b16 %v5645, %v5641
        %v5810 = vpack.c.b16 %v5646, %v5642
        %v5811 = vpack.c.b16 %v5647, %v5643
        %v5812 = vpack.c.b16 %v5648, %v5644
        %v5813 = vpack.c.b16 %v5653, %v5649
        %v5814 = vpack.c.b16 %v5654, %v5650
        %v5815 = vpack.c.b16 %v5655, %v5651
        %v5816 = vpack.c.b16 %v5656, %v5652
        %v5817 = vpack.c.b16 %v5661, %v5657
        %v5818 = vpack.c.b16 %v5662, %v5658
        %v5819 = vpack.c.b16 %v5663, %v5659
        %v5820 = vpack.c.b16 %v5664, %v5660
        %v5821 = vpack.c.b16 %v5669, %v5665
        %v5822 = vpack.c.b16 %v5670, %v5666
        %v5823 = vpack.c.b16 %v5671, %v5667
        %v5824 = vpack.c.b16 %v5672, %v5668
        %v5825 = vpack.c.b16 %v5677, %v5673
        %v5826 = vpack.c.b16 %v5678, %v5674
        %v5827 = vpack.c.b16 %v5679, %v5675
        %v5828 = vpack.c.b16 %v5680, %v5676
        %v5829 = vpack.c.b16 %v5685, %v5681
        %v5830 = vpack.c.b16 %v5686, %v5682
        %v5831 = vpack.c.b16 %v5687, %v5683
        %v5832 = vpack.c.b16 %v5688, %v5684
        %v5833 = vpack.c.b16 %v5693, %v5689
        %v5834 = vpack.c.b16 %v5694, %v5690
        %v5835 = vpack.c.b16 %v5695, %v5691
        %v5836 = vpack.c.b16 %v5696, %v5692
        %v5837 = vpack.c.b16 %v5701, %v5697
        %v5838 = vpack.c.b16 %v5702, %v5698
        %v5839 = vpack.c.b16 %v5703, %v5699
        %v5840 = vpack.c.b16 %v5704, %v5700
        %v5841 = vpack.c.b16 %v5709, %v5705
        %v5842 = vpack.c.b16 %v5710, %v5706
        %v5843 = vpack.c.b16 %v5711, %v5707
        %v5844 = vpack.c.b16 %v5712, %v5708
        %v5845 = vpack.c.b16 %v5717, %v5713
        %v5846 = vpack.c.b16 %v5718, %v5714
        %v5847 = vpack.c.b16 %v5719, %v5715
        %v5848 = vpack.c.b16 %v5720, %v5716
        %5977 = vmatprep.subr.bf16.mxu0 %v5750
        %5978 = vmatpush1.bf16.msra.mxu0 %v5749
        %5979 = vmatprep.subr.bf16.mxu0 %v5746
        %5980 = vmatpush1.bf16.msra.mxu0 %v5745
        %5981 = vmatprep.subr.bf16.mxu0 %v5742
        %5982 = vmatpush1.bf16.msra.mxu0 %v5741
        %5983 = vmatprep.subr.bf16.mxu0 %v5738
        %5984 = vmatpush1.bf16.msra.mxu0 %v5737
        %5985 = vmatprep.subr.bf16.mxu0 %v5734
        %5986 = vmatpush1.bf16.msra.mxu0 %v5733
        %5987 = vmatprep.subr.bf16.mxu0 %v5730
        %5988 = vmatpush1.bf16.msra.mxu0 %v5729
        %5989 = vmatprep.subr.bf16.mxu0 %v5726
        %5990 = vmatpush1.bf16.msra.mxu0 %v5725
        %5991 = vmatprep.subr.bf16.mxu0 %v5722
        %5992 = vmatpush1.bf16.msra.mxu0 %v5721
        %5993 = vmatprep.subr.bf16.mxu0 %v5782
        %5994 = vmatpush2.bf16.msra.mxu0 %v5781
        %5995 = vmatprep.subr.bf16.mxu0 %v5778
        %5996 = vmatpush2.bf16.msra.mxu0 %v5777
        %5997 = vmatprep.subr.bf16.mxu0 %v5774
        %5998 = vmatpush2.bf16.msra.mxu0 %v5773
        %5999 = vmatprep.subr.bf16.mxu0 %v5770
        %6000 = vmatpush2.bf16.msra.mxu0 %v5769
        %6001 = vmatprep.subr.bf16.mxu0 %v5766
        %6002 = vmatpush2.bf16.msra.mxu0 %v5765
        %6003 = vmatprep.subr.bf16.mxu0 %v5762
        %6004 = vmatpush2.bf16.msra.mxu0 %v5761
        %6005 = vmatprep.subr.bf16.mxu0 %v5758
        %6006 = vmatpush2.bf16.msra.mxu0 %v5757
        %6007 = vmatprep.subr.bf16.mxu0 %v5754
        %6008 = vmatpush2.bf16.msra.mxu0 %v5753
        %6009 = vmatprep.mubr.bf16.mxu0 %v3324
        %6010 = vmatmul.mubr.bf16.gmra.mxu0 %v3323
        %v6011 = vpop.f32.mrf.mxu0
        %v6012 = vadd.f32 0.0, %v6011
        %v6013 = vpop.f32.mrf.mxu0
        %v6014 = vadd.f32 0.0, %v6013
        %v6015 = vpop.f32.mrf.mxu0
        %v6016 = vadd.f32 0.0, %v6015
        %v6017 = vpop.f32.mrf.mxu0
        %v6018 = vadd.f32 0.0, %v6017
        %6019 = vdwg.mxu0
        %6020 = vmatprep.subr.bf16.mxu0 %v5814
        %6021 = vmatpush1.bf16.msra.mxu0 %v5813
        %6022 = vmatprep.subr.bf16.mxu0 %v5810
        %6023 = vmatpush1.bf16.msra.mxu0 %v5809
        %6024 = vmatprep.subr.bf16.mxu0 %v5806
        %6025 = vmatpush1.bf16.msra.mxu0 %v5805
        %6026 = vmatprep.subr.bf16.mxu0 %v5802
        %6027 = vmatpush1.bf16.msra.mxu0 %v5801
        %6028 = vmatprep.subr.bf16.mxu0 %v5798
        %6029 = vmatpush1.bf16.msra.mxu0 %v5797
        %6030 = vmatprep.subr.bf16.mxu0 %v5794
        %6031 = vmatpush1.bf16.msra.mxu0 %v5793
        %6032 = vmatprep.subr.bf16.mxu0 %v5790
        %6033 = vmatpush1.bf16.msra.mxu0 %v5789
        %6034 = vmatprep.subr.bf16.mxu0 %v5786
        %6035 = vmatpush1.bf16.msra.mxu0 %v5785
        %6036 = vmatprep.subr.bf16.mxu0 %v5846
        %6037 = vmatpush2.bf16.msra.mxu0 %v5845
        %6038 = vmatprep.subr.bf16.mxu0 %v5842
        %6039 = vmatpush2.bf16.msra.mxu0 %v5841
        %6040 = vmatprep.subr.bf16.mxu0 %v5838
        %6041 = vmatpush2.bf16.msra.mxu0 %v5837
        %6042 = vmatprep.subr.bf16.mxu0 %v5834
        %6043 = vmatpush2.bf16.msra.mxu0 %v5833
        %6044 = vmatprep.subr.bf16.mxu0 %v5830
        %6045 = vmatpush2.bf16.msra.mxu0 %v5829
        %6046 = vmatprep.subr.bf16.mxu0 %v5826
        %6047 = vmatpush2.bf16.msra.mxu0 %v5825
        %6048 = vmatprep.subr.bf16.mxu0 %v5822
        %6049 = vmatpush2.bf16.msra.mxu0 %v5821
        %6050 = vmatprep.subr.bf16.mxu0 %v5818
        %6051 = vmatpush2.bf16.msra.mxu0 %v5817
        %6052 = vmatprep.mubr.bf16.mxu0 %v3326
        %6053 = vmatmul.mubr.bf16.gmra.mxu0 %v3325
        %v6054 = vpop.f32.mrf.mxu0
        %v6055 = vadd.f32 %v6012, %v6054
        %v6056 = vpop.f32.mrf.mxu0
        %v6057 = vadd.f32 %v6014, %v6056
        %v6058 = vpop.f32.mrf.mxu0
        %v6059 = vadd.f32 %v6016, %v6058
        %v6060 = vpop.f32.mrf.mxu0
        %v6061 = vadd.f32 %v6018, %v6060
        %6062 = vdwg.mxu0
        %6063 = vmatprep.subr.bf16.mxu0 %v5752
        %6064 = vmatpush1.bf16.msra.mxu0 %v5751
        %6065 = vmatprep.subr.bf16.mxu0 %v5748
        %6066 = vmatpush1.bf16.msra.mxu0 %v5747
        %6067 = vmatprep.subr.bf16.mxu0 %v5744
        %6068 = vmatpush1.bf16.msra.mxu0 %v5743
        %6069 = vmatprep.subr.bf16.mxu0 %v5740
        %6070 = vmatpush1.bf16.msra.mxu0 %v5739
        %6071 = vmatprep.subr.bf16.mxu0 %v5736
        %6072 = vmatpush1.bf16.msra.mxu0 %v5735
        %6073 = vmatprep.subr.bf16.mxu0 %v5732
        %6074 = vmatpush1.bf16.msra.mxu0 %v5731
        %6075 = vmatprep.subr.bf16.mxu0 %v5728
        %6076 = vmatpush1.bf16.msra.mxu0 %v5727
        %6077 = vmatprep.subr.bf16.mxu0 %v5724
        %6078 = vmatpush1.bf16.msra.mxu0 %v5723
        %6079 = vmatprep.subr.bf16.mxu0 %v5784
        %6080 = vmatpush2.bf16.msra.mxu0 %v5783
        %6081 = vmatprep.subr.bf16.mxu0 %v5780
        %6082 = vmatpush2.bf16.msra.mxu0 %v5779
        %6083 = vmatprep.subr.bf16.mxu0 %v5776
        %6084 = vmatpush2.bf16.msra.mxu0 %v5775
        %6085 = vmatprep.subr.bf16.mxu0 %v5772
        %6086 = vmatpush2.bf16.msra.mxu0 %v5771
        %6087 = vmatprep.subr.bf16.mxu0 %v5768
        %6088 = vmatpush2.bf16.msra.mxu0 %v5767
        %6089 = vmatprep.subr.bf16.mxu0 %v5764
        %6090 = vmatpush2.bf16.msra.mxu0 %v5763
        %6091 = vmatprep.subr.bf16.mxu0 %v5760
        %6092 = vmatpush2.bf16.msra.mxu0 %v5759
        %6093 = vmatprep.subr.bf16.mxu0 %v5756
        %6094 = vmatpush2.bf16.msra.mxu0 %v5755
        %6095 = vmatprep.mubr.bf16.mxu0 %v3324
        %6096 = vmatmul.mubr.bf16.gmra.mxu0 %v3323
        %v6097 = vpop.f32.mrf.mxu0
        %v6098 = vadd.f32 0.0, %v6097
        %v6099 = vpop.f32.mrf.mxu0
        %v6100 = vadd.f32 0.0, %v6099
        %v6101 = vpop.f32.mrf.mxu0
        %v6102 = vadd.f32 0.0, %v6101
        %v6103 = vpop.f32.mrf.mxu0
        %v6104 = vadd.f32 0.0, %v6103
        %6105 = vdwg.mxu0
        %6106 = vmatprep.subr.bf16.mxu0 %v5816
        %6107 = vmatpush1.bf16.msra.mxu0 %v5815
        %6108 = vmatprep.subr.bf16.mxu0 %v5812
        %6109 = vmatpush1.bf16.msra.mxu0 %v5811
        %6110 = vmatprep.subr.bf16.mxu0 %v5808
        %6111 = vmatpush1.bf16.msra.mxu0 %v5807
        %6112 = vmatprep.subr.bf16.mxu0 %v5804
        %6113 = vmatpush1.bf16.msra.mxu0 %v5803
        %6114 = vmatprep.subr.bf16.mxu0 %v5800
        %6115 = vmatpush1.bf16.msra.mxu0 %v5799
        %6116 = vmatprep.subr.bf16.mxu0 %v5796
        %6117 = vmatpush1.bf16.msra.mxu0 %v5795
        %6118 = vmatprep.subr.bf16.mxu0 %v5792
        %6119 = vmatpush1.bf16.msra.mxu0 %v5791
        %6120 = vmatprep.subr.bf16.mxu0 %v5788
        %6121 = vmatpush1.bf16.msra.mxu0 %v5787
        %6122 = vmatprep.subr.bf16.mxu0 %v5848
        %6123 = vmatpush2.bf16.msra.mxu0 %v5847
        %6124 = vmatprep.subr.bf16.mxu0 %v5844
        %6125 = vmatpush2.bf16.msra.mxu0 %v5843
        %6126 = vmatprep.subr.bf16.mxu0 %v5840
        %6127 = vmatpush2.bf16.msra.mxu0 %v5839
        %6128 = vmatprep.subr.bf16.mxu0 %v5836
        %6129 = vmatpush2.bf16.msra.mxu0 %v5835
        %6130 = vmatprep.subr.bf16.mxu0 %v5832
        %6131 = vmatpush2.bf16.msra.mxu0 %v5831
        %6132 = vmatprep.subr.bf16.mxu0 %v5828
        %6133 = vmatpush2.bf16.msra.mxu0 %v5827
        %6134 = vmatprep.subr.bf16.mxu0 %v5824
        %6135 = vmatpush2.bf16.msra.mxu0 %v5823
        %6136 = vmatprep.subr.bf16.mxu0 %v5820
        %6137 = vmatpush2.bf16.msra.mxu0 %v5819
        %6138 = vmatprep.mubr.bf16.mxu0 %v3326
        %6139 = vmatmul.mubr.bf16.gmra.mxu0 %v3325
        %v6140 = vpop.f32.mrf.mxu0
        %v6141 = vadd.f32 %v6098, %v6140
        %v6142 = vpop.f32.mrf.mxu0
        %v6143 = vadd.f32 %v6100, %v6142
        %v6144 = vpop.f32.mrf.mxu0
        %v6145 = vadd.f32 %v6102, %v6144
        %v6146 = vpop.f32.mrf.mxu0
        %v6147 = vadd.f32 %v6104, %v6146
        %6148 = vdwg.mxu0
        %v6149 = vadd.f32 %v5114, %v6055
        %v6150 = vadd.f32 %v5116, %v6057
        %v6151 = vadd.f32 %v5200, %v6141
        %v6152 = vadd.f32 %v5202, %v6143
        %v6153 = vadd.f32 %v5118, %v6059
        %v6154 = vadd.f32 %v5120, %v6061
        %v6155 = vadd.f32 %v5204, %v6145
        %v6156 = vadd.f32 %v5206, %v6147
        %v6157 = vld [vmem:[#allocation10] sm:$0xf]
        %v6159 = vlaneseq
        %v6160 = vshrl.u32 %v6159, 7
        %v6161 = vsub.s32 0, %v6160
        %v6162 = vrot.slane %v6157, %v6161
        %v6163 = vlaneseq
        %v6164 = vshrl.u32 %v6163, 7
        %v6165 = vsub.s32 1, %v6164
        %v6166 = vrot.slane %v6157, %v6165
        %v6167 = vlaneseq
        %v6168 = vshrl.u32 %v6167, 7
        %v6169 = vsub.s32 2, %v6168
        %v6170 = vrot.slane %v6157, %v6169
        %v6171 = vlaneseq
        %v6172 = vshrl.u32 %v6171, 7
        %v6173 = vsub.s32 3, %v6172
        %v6174 = vrot.slane %v6157, %v6173
        %v6179 = vadd.f32 %v6149, %v6162
        %v6180 = vadd.f32 %v6150, %v6166
        %v6181 = vadd.f32 %v6151, %v6170
        %v6182 = vadd.f32 %v6152, %v6174
        %v6183 = vadd.f32 %v6153, %v6162
        %v6184 = vadd.f32 %v6154, %v6166
        %v6185 = vadd.f32 %v6155, %v6170
        %v6186 = vadd.f32 %v6156, %v6174
        %v6187 = vadd.f32 %v297, %v6179
        %v6188 = vadd.f32 %v298, %v6180
        %v6189 = vadd.f32 %v299, %v6181
        %v6190 = vadd.f32 %v300, %v6182
        %v6191 = vadd.f32 %v301, %v6183
        %v6192 = vadd.f32 %v302, %v6184
        %v6193 = vadd.f32 %v303, %v6185
        %v6194 = vadd.f32 %v304, %v6186
        %6195 = vst [vmem:[%s296] sm:$0xff] %v6187
        %6196 = vst [vmem:[%s296 + $0x8] sm:$0xff] %v6188
        %6197 = vst [vmem:[%s296 + $0x10] sm:$0xff] %v6189
        %6198 = vst [vmem:[%s296 + $0x18] sm:$0xff] %v6190
        %6199 = vst [vmem:[%s296 + $0x20] sm:$0xff] %v6191
        %6200 = vst [vmem:[%s296 + $0x28] sm:$0xff] %v6192
        %6201 = vst [vmem:[%s296 + $0x30] sm:$0xff] %v6193
        %6202 = vst [vmem:[%s296 + $0x38] sm:$0xff] %v6194
        %s6203 = sand.u32 %s142, 1
        %s6204 = scalar_lea.sflag [#allocation4], %s6203
        %s6205 = sand.u32 %s142, 1
        %s6206 = smul.addr %s6205, 64
        %s6207 = scalar_lea.vmem [#allocation11], %s6206
        // Predicated region
        $region61: #{tpu_custom_call.1} parent=39 // pred_check
          %p6208 = pneg %p152
        $region62: #{tpu_custom_call.1} parent=39 // pred_check_branch
          %6210 = sbr.rel (%p6208) target = $region64
        $region63: #{tpu_custom_call.1} parent=39 // pred_region
          %s6212 = ssub.s32 1024, 1024
          %6213 = vsyncadd %s6204, %s6212
          %s6214 = smul.addr %s24, 8
          %s6215 = smul.addr %s6214, 128
          %s6216 = scalar_lea.hbm %s5, %s6215
          %s6217 = sshll.u32 %s6207, 4
          %s6218 = int_to_ptr.vmem [resolvable:$true] %s6217
          %6223 = dma.vmem_to_hbm [thread:$0]  %s6218, 1024, %s6216, %s6204, 512, 512, 32
        $region64: #{tpu_custom_call.1} parent=39 // pred_fallthru
          _
      $region40: #{tpu_custom_call.1} parent=5 // pred_fallthru
        _
      %p6224 = scmp.le.s32.totalorder 2, %s19
      // Predicated region
      $region65: #{tpu_custom_call.1} parent=5 // pred_check
        %p6225 = pneg %p6224
      $region66: #{tpu_custom_call.1} parent=5 // pred_check_branch
        %6227 = sbr.rel (%p6225) target = $region68
      $region67: #{tpu_custom_call.1} parent=5 // pred_region
        %s6228 = ssub.s32 %s19, 2
        // Predicated region
        $region69: #{tpu_custom_call.1} parent=67 // pred_check
          %p6229 = pneg %p158
        $region70: #{tpu_custom_call.1} parent=67 // pred_check_branch
          %6231 = sbr.rel (%p6229) target = $region72
        $region71: #{tpu_custom_call.1} parent=67 // pred_region
          %s6232 = sand.u32 %s143, 1
          %s6233 = scalar_lea.sflag [#allocation4], %s6232
          %s6234 = sand.u32 %s143, 1
          %s6235 = smul.addr %s6234, 64
          %s6236 = scalar_lea.vmem [#allocation11], %s6235
          %6237 = dma.done %s6233, 1024
        $region72: #{tpu_custom_call.1} parent=67 // pred_fallthru
          _
      $region68: #{tpu_custom_call.1} parent=5 // pred_fallthru
        _
    $region6: #{tpu_custom_call.1} parent=1 // loop_footer
      %s23 = sadd.s32 1, %s19
    $region7: #{tpu_custom_call.1} parent=1 // loop_footer_branch
      %18 = sbr.rel target = $region3
    $region8: #{tpu_custom_call.1} parent=1 // loop_exit
      _
    %6238 = vsyncpa [#allocation3], 1
    %s6239 = scalar_lea.sflag [#allocation3], 1
    %6240 = vsyncpa %s6239, 1
    %6241 = vsyncpa [#allocation6], 1
    %6242 = vsyncpa [#allocation9], 1
    %6243 = vsyncpa [#allocation4], 1
    %s6244 = scalar_lea.sflag [#allocation4], 1
    %6245 = vsyncpa %s6244, 1

</llo_original>
